<compile_context>
chip_gen: v6e
topology: v6e:2x2x1
jax: 0.10.0
libtpu: 0.0.40
codegen_flags: <defaults>
</compile_context>

<pallas_src>
import functools

import numpy as np
import jax
import jax.numpy as jnp
from jax import lax
from jax.experimental import pallas as pl
from jax.experimental.pallas import tpu as pltpu

# ----- module hyper-parameters (consistent with Decoder.__init__) -----
DIMS = (32, 32, 32, 32)      # dims passed to Decoder
LATENT_IN = (2,)             # latent_in: layer 2's input is cat([x, input], 1)
DROPOUT_LIST = (0, 1, 2)     # dropout layers (identity in eval mode, see TODO)
NEG_SLOPE = 0.01             # nn.LeakyReLU() default negative_slope
USE_TANH = True


def _layer_dims(dims, latent_in):
    """Reproduce Decoder.__init__'s per-layer (in_dim, out_dim)."""
    layers = []
    for i in range(len(dims)):
        in_dim = 3 if i == 0 else dims[i - 1]
        if i + 1 in latent_in:
            out_dim = dims[i] - 3
        elif i == len(dims) - 1:
            out_dim = 1
        else:
            out_dim = dims[i]
        layers.append((in_dim, out_dim))
    return layers


def _round_up(v, m):
    return ((v + m - 1) // m) * m


def _cdiv(a, b):
    return (a + b - 1) // b


def _default_compute_dtype():
    """bf16 on bf16-native VPU/EUP chips (v6e/v7x); f32 on v5e and older."""
    try:
        kind = jax.devices()[0].device_kind.lower()
    except Exception:
        return jnp.dtype(jnp.float32)
    if any(tag in kind for tag in ("v6", "v7", "7x", "tpu7")):
        return jnp.dtype(jnp.bfloat16)
    return jnp.dtype(jnp.float32)


def pack_params(params, latent_in, dtype):
    """Pack transposed weights + biases into one slab of `dtype`.

    For layer i the main row block holds W^T (or W_h^T for latent_in layers)
    in columns [0, cols) and the bias in column `bias_col`.  latent_in layers
    get a second row block holding W_x^T (dout, 3) at columns [0, 3) — every
    weight slice therefore starts at lane 0 (no mis-aligned column slice).
    Row offsets are sublane-packing aligned (8 for f32, 16 for bf16).

    Returns (slab, meta, bias_col), meta = ((off_main, off_x, dout, din), ...)
    with off_x == -1 for non-latent layers.
    """
    dtype = jnp.dtype(dtype)
    row_align = 16 if dtype.itemsize < 4 else 8

    entries = []
    max_cols = 0
    for i, (w, b) in enumerate(params):
        w = np.asarray(w, np.float32)
        b = np.asarray(b, np.float32).reshape(-1)
        din, dout = w.shape
        if i in latent_in:
            hd = din - 3
            w_main, w_x = w[:hd].T, w[hd:].T        # (dout, hd), (dout, 3)
        else:
            w_main, w_x = w.T, None                 # (dout, din)
        entries.append((w_main, w_x, b, din, dout))
        max_cols = max(max_cols, w_main.shape[1])

    bias_col = max_cols
    width = max_cols + 1

    rows, offs = 0, []
    for (w_main, w_x, b, din, dout) in entries:
        off_main = rows
        rows += _round_up(dout, row_align)
        if w_x is not None:
            off_x = rows
            rows += _round_up(dout, row_align)
        else:
            off_x = -1
        offs.append((off_main, off_x))

    slab = np.zeros((rows, width), np.float32)
    meta = []
    for (w_main, w_x, b, din, dout), (off_main, off_x) in zip(entries, offs):
        slab[off_main:off_main + dout, :w_main.shape[1]] = w_main
        slab[off_main:off_main + dout, bias_col] = b
        if w_x is not None:
            slab[off_x:off_x + dout, :w_x.shape[1]] = w_x
        meta.append((off_main, off_x, dout, din))
    return jnp.asarray(slab, dtype=dtype), tuple(meta), bias_col


def decoder_kernel(x_ref, p_ref, out_ref, *, layer_meta, bias_col, use_tanh,
                   neg_slope, compute_dtype, precision):
    """Full MLP forward for one (3, tile) tile of points (points in lanes)."""
    x_in = x_ref[...].astype(compute_dtype)                   # (3, tile)
    h = x_in
    n_layers = len(layer_meta)
    for i, (off, off_x, dout, din) in enumerate(layer_meta):
        b = p_ref[off:off + dout, bias_col:bias_col + 1].astype(jnp.float32)
        if off_x >= 0:
            hd = din - 3
            # cat([h, x], feat) @ W == W_h^T @ h + W_x^T @ x, fused f32 accum.
            z = (jnp.dot(p_ref[off:off + dout, 0:hd], h,
                         preferred_element_type=jnp.float32, precision=precision)
                 + jnp.dot(p_ref[off_x:off_x + dout, 0:3], x_in,
                           preferred_element_type=jnp.float32, precision=precision)
                 + b)
        else:
            z = jnp.dot(p_ref[off:off + dout, 0:din], h,
                        preferred_element_type=jnp.float32, precision=precision) + b
        if i == n_layers - 1:
            h = z                                              # final pre-tanh, f32
            break
        a = z.astype(compute_dtype)
        h = jnp.maximum(a, neg_slope * a)                      # LeakyReLU: mul+max only
        # TODO(synk): nn.Dropout (train mode) omitted — eval-mode identity used.
    if use_tanh:
        h = jnp.tanh(h)                                        # EUP, f32
    out_ref[...] = h.astype(out_ref.dtype)                     # (1, tile) lane-dense


def _choose_tile(n, tm_max):
    """128-aligned lane tile: as large as allowed, but >= 2 grid steps (v7x)."""
    tile = _round_up(min(max(int(tm_max), 128), max(n, 1)), 128)
    if n > 128:
        tile = min(tile, _round_up(_cdiv(n, 2), 128))
    return max(tile, 128)


def decoder_forward(x, params, *, tm=8192, compute_dtype=None):
    """x: (N, 3) float32, params: list of (W(in,out), b(1,out)). Returns (N, 1)."""
    N = x.shape[0]
    if compute_dtype is None:
        compute_dtype = _default_compute_dtype()
    compute_dtype = jnp.dtype(compute_dtype)
    is_f32 = compute_dtype == jnp.dtype(jnp.float32)
    precision = lax.Precision.HIGHEST if is_f32 else None

    slab, meta, bias_col = pack_params(params, LATENT_IN, compute_dtype)
    tile = _choose_tile(N, tm)
    grid = _cdiv(N, tile)

    # Single XLA transpose; no zero-pad / dynamic-update-slice copy — Pallas
    # masks the partial last block itself.
    x_t = x.T                                                  # (3, N)

    kernel = functools.partial(
        decoder_kernel, layer_meta=meta, bias_col=bias_col,
        use_tanh=USE_TANH, neg_slope=NEG_SLOPE,
        compute_dtype=compute_dtype, precision=precision)

    flops = sum(2 * int(w.shape[0]) * int(w.shape[1]) for w, _ in params) * N
    bytes_accessed = int(x.size * x.dtype.itemsize + N * x.dtype.itemsize
                         + slab.size * slab.dtype.itemsize)

    out = pl.pallas_call(
        kernel,
        out_shape=jax.ShapeDtypeStruct((1, N), x.dtype),
        grid=(grid,),
        in_specs=[
            pl.BlockSpec((3, tile), lambda i: (0, i)),         # points in lanes
            # Constant block index -> fetched once across the grid.  An
            # explicit pl.Buffered(1) would only save ~50 KiB of VMEM; omitted
            # for lowering portability across jax versions.
            pl.BlockSpec(slab.shape, lambda i: (0, 0)),
        ],
        out_specs=pl.BlockSpec((1, tile), lambda i: (0, i)),   # lane-dense output
        compiler_params=pltpu.CompilerParams(
            dimension_semantics=("parallel",),
            vmem_limit_bytes=48 * 1024 * 1024),                # safe on 64 MiB v7x VMEM too
        cost_estimate=pl.CostEstimate(
            flops=int(flops),
            transcendentals=int(N if USE_TANH else 0),
            bytes_accessed=bytes_accessed),
    )(x_t, slab)
    # (1, N) and (N, 1) share the same row-major flattening -> free reshape.
    return out.reshape(N, 1)


def decoder_ref(x, params):
    """Pure-JAX f32 reference mirroring Decoder.forward (eval mode)."""
    h = x
    for i, (w, b) in enumerate(params):
        if i in LATENT_IN:
            h = jnp.concatenate([h, x], axis=1)
        h = jnp.dot(h, w, precision=lax.Precision.HIGHEST) + b
        if i == len(params) - 1:
            break
        h = jnp.where(h > 0, h, NEG_SLOPE * h)
    if USE_TANH:
        h = jnp.tanh(h)
    return h


def init_params(key, layers):
    """Deterministic Linear-style init: U(-1/sqrt(fan_in), 1/sqrt(fan_in))."""
    params = []
    for (din, dout) in layers:
        key, kw, kb = jax.random.split(key, 3)
        bound = 1.0 / float(din) ** 0.5
        w = jax.random.uniform(kw, (din, dout), jnp.float32, -bound, bound)
        b = jax.random.uniform(kb, (1, dout), jnp.float32, -bound, bound)
        params.append((w, b))
    return params


if __name__ == "__main__":
    layers = _layer_dims(DIMS, LATENT_IN)
    # layers == [(3, 32), (32, 29), (32, 32), (32, 1)]

    key = jax.random.PRNGKey(0)
    key, kx = jax.random.split(key)
    N = 256                                   # number of query points
    x = jax.random.uniform(kx, (N, 3), jnp.float32, -1.0, 1.0)
    params = init_params(key, layers)

    # 1) f32 path (precision=HIGHEST) — tight check against the f32 reference.
    out = jax.block_until_ready(decoder_forward(x, params, compute_dtype=jnp.float32))
    ref = decoder_ref(x, params)
    assert out.shape == (N, 1)
    assert jnp.allclose(out, ref, rtol=1e-4, atol=1e-4), "mismatch vs reference (f32)"

    # 2) auto dtype (bf16 on v6e/v7x, f32 on v5e) + non-tile-multiple N to
    #    exercise the partial-last-block path.
    N2 = 200
    x2 = jax.random.uniform(jax.random.PRNGKey(7), (N2, 3), jnp.float32, -1.0, 1.0)
    out2 = jax.block_until_ready(decoder_forward(x2, params))
    ref2 = decoder_ref(x2, params)
    tol = 1e-4 if _default_compute_dtype() == jnp.dtype(jnp.float32) else 5e-2
    assert out2.shape == (N2, 1)
    assert jnp.allclose(out2, ref2, rtol=tol, atol=tol), "mismatch vs reference (auto dtype)"

    print("KERNEL_OK")
</pallas_src>

<mosaic_0001>
module attributes {stable_mosaic.version = 11 : i64} {
  func.func @decoder_kernel(%arg0: i32, %arg1: memref<3x128xf32, #tpu.memory_space<vmem>>, %arg2: memref<136x33xf32, #tpu.memory_space<vmem>>, %arg3: memref<1x128xf32, #tpu.memory_space<vmem>>) attributes {dimension_semantics = [#tpu.dimension_semantics<parallel>], iteration_bounds = array<i64: 2>, scalar_prefetch = 0 : i64, scratch_operands = 0 : i64, tpu.core_type = #tpu.core_type<tc>, window_params = [{transform_indices = @transform_0, window_bounds = array<i64: 3, 128>}, {pipeline_mode = #tpu.pipeline_mode<synchronous>, transform_indices = @transform_1, window_bounds = array<i64: 136, 33>}, {transform_indices = @transform_2, window_bounds = array<i64: 1, 128>}]} {
    %c0 = arith.constant 0 : index
    %c0_0 = arith.constant 0 : index
    %0 = vector.load %arg1[%c0, %c0_0] : memref<3x128xf32, #tpu.memory_space<vmem>>, vector<3x128xf32>
    %c0_1 = arith.constant 0 : index
    %c32 = arith.constant 32 : index
    %1 = vector.load %arg2[%c0_1, %c32] : memref<136x33xf32, #tpu.memory_space<vmem>>, vector<32x1xf32>
    %c0_2 = arith.constant 0 : index
    %c0_3 = arith.constant 0 : index
    %2 = vector.load %arg2[%c0_2, %c0_3] : memref<136x33xf32, #tpu.memory_space<vmem>>, vector<32x3xf32>
    %cst = arith.constant dense<0.000000e+00> : vector<32x128xf32>
    %3 = tpu.matmul %2, %0, %cst {dimension_numbers = #tpu.dot_dimension_numbers<[1], [0], [0], [1], [0, 0, 1, 1], [], []>, precision = #tpu.contract_precision<fp32>} : vector<32x3xf32>, vector<3x128xf32>, vector<32x128xf32> -> vector<32x128xf32>
    %4 = vector.broadcast %1 : vector<32x1xf32> to vector<32x128xf32>
    %5 = arith.addf %3, %4 : vector<32x128xf32>
    %cst_4 = arith.constant 0.00999999977 : f32
    %6 = vector.broadcast %cst_4 : f32 to vector<32x128xf32>
    %7 = arith.mulf %6, %5 : vector<32x128xf32>
    %8 = arith.maximumf %5, %7 : vector<32x128xf32>
    %c32_5 = arith.constant 32 : index
    %c32_6 = arith.constant 32 : index
    %9 = vector.load %arg2[%c32_5, %c32_6] : memref<136x33xf32, #tpu.memory_space<vmem>>, vector<29x1xf32>
    %c32_7 = arith.constant 32 : index
    %c0_8 = arith.constant 0 : index
    %10 = vector.load %arg2[%c32_7, %c0_8] : memref<136x33xf32, #tpu.memory_space<vmem>>, vector<29x32xf32>
    %cst_9 = arith.constant dense<0.000000e+00> : vector<29x128xf32>
    %11 = tpu.matmul %10, %8, %cst_9 {dimension_numbers = #tpu.dot_dimension_numbers<[1], [0], [0], [1], [0, 0, 1, 1], [], []>, precision = #tpu.contract_precision<fp32>} : vector<29x32xf32>, vector<32x128xf32>, vector<29x128xf32> -> vector<29x128xf32>
    %12 = vector.broadcast %9 : vector<29x1xf32> to vector<29x128xf32>
    %13 = arith.addf %11, %12 : vector<29x128xf32>
    %cst_10 = arith.constant 0.00999999977 : f32
    %14 = vector.broadcast %cst_10 : f32 to vector<29x128xf32>
    %15 = arith.mulf %14, %13 : vector<29x128xf32>
    %16 = arith.maximumf %13, %15 : vector<29x128xf32>
    %c64 = arith.constant 64 : index
    %c32_11 = arith.constant 32 : index
    %17 = vector.load %arg2[%c64, %c32_11] : memref<136x33xf32, #tpu.memory_space<vmem>>, vector<32x1xf32>
    %c64_12 = arith.constant 64 : index
    %c0_13 = arith.constant 0 : index
    %18 = vector.load %arg2[%c64_12, %c0_13] : memref<136x33xf32, #tpu.memory_space<vmem>>, vector<32x29xf32>
    %cst_14 = arith.constant dense<0.000000e+00> : vector<32x128xf32>
    %19 = tpu.matmul %18, %16, %cst_14 {dimension_numbers = #tpu.dot_dimension_numbers<[1], [0], [0], [1], [0, 0, 1, 1], [], []>, precision = #tpu.contract_precision<fp32>} : vector<32x29xf32>, vector<29x128xf32>, vector<32x128xf32> -> vector<32x128xf32>
    %c96 = arith.constant 96 : index
    %c0_15 = arith.constant 0 : index
    %20 = vector.load %arg2[%c96, %c0_15] : memref<136x33xf32, #tpu.memory_space<vmem>>, vector<32x3xf32>
    %cst_16 = arith.constant dense<0.000000e+00> : vector<32x128xf32>
    %21 = tpu.matmul %20, %0, %cst_16 {dimension_numbers = #tpu.dot_dimension_numbers<[1], [0], [0], [1], [0, 0, 1, 1], [], []>, precision = #tpu.contract_precision<fp32>} : vector<32x3xf32>, vector<3x128xf32>, vector<32x128xf32> -> vector<32x128xf32>
    %22 = arith.addf %19, %21 : vector<32x128xf32>
    %23 = vector.broadcast %17 : vector<32x1xf32> to vector<32x128xf32>
    %24 = arith.addf %22, %23 : vector<32x128xf32>
    %cst_17 = arith.constant 0.00999999977 : f32
    %25 = vector.broadcast %cst_17 : f32 to vector<32x128xf32>
    %26 = arith.mulf %25, %24 : vector<32x128xf32>
    %27 = arith.maximumf %24, %26 : vector<32x128xf32>
    %c128 = arith.constant 128 : index
    %c32_18 = arith.constant 32 : index
    %28 = vector.load %arg2[%c128, %c32_18] : memref<136x33xf32, #tpu.memory_space<vmem>>, vector<1x1xf32>
    %c128_19 = arith.constant 128 : index
    %c0_20 = arith.constant 0 : index
    %29 = vector.load %arg2[%c128_19, %c0_20] : memref<136x33xf32, #tpu.memory_space<vmem>>, vector<1x32xf32>
    %cst_21 = arith.constant dense<0.000000e+00> : vector<1x128xf32>
    %30 = tpu.matmul %29, %27, %cst_21 {dimension_numbers = #tpu.dot_dimension_numbers<[1], [0], [0], [1], [0, 0, 1, 1], [], []>, precision = #tpu.contract_precision<fp32>} : vector<1x32xf32>, vector<32x128xf32>, vector<1x128xf32> -> vector<1x128xf32>
    %31 = vector.broadcast %28 : vector<1x1xf32> to vector<1x128xf32>
    %32 = arith.addf %30, %31 : vector<1x128xf32>
    %33 = math.tanh %32 : vector<1x128xf32>
    %c0_22 = arith.constant 0 : index
    %c0_23 = arith.constant 0 : index
    %34 = vector.load %arg3[%c0_22, %c0_23] : memref<1x128xf32, #tpu.memory_space<vmem>>, vector<1x128xf32>
    tpu.vector_store %arg3[%c0_22, %c0_23], %33 {strides = array<i32>} : memref<1x128xf32, #tpu.memory_space<vmem>>, vector<1x128xf32>,
    return
  }
  func.func @transform_0(%arg0: i32) -> (i32, i32) {
    %c0_i32 = arith.constant 0 : i32
    %c0_i32_0 = arith.constant 0 : i32
    return %c0_i32, %arg0 : i32, i32
  }
  func.func @transform_1(%arg0: i32) -> (i32, i32) {
    %c0_i32 = arith.constant 0 : i32
    %c0_i32_0 = arith.constant 0 : i32
    %c0_i32_1 = arith.constant 0 : i32
    return %c0_i32, %c0_i32_0 : i32, i32
  }
  func.func @transform_2(%arg0: i32) -> (i32, i32) {
    %c0_i32 = arith.constant 0 : i32
    %c0_i32_0 = arith.constant 0 : i32
    return %c0_i32, %arg0 : i32, i32
  }
}

</mosaic_0001>

<llo_original>
// kernel: tpu_custom_call.1
$region0: #{tpu_custom_call.1}
  #allocation0 [shape = 'u32[]', space=smem, size = 0x4, offset = 0x4, fixed_abs, tag = 'smem constant byte address 0x4 - core index']
  #allocation1 [shape = 'u32[144,128]{1,0:T(1,128)}', space=vmem, size = 0x12000, scoped, tag = 'internal scratch']
  %s0 = inlined_call_operand.vmem [shape: f32[3,256], index: 0, kind: input, shape index: {}]
  %s1 = inlined_call_operand.vmem [shape: f32[136,33], index: 1, kind: input, shape index: {}]
  %s2 = inlined_call_operand.hbm [shape: f32[1,256], index: 2, kind: output, shape index: {}]
  %s3 = sld [smem:[#allocation0]]
  $region41: #{tpu_custom_call.1} parent=0
    _
  %s5 = ssub.s32 1, %s3
  %s6 = scalar_select 0, %s5, %s3
  $region1: #{tpu_custom_call.1} parent=0
    #allocation2 [shape = 'u8[1024]{0}', space=vmem, size = 0x400, scoped, tag = 'output window, operand 0']
    #allocation3 [shape = 's32[2]{0}', space=sflag, size = 0x8, scoped, tag = 'scoped memory for tpu_custom_call.1']
    %7 = vsyncpa [#allocation3], 0
    %s8 = scalar_lea.sflag [#allocation3], 1
    %9 = vsyncpa %s8, 0
    loop: start=0, step=1, limit=4
    $region2: #{tpu_custom_call.1} parent=1 // loop_pre_header
      _
    $region3: #{tpu_custom_call.1} parent=1 // loop_header
      %s11 = sphi 0, %s15
      %p12 = scmp.ge.s32.totalorder %s11, 4
      %s21 = sphi 0, %s23
      %s24 = sphi 0, %s21
      %s25 = sphi 0, %s24
      %s41 = sphi 0, %s25
      %s45 = sphi 0, %s45
      %s47 = sphi 0, %s45
      %s48 = sphi 0, %s47
      %s62 = sphi 0, %s48
      %s68 = sphi 0, %s70
      %s71 = sphi 0, %s68
      %s72 = sphi 0, %s71
      %s88 = sphi 0, %s72
    $region4: #{tpu_custom_call.1} parent=1 // loop_header_branch
      %14 = sbr.rel (%p12) target = $region8
    $region5: #{tpu_custom_call.1} parent=1 // loop_body
      %s16 = ssub.s32 %s11, 1
      %s17 = ssub.s32 %s11, 2
      %s18 = sadd.s32 %s11, 1
      %s19 = ssub.s32 %s11, %s18
      %p20 = scmp.eq.s32.totalorder %s19, 0
      %s22 = sadd.s32 %s21, 1
      %s23 = scalar_select %p20, %s21, %s22
      %p26 = pneg %p20
      %p27 = scmp.eq.s32.totalorder %s11, 1
      %p28 = por %p26, %p27
      %p29 = scmp.ne.s32.totalorder %s21, %s24
      %p30 = scmp.eq.s32.totalorder %s11, 0
      %p31 = por %p29, %p30
      %p32 = scmp.ne.s32.totalorder %s21, %s24
      %p33 = scmp.eq.s32.totalorder %s16, 1
      %p34 = por %p32, %p33
      %p35 = scmp.ne.s32.totalorder %s24, %s25
      %p36 = scmp.eq.s32.totalorder %s16, 0
      %p37 = por %p35, %p36
      %p38 = scmp.ne.s32.totalorder %s24, %s25
      %p39 = scmp.eq.s32.totalorder %s17, 1
      %p40 = por %p38, %p39
      %p42 = scmp.ne.s32.totalorder %s25, %s41
      %p43 = scmp.eq.s32.totalorder %s17, 0
      %p44 = por %p42, %p43
      %s46 = sadd.s32 %s45, 1
      %p49 = scmp.eq.s32.totalorder %s11, 1
      %p50 = scmp.ne.s32.totalorder %s45, %s47
      %p51 = scmp.eq.s32.totalorder %s11, 0
      %p52 = por %p50, %p51
      %p53 = scmp.ne.s32.totalorder %s45, %s47
      %p54 = scmp.eq.s32.totalorder %s16, 1
      %p55 = por %p53, %p54
      %p56 = scmp.ne.s32.totalorder %s47, %s48
      %p57 = scmp.eq.s32.totalorder %s16, 0
      %p58 = por %p56, %p57
      %p59 = scmp.ne.s32.totalorder %s47, %s48
      %p60 = scmp.eq.s32.totalorder %s17, 1
      %p61 = por %p59, %p60
      %p63 = scmp.ne.s32.totalorder %s48, %s62
      %p64 = scmp.eq.s32.totalorder %s17, 0
      %p65 = por %p63, %p64
      %s66 = ssub.s32 %s11, %s18
      %p67 = scmp.eq.s32.totalorder %s66, 0
      %s69 = sadd.s32 %s68, 1
      %s70 = scalar_select %p67, %s68, %s69
      %p73 = pneg %p67
      %p74 = scmp.eq.s32.totalorder %s11, 1
      %p75 = por %p73, %p74
      %p76 = scmp.ne.s32.totalorder %s68, %s71
      %p77 = scmp.eq.s32.totalorder %s11, 0
      %p78 = por %p76, %p77
      %p79 = scmp.ne.s32.totalorder %s68, %s71
      %p80 = scmp.eq.s32.totalorder %s16, 1
      %p81 = por %p79, %p80
      %p82 = scmp.ne.s32.totalorder %s71, %s72
      %p83 = scmp.eq.s32.totalorder %s16, 0
      %p84 = por %p82, %p83
      %p85 = scmp.ne.s32.totalorder %s71, %s72
      %p86 = scmp.eq.s32.totalorder %s17, 1
      %p87 = por %p85, %p86
      %p89 = scmp.ne.s32.totalorder %s72, %s88
      %p90 = scmp.eq.s32.totalorder %s17, 0
      %p91 = por %p89, %p90
      %p92 = scmp.le.s32.totalorder 1, %s11
      %p93 = scmp.lt.s32.totalorder %s11, 3
      %p94 = pnand %p92, %p93
      %p95 = pneg %p94
      // Predicated region
      $region9: #{tpu_custom_call.1} parent=5 // pred_check
        _
      $region10: #{tpu_custom_call.1} parent=5 // pred_check_branch
        %97 = sbr.rel (%p94) target = $region12
      $region11: #{tpu_custom_call.1} parent=5 // pred_region
        %s98 = ssub.s32 %s11, 1
        // Predicated region
        $region13: #{tpu_custom_call.1} parent=11 // pred_check
          %p99 = pneg %p58
        $region14: #{tpu_custom_call.1} parent=11 // pred_check_branch
          %101 = sbr.rel (%p99) target = $region16
        $region15: #{tpu_custom_call.1} parent=11 // pred_region
          _
        $region16: #{tpu_custom_call.1} parent=11 // pred_fallthru
          _
      $region12: #{tpu_custom_call.1} parent=5 // pred_fallthru
        _
      %p102 = scmp.lt.s32.totalorder %s11, 2
      // Predicated region
      $region17: #{tpu_custom_call.1} parent=5 // pred_check
        %p103 = pneg %p102
      $region18: #{tpu_custom_call.1} parent=5 // pred_check_branch
        %105 = sbr.rel (%p103) target = $region20
      $region19: #{tpu_custom_call.1} parent=5 // pred_region
        // Predicated region
        $region21: #{tpu_custom_call.1} parent=19 // pred_check
          %p106 = pneg %p31
        $region22: #{tpu_custom_call.1} parent=19 // pred_check_branch
          %108 = sbr.rel (%p106) target = $region24
        $region23: #{tpu_custom_call.1} parent=19 // pred_region
          %p109 = scmp.lt.s32.totalorder %s11, 1
          %s110 = scalar_select %p109, %s11, 1
          %s111 = smul.addr %s110, 4
          %s112 = scalar_lea.vmem %s0, %s111
        $region24: #{tpu_custom_call.1} parent=19 // pred_fallthru
          _
      $region20: #{tpu_custom_call.1} parent=5 // pred_fallthru
        _
      %p113 = scmp.le.s32.totalorder 1, %s11
      %p114 = scmp.lt.s32.totalorder %s11, 3
      %p115 = pnand %p113, %p114
      %p116 = pneg %p115
      // Predicated region
      $region25: #{tpu_custom_call.1} parent=5 // pred_check
        _
      $region26: #{tpu_custom_call.1} parent=5 // pred_check_branch
        %118 = sbr.rel (%p115) target = $region28
      $region27: #{tpu_custom_call.1} parent=5 // pred_region
        %s119 = ssub.s32 %s11, 1
        %p120 = scmp.lt.s32.totalorder %s16, 1
        %s121 = scalar_select %p120, %s16, 1
        %s122 = smul.addr %s121, 4
        %s123 = scalar_lea.vmem %s0, %s122
        %p124 = pneg %p37
        %p125 = pneg %p34
        %p126 = pneg %p58
        %p127 = pneg %p55
        %p128 = pneg %p84
        %p129 = pneg %p81
        %s130 = sand.u32 %s71, 1
        %s131 = scalar_lea.sflag [#allocation3], %s130
        %s132 = sand.u32 %s71, 1
        %s133 = scalar_lea.vmem [#allocation2], %s132
        %p134 = scmp.lt.s32.totalorder %s16, 1
        %s135 = scalar_select %p134, %s16, 1
        %s136 = smul.addr %s135, 4
        %s137 = scalar_lea.vmem %s0, %s136
        %v138 = vld [vmem:[%s137] sm:$0x7]
        %v139 = vld [vmem:[%s1] sm:$0xff]
        %v140 = vld [vmem:[%s1 + $0x8] sm:$0xff]
        %v141 = vld [vmem:[%s1 + $0x10] sm:$0xff]
        %v142 = vld [vmem:[%s1 + $0x18] sm:$0xff]
        %144 = vset.pattern.permute.xlu0 32
        %145 = vperm.xlu0 %144, %v139
        %v146 = vpop.permute.xlu0 %145
        %149 = vset.pattern.permute.xlu0 32
        %150 = vperm.xlu0 %149, %v140
        %v151 = vpop.permute.xlu0 %150
        %154 = vset.pattern.permute.xlu0 32
        %155 = vperm.xlu0 %154, %v141
        %v156 = vpop.permute.xlu0 %155
        %159 = vset.pattern.permute.xlu0 32
        %160 = vperm.xlu0 %159, %v142
        %v161 = vpop.permute.xlu0 %160
        %vm163 = vcmask 23552
        %v164 = vsel %vm163, %v139, 0
        %v166 = vsel %vm163, %v140, 0
        %v168 = vsel %vm163, %v141, 0
        %v170 = vsel %vm163, %v142, 0
        %vm172 = vcmask 1042432
        %v174 = vsel %vm172, %v138, 0
        %176 = vmatprep.subr.mxu0 0.0
        %177 = vmatpush1.msra.mxu0 0.0
        %178 = vmatprep.subr.mxu0 0.0
        %179 = vmatpush1.msra.mxu0 0.0
        %180 = vmatprep.subr.mxu0 0.0
        %181 = vmatpush1.msra.mxu0 0.0
        %182 = vmatprep.subr.mxu0 0.0
        %183 = vmatpush1.msra.mxu0 0.0
        %184 = vmatprep.subr.mxu0 0.0
        %185 = vmatpush1.msra.mxu0 0.0
        %186 = vmatprep.subr.mxu0 0.0
        %187 = vmatpush1.msra.mxu0 0.0
        %188 = vmatprep.subr.mxu0 0.0
        %189 = vmatpush1.msra.mxu0 0.0
        %190 = vmatprep.subr.mxu0 0.0
        %191 = vmatpush1.msra.mxu0 0.0
        %192 = vmatprep.subr.mxu0 0.0
        %193 = vmatpush1.msra.mxu0 0.0
        %194 = vmatprep.subr.mxu0 0.0
        %195 = vmatpush1.msra.mxu0 0.0
        %196 = vmatprep.subr.mxu0 0.0
        %197 = vmatpush1.msra.mxu0 0.0
        %198 = vmatprep.subr.mxu0 0.0
        %199 = vmatpush1.msra.mxu0 0.0
        %200 = vmatprep.subr.mxu0 0.0
        %201 = vmatpush1.msra.mxu0 0.0
        %202 = vmatprep.subr.mxu0 0.0
        %203 = vmatpush1.msra.mxu0 0.0
        %204 = vmatprep.subr.mxu0 0.0
        %205 = vmatpush1.msra.mxu0 0.0
        %206 = vmatprep.subr.mxu0 0.0
        %v207 = vand.u32 %v174, 4294901760
        %208 = vmatpush1.msra.mxu0 %v207
        %209 = vmatprep.subr.mxu0 0.0
        %210 = vmatpush2.msra.mxu0 0.0
        %211 = vmatprep.subr.mxu0 0.0
        %212 = vmatpush2.msra.mxu0 0.0
        %213 = vmatprep.subr.mxu0 0.0
        %214 = vmatpush2.msra.mxu0 0.0
        %215 = vmatprep.subr.mxu0 0.0
        %216 = vmatpush2.msra.mxu0 0.0
        %217 = vmatprep.subr.mxu0 0.0
        %218 = vmatpush2.msra.mxu0 0.0
        %219 = vmatprep.subr.mxu0 0.0
        %220 = vmatpush2.msra.mxu0 0.0
        %221 = vmatprep.subr.mxu0 0.0
        %222 = vmatpush2.msra.mxu0 0.0
        %223 = vmatprep.subr.mxu0 0.0
        %224 = vmatpush2.msra.mxu0 0.0
        %225 = vmatprep.subr.mxu0 0.0
        %226 = vmatpush2.msra.mxu0 0.0
        %227 = vmatprep.subr.mxu0 0.0
        %228 = vmatpush2.msra.mxu0 0.0
        %229 = vmatprep.subr.mxu0 0.0
        %230 = vmatpush2.msra.mxu0 0.0
        %231 = vmatprep.subr.mxu0 0.0
        %232 = vmatpush2.msra.mxu0 0.0
        %233 = vmatprep.subr.mxu0 0.0
        %234 = vmatpush2.msra.mxu0 0.0
        %235 = vmatprep.subr.mxu0 0.0
        %236 = vmatpush2.msra.mxu0 0.0
        %237 = vmatprep.subr.mxu0 0.0
        %238 = vmatpush2.msra.mxu0 0.0
        %239 = vmatprep.subr.mxu0 0.0
        %240 = vmatpush2.msra.mxu0 0.0
        %241 = vmatprep.mubr.f32.mxu0 0.0
        %v242 = vand.u32 %v164, 4294901760
        %v243 = vsub.f32 %v164, %v242
        %v244 = vand.u32 %v243, 4294901760
        %v245 = vsub.f32 %v243, %v244
        %v246 = vand.u32 %v245, 4294901760
        %247 = vmatmul.mubr.f32.gmra.mxu0 %v246
        %v248 = vpop.f32.mrf.mxu0
        %v249 = vadd.f32 %v146, %v248
        %v250 = vpop.f32.mrf.mxu0
        %251 = vmatprep.mubr.f32.mxu0 0.0
        %v252 = vand.u32 %v166, 4294901760
        %v253 = vsub.f32 %v166, %v252
        %v254 = vand.u32 %v253, 4294901760
        %v255 = vsub.f32 %v253, %v254
        %v256 = vand.u32 %v255, 4294901760
        %257 = vmatmul.mubr.f32.gmra.mxu0 %v256
        %v258 = vpop.f32.mrf.mxu0
        %v259 = vadd.f32 %v151, %v258
        %v260 = vpop.f32.mrf.mxu0
        %261 = vmatprep.mubr.f32.mxu0 0.0
        %v262 = vand.u32 %v168, 4294901760
        %v263 = vsub.f32 %v168, %v262
        %v264 = vand.u32 %v263, 4294901760
        %v265 = vsub.f32 %v263, %v264
        %v266 = vand.u32 %v265, 4294901760
        %267 = vmatmul.mubr.f32.gmra.mxu0 %v266
        %v268 = vpop.f32.mrf.mxu0
        %v269 = vadd.f32 %v156, %v268
        %v270 = vpop.f32.mrf.mxu0
        %271 = vmatprep.mubr.f32.mxu0 0.0
        %v272 = vand.u32 %v170, 4294901760
        %v273 = vsub.f32 %v170, %v272
        %v274 = vand.u32 %v273, 4294901760
        %v275 = vsub.f32 %v273, %v274
        %v276 = vand.u32 %v275, 4294901760
        %277 = vmatmul.mubr.f32.gmra.mxu0 %v276
        %v278 = vpop.f32.mrf.mxu0
        %v279 = vadd.f32 %v161, %v278
        %v280 = vpop.f32.mrf.mxu0
        %281 = vdwg.mxu0
        %282 = vmatprep.subr.mxu0 0.0
        %283 = vmatpush1.msra.mxu0 0.0
        %284 = vmatprep.subr.mxu0 0.0
        %285 = vmatpush1.msra.mxu0 0.0
        %286 = vmatprep.subr.mxu0 0.0
        %287 = vmatpush1.msra.mxu0 0.0
        %288 = vmatprep.subr.mxu0 0.0
        %289 = vmatpush1.msra.mxu0 0.0
        %290 = vmatprep.subr.mxu0 0.0
        %291 = vmatpush1.msra.mxu0 0.0
        %292 = vmatprep.subr.mxu0 0.0
        %293 = vmatpush1.msra.mxu0 0.0
        %294 = vmatprep.subr.mxu0 0.0
        %295 = vmatpush1.msra.mxu0 0.0
        %296 = vmatprep.subr.mxu0 0.0
        %297 = vmatpush1.msra.mxu0 0.0
        %298 = vmatprep.subr.mxu0 0.0
        %299 = vmatpush1.msra.mxu0 0.0
        %300 = vmatprep.subr.mxu0 0.0
        %301 = vmatpush1.msra.mxu0 0.0
        %302 = vmatprep.subr.mxu0 0.0
        %303 = vmatpush1.msra.mxu0 0.0
        %304 = vmatprep.subr.mxu0 0.0
        %305 = vmatpush1.msra.mxu0 0.0
        %306 = vmatprep.subr.mxu0 0.0
        %307 = vmatpush1.msra.mxu0 0.0
        %308 = vmatprep.subr.mxu0 0.0
        %309 = vmatpush1.msra.mxu0 0.0
        %310 = vmatprep.subr.mxu0 0.0
        %311 = vmatpush1.msra.mxu0 0.0
        %312 = vmatprep.subr.mxu0 0.0
        %v313 = vand.u32 %v174, 4294901760
        %v314 = vsub.f32 %v174, %v313
        %v315 = vand.u32 %v314, 4294901760
        %v316 = vsub.f32 %v314, %v315
        %v317 = vand.u32 %v316, 4294901760
        %318 = vmatpush1.msra.mxu0 %v317
        %319 = vmatprep.subr.mxu0 0.0
        %320 = vmatpush2.msra.mxu0 0.0
        %321 = vmatprep.subr.mxu0 0.0
        %322 = vmatpush2.msra.mxu0 0.0
        %323 = vmatprep.subr.mxu0 0.0
        %324 = vmatpush2.msra.mxu0 0.0
        %325 = vmatprep.subr.mxu0 0.0
        %326 = vmatpush2.msra.mxu0 0.0
        %327 = vmatprep.subr.mxu0 0.0
        %328 = vmatpush2.msra.mxu0 0.0
        %329 = vmatprep.subr.mxu0 0.0
        %330 = vmatpush2.msra.mxu0 0.0
        %331 = vmatprep.subr.mxu0 0.0
        %332 = vmatpush2.msra.mxu0 0.0
        %333 = vmatprep.subr.mxu0 0.0
        %334 = vmatpush2.msra.mxu0 0.0
        %335 = vmatprep.subr.mxu0 0.0
        %336 = vmatpush2.msra.mxu0 0.0
        %337 = vmatprep.subr.mxu0 0.0
        %338 = vmatpush2.msra.mxu0 0.0
        %339 = vmatprep.subr.mxu0 0.0
        %340 = vmatpush2.msra.mxu0 0.0
        %341 = vmatprep.subr.mxu0 0.0
        %342 = vmatpush2.msra.mxu0 0.0
        %343 = vmatprep.subr.mxu0 0.0
        %344 = vmatpush2.msra.mxu0 0.0
        %345 = vmatprep.subr.mxu0 0.0
        %346 = vmatpush2.msra.mxu0 0.0
        %347 = vmatprep.subr.mxu0 0.0
        %348 = vmatpush2.msra.mxu0 0.0
        %349 = vmatprep.subr.mxu0 0.0
        %350 = vmatpush2.msra.mxu0 0.0
        %351 = vmatprep.mubr.f32.mxu0 0.0
        %v352 = vand.u32 %v164, 4294901760
        %353 = vmatmul.mubr.f32.gmra.mxu0 %v352
        %v354 = vpop.f32.mrf.mxu0
        %v355 = vadd.f32 %v249, %v354
        %v356 = vpop.f32.mrf.mxu0
        %357 = vmatprep.mubr.f32.mxu0 0.0
        %v358 = vand.u32 %v166, 4294901760
        %359 = vmatmul.mubr.f32.gmra.mxu0 %v358
        %v360 = vpop.f32.mrf.mxu0
        %v361 = vadd.f32 %v259, %v360
        %v362 = vpop.f32.mrf.mxu0
        %363 = vmatprep.mubr.f32.mxu0 0.0
        %v364 = vand.u32 %v168, 4294901760
        %365 = vmatmul.mubr.f32.gmra.mxu0 %v364
        %v366 = vpop.f32.mrf.mxu0
        %v367 = vadd.f32 %v269, %v366
        %v368 = vpop.f32.mrf.mxu0
        %369 = vmatprep.mubr.f32.mxu0 0.0
        %v370 = vand.u32 %v170, 4294901760
        %371 = vmatmul.mubr.f32.gmra.mxu0 %v370
        %v372 = vpop.f32.mrf.mxu0
        %v373 = vadd.f32 %v279, %v372
        %v374 = vpop.f32.mrf.mxu0
        %375 = vdwg.mxu0
        %376 = vmatprep.subr.mxu0 0.0
        %377 = vmatpush1.msra.mxu0 0.0
        %378 = vmatprep.subr.mxu0 0.0
        %379 = vmatpush1.msra.mxu0 0.0
        %380 = vmatprep.subr.mxu0 0.0
        %381 = vmatpush1.msra.mxu0 0.0
        %382 = vmatprep.subr.mxu0 0.0
        %383 = vmatpush1.msra.mxu0 0.0
        %384 = vmatprep.subr.mxu0 0.0
        %385 = vmatpush1.msra.mxu0 0.0
        %386 = vmatprep.subr.mxu0 0.0
        %387 = vmatpush1.msra.mxu0 0.0
        %388 = vmatprep.subr.mxu0 0.0
        %389 = vmatpush1.msra.mxu0 0.0
        %390 = vmatprep.subr.mxu0 0.0
        %391 = vmatpush1.msra.mxu0 0.0
        %392 = vmatprep.subr.mxu0 0.0
        %393 = vmatpush1.msra.mxu0 0.0
        %394 = vmatprep.subr.mxu0 0.0
        %395 = vmatpush1.msra.mxu0 0.0
        %396 = vmatprep.subr.mxu0 0.0
        %397 = vmatpush1.msra.mxu0 0.0
        %398 = vmatprep.subr.mxu0 0.0
        %399 = vmatpush1.msra.mxu0 0.0
        %400 = vmatprep.subr.mxu0 0.0
        %401 = vmatpush1.msra.mxu0 0.0
        %402 = vmatprep.subr.mxu0 0.0
        %403 = vmatpush1.msra.mxu0 0.0
        %404 = vmatprep.subr.mxu0 0.0
        %405 = vmatpush1.msra.mxu0 0.0
        %406 = vmatprep.subr.mxu0 0.0
        %v407 = vand.u32 %v174, 4294901760
        %v408 = vsub.f32 %v174, %v407
        %409 = vmatpush1.msra.mxu0 %v408
        %410 = vmatprep.subr.mxu0 0.0
        %411 = vmatpush2.msra.mxu0 0.0
        %412 = vmatprep.subr.mxu0 0.0
        %413 = vmatpush2.msra.mxu0 0.0
        %414 = vmatprep.subr.mxu0 0.0
        %415 = vmatpush2.msra.mxu0 0.0
        %416 = vmatprep.subr.mxu0 0.0
        %417 = vmatpush2.msra.mxu0 0.0
        %418 = vmatprep.subr.mxu0 0.0
        %419 = vmatpush2.msra.mxu0 0.0
        %420 = vmatprep.subr.mxu0 0.0
        %421 = vmatpush2.msra.mxu0 0.0
        %422 = vmatprep.subr.mxu0 0.0
        %423 = vmatpush2.msra.mxu0 0.0
        %424 = vmatprep.subr.mxu0 0.0
        %425 = vmatpush2.msra.mxu0 0.0
        %426 = vmatprep.subr.mxu0 0.0
        %427 = vmatpush2.msra.mxu0 0.0
        %428 = vmatprep.subr.mxu0 0.0
        %429 = vmatpush2.msra.mxu0 0.0
        %430 = vmatprep.subr.mxu0 0.0
        %431 = vmatpush2.msra.mxu0 0.0
        %432 = vmatprep.subr.mxu0 0.0
        %433 = vmatpush2.msra.mxu0 0.0
        %434 = vmatprep.subr.mxu0 0.0
        %435 = vmatpush2.msra.mxu0 0.0
        %436 = vmatprep.subr.mxu0 0.0
        %437 = vmatpush2.msra.mxu0 0.0
        %438 = vmatprep.subr.mxu0 0.0
        %439 = vmatpush2.msra.mxu0 0.0
        %440 = vmatprep.subr.mxu0 0.0
        %441 = vmatpush2.msra.mxu0 0.0
        %442 = vmatprep.mubr.f32.mxu0 0.0
        %v443 = vand.u32 %v164, 4294901760
        %v444 = vsub.f32 %v164, %v443
        %445 = vmatmul.mubr.f32.gmra.mxu0 %v444
        %v446 = vpop.f32.mrf.mxu0
        %v447 = vadd.f32 %v355, %v446
        %v448 = vpop.f32.mrf.mxu0
        %449 = vmatprep.mubr.f32.mxu0 0.0
        %v450 = vand.u32 %v166, 4294901760
        %v451 = vsub.f32 %v166, %v450
        %452 = vmatmul.mubr.f32.gmra.mxu0 %v451
        %v453 = vpop.f32.mrf.mxu0
        %v454 = vadd.f32 %v361, %v453
        %v455 = vpop.f32.mrf.mxu0
        %456 = vmatprep.mubr.f32.mxu0 0.0
        %v457 = vand.u32 %v168, 4294901760
        %v458 = vsub.f32 %v168, %v457
        %459 = vmatmul.mubr.f32.gmra.mxu0 %v458
        %v460 = vpop.f32.mrf.mxu0
        %v461 = vadd.f32 %v367, %v460
        %v462 = vpop.f32.mrf.mxu0
        %463 = vmatprep.mubr.f32.mxu0 0.0
        %v464 = vand.u32 %v170, 4294901760
        %v465 = vsub.f32 %v170, %v464
        %466 = vmatmul.mubr.f32.gmra.mxu0 %v465
        %v467 = vpop.f32.mrf.mxu0
        %v468 = vadd.f32 %v373, %v467
        %v469 = vpop.f32.mrf.mxu0
        %470 = vdwg.mxu0
        %471 = vmatprep.subr.mxu0 0.0
        %472 = vmatpush1.msra.mxu0 0.0
        %473 = vmatprep.subr.mxu0 0.0
        %474 = vmatpush1.msra.mxu0 0.0
        %475 = vmatprep.subr.mxu0 0.0
        %476 = vmatpush1.msra.mxu0 0.0
        %477 = vmatprep.subr.mxu0 0.0
        %478 = vmatpush1.msra.mxu0 0.0
        %479 = vmatprep.subr.mxu0 0.0
        %480 = vmatpush1.msra.mxu0 0.0
        %481 = vmatprep.subr.mxu0 0.0
        %482 = vmatpush1.msra.mxu0 0.0
        %483 = vmatprep.subr.mxu0 0.0
        %484 = vmatpush1.msra.mxu0 0.0
        %485 = vmatprep.subr.mxu0 0.0
        %486 = vmatpush1.msra.mxu0 0.0
        %487 = vmatprep.subr.mxu0 0.0
        %488 = vmatpush1.msra.mxu0 0.0
        %489 = vmatprep.subr.mxu0 0.0
        %490 = vmatpush1.msra.mxu0 0.0
        %491 = vmatprep.subr.mxu0 0.0
        %492 = vmatpush1.msra.mxu0 0.0
        %493 = vmatprep.subr.mxu0 0.0
        %494 = vmatpush1.msra.mxu0 0.0
        %495 = vmatprep.subr.mxu0 0.0
        %496 = vmatpush1.msra.mxu0 0.0
        %497 = vmatprep.subr.mxu0 0.0
        %498 = vmatpush1.msra.mxu0 0.0
        %499 = vmatprep.subr.mxu0 0.0
        %500 = vmatpush1.msra.mxu0 0.0
        %501 = vmatprep.subr.mxu0 0.0
        %v502 = vand.u32 %v174, 4294901760
        %503 = vmatpush1.msra.mxu0 %v502
        %504 = vmatprep.subr.mxu0 0.0
        %505 = vmatpush2.msra.mxu0 0.0
        %506 = vmatprep.subr.mxu0 0.0
        %507 = vmatpush2.msra.mxu0 0.0
        %508 = vmatprep.subr.mxu0 0.0
        %509 = vmatpush2.msra.mxu0 0.0
        %510 = vmatprep.subr.mxu0 0.0
        %511 = vmatpush2.msra.mxu0 0.0
        %512 = vmatprep.subr.mxu0 0.0
        %513 = vmatpush2.msra.mxu0 0.0
        %514 = vmatprep.subr.mxu0 0.0
        %515 = vmatpush2.msra.mxu0 0.0
        %516 = vmatprep.subr.mxu0 0.0
        %517 = vmatpush2.msra.mxu0 0.0
        %518 = vmatprep.subr.mxu0 0.0
        %519 = vmatpush2.msra.mxu0 0.0
        %520 = vmatprep.subr.mxu0 0.0
        %521 = vmatpush2.msra.mxu0 0.0
        %522 = vmatprep.subr.mxu0 0.0
        %523 = vmatpush2.msra.mxu0 0.0
        %524 = vmatprep.subr.mxu0 0.0
        %525 = vmatpush2.msra.mxu0 0.0
        %526 = vmatprep.subr.mxu0 0.0
        %527 = vmatpush2.msra.mxu0 0.0
        %528 = vmatprep.subr.mxu0 0.0
        %529 = vmatpush2.msra.mxu0 0.0
        %530 = vmatprep.subr.mxu0 0.0
        %531 = vmatpush2.msra.mxu0 0.0
        %532 = vmatprep.subr.mxu0 0.0
        %533 = vmatpush2.msra.mxu0 0.0
        %534 = vmatprep.subr.mxu0 0.0
        %535 = vmatpush2.msra.mxu0 0.0
        %536 = vmatprep.mubr.f32.mxu0 0.0
        %v537 = vand.u32 %v164, 4294901760
        %v538 = vsub.f32 %v164, %v537
        %v539 = vand.u32 %v538, 4294901760
        %540 = vmatmul.mubr.f32.gmra.mxu0 %v539
        %v541 = vpop.f32.mrf.mxu0
        %v542 = vadd.f32 %v447, %v541
        %v543 = vpop.f32.mrf.mxu0
        %544 = vmatprep.mubr.f32.mxu0 0.0
        %v545 = vand.u32 %v166, 4294901760
        %v546 = vsub.f32 %v166, %v545
        %v547 = vand.u32 %v546, 4294901760
        %548 = vmatmul.mubr.f32.gmra.mxu0 %v547
        %v549 = vpop.f32.mrf.mxu0
        %v550 = vadd.f32 %v454, %v549
        %v551 = vpop.f32.mrf.mxu0
        %552 = vmatprep.mubr.f32.mxu0 0.0
        %v553 = vand.u32 %v168, 4294901760
        %v554 = vsub.f32 %v168, %v553
        %v555 = vand.u32 %v554, 4294901760
        %556 = vmatmul.mubr.f32.gmra.mxu0 %v555
        %v557 = vpop.f32.mrf.mxu0
        %v558 = vadd.f32 %v461, %v557
        %v559 = vpop.f32.mrf.mxu0
        %560 = vmatprep.mubr.f32.mxu0 0.0
        %v561 = vand.u32 %v170, 4294901760
        %v562 = vsub.f32 %v170, %v561
        %v563 = vand.u32 %v562, 4294901760
        %564 = vmatmul.mubr.f32.gmra.mxu0 %v563
        %v565 = vpop.f32.mrf.mxu0
        %v566 = vadd.f32 %v468, %v565
        %v567 = vpop.f32.mrf.mxu0
        %568 = vdwg.mxu0
        %569 = vmatprep.subr.mxu0 0.0
        %570 = vmatpush1.msra.mxu0 0.0
        %571 = vmatprep.subr.mxu0 0.0
        %572 = vmatpush1.msra.mxu0 0.0
        %573 = vmatprep.subr.mxu0 0.0
        %574 = vmatpush1.msra.mxu0 0.0
        %575 = vmatprep.subr.mxu0 0.0
        %576 = vmatpush1.msra.mxu0 0.0
        %577 = vmatprep.subr.mxu0 0.0
        %578 = vmatpush1.msra.mxu0 0.0
        %579 = vmatprep.subr.mxu0 0.0
        %580 = vmatpush1.msra.mxu0 0.0
        %581 = vmatprep.subr.mxu0 0.0
        %582 = vmatpush1.msra.mxu0 0.0
        %583 = vmatprep.subr.mxu0 0.0
        %584 = vmatpush1.msra.mxu0 0.0
        %585 = vmatprep.subr.mxu0 0.0
        %586 = vmatpush1.msra.mxu0 0.0
        %587 = vmatprep.subr.mxu0 0.0
        %588 = vmatpush1.msra.mxu0 0.0
        %589 = vmatprep.subr.mxu0 0.0
        %590 = vmatpush1.msra.mxu0 0.0
        %591 = vmatprep.subr.mxu0 0.0
        %592 = vmatpush1.msra.mxu0 0.0
        %593 = vmatprep.subr.mxu0 0.0
        %594 = vmatpush1.msra.mxu0 0.0
        %595 = vmatprep.subr.mxu0 0.0
        %596 = vmatpush1.msra.mxu0 0.0
        %597 = vmatprep.subr.mxu0 0.0
        %598 = vmatpush1.msra.mxu0 0.0
        %599 = vmatprep.subr.mxu0 0.0
        %v600 = vand.u32 %v174, 4294901760
        %v601 = vsub.f32 %v174, %v600
        %v602 = vand.u32 %v601, 4294901760
        %603 = vmatpush1.msra.mxu0 %v602
        %604 = vmatprep.subr.mxu0 0.0
        %605 = vmatpush2.msra.mxu0 0.0
        %606 = vmatprep.subr.mxu0 0.0
        %607 = vmatpush2.msra.mxu0 0.0
        %608 = vmatprep.subr.mxu0 0.0
        %609 = vmatpush2.msra.mxu0 0.0
        %610 = vmatprep.subr.mxu0 0.0
        %611 = vmatpush2.msra.mxu0 0.0
        %612 = vmatprep.subr.mxu0 0.0
        %613 = vmatpush2.msra.mxu0 0.0
        %614 = vmatprep.subr.mxu0 0.0
        %615 = vmatpush2.msra.mxu0 0.0
        %616 = vmatprep.subr.mxu0 0.0
        %617 = vmatpush2.msra.mxu0 0.0
        %618 = vmatprep.subr.mxu0 0.0
        %619 = vmatpush2.msra.mxu0 0.0
        %620 = vmatprep.subr.mxu0 0.0
        %621 = vmatpush2.msra.mxu0 0.0
        %622 = vmatprep.subr.mxu0 0.0
        %623 = vmatpush2.msra.mxu0 0.0
        %624 = vmatprep.subr.mxu0 0.0
        %625 = vmatpush2.msra.mxu0 0.0
        %626 = vmatprep.subr.mxu0 0.0
        %627 = vmatpush2.msra.mxu0 0.0
        %628 = vmatprep.subr.mxu0 0.0
        %629 = vmatpush2.msra.mxu0 0.0
        %630 = vmatprep.subr.mxu0 0.0
        %631 = vmatpush2.msra.mxu0 0.0
        %632 = vmatprep.subr.mxu0 0.0
        %633 = vmatpush2.msra.mxu0 0.0
        %634 = vmatprep.subr.mxu0 0.0
        %635 = vmatpush2.msra.mxu0 0.0
        %636 = vmatprep.mubr.f32.mxu0 0.0
        %v637 = vand.u32 %v164, 4294901760
        %638 = vmatmul.mubr.f32.gmra.mxu0 %v637
        %v639 = vpop.f32.mrf.mxu0
        %v640 = vadd.f32 %v542, %v639
        %v641 = vpop.f32.mrf.mxu0
        %642 = vmatprep.mubr.f32.mxu0 0.0
        %v643 = vand.u32 %v166, 4294901760
        %644 = vmatmul.mubr.f32.gmra.mxu0 %v643
        %v645 = vpop.f32.mrf.mxu0
        %v646 = vadd.f32 %v550, %v645
        %v647 = vpop.f32.mrf.mxu0
        %648 = vmatprep.mubr.f32.mxu0 0.0
        %v649 = vand.u32 %v168, 4294901760
        %650 = vmatmul.mubr.f32.gmra.mxu0 %v649
        %v651 = vpop.f32.mrf.mxu0
        %v652 = vadd.f32 %v558, %v651
        %v653 = vpop.f32.mrf.mxu0
        %654 = vmatprep.mubr.f32.mxu0 0.0
        %v655 = vand.u32 %v170, 4294901760
        %656 = vmatmul.mubr.f32.gmra.mxu0 %v655
        %v657 = vpop.f32.mrf.mxu0
        %v658 = vadd.f32 %v566, %v657
        %v659 = vpop.f32.mrf.mxu0
        %660 = vdwg.mxu0
        %661 = vmatprep.subr.mxu0 0.0
        %662 = vmatpush1.msra.mxu0 0.0
        %663 = vmatprep.subr.mxu0 0.0
        %664 = vmatpush1.msra.mxu0 0.0
        %665 = vmatprep.subr.mxu0 0.0
        %666 = vmatpush1.msra.mxu0 0.0
        %667 = vmatprep.subr.mxu0 0.0
        %668 = vmatpush1.msra.mxu0 0.0
        %669 = vmatprep.subr.mxu0 0.0
        %670 = vmatpush1.msra.mxu0 0.0
        %671 = vmatprep.subr.mxu0 0.0
        %672 = vmatpush1.msra.mxu0 0.0
        %673 = vmatprep.subr.mxu0 0.0
        %674 = vmatpush1.msra.mxu0 0.0
        %675 = vmatprep.subr.mxu0 0.0
        %676 = vmatpush1.msra.mxu0 0.0
        %677 = vmatprep.subr.mxu0 0.0
        %678 = vmatpush1.msra.mxu0 0.0
        %679 = vmatprep.subr.mxu0 0.0
        %680 = vmatpush1.msra.mxu0 0.0
        %681 = vmatprep.subr.mxu0 0.0
        %682 = vmatpush1.msra.mxu0 0.0
        %683 = vmatprep.subr.mxu0 0.0
        %684 = vmatpush1.msra.mxu0 0.0
        %685 = vmatprep.subr.mxu0 0.0
        %686 = vmatpush1.msra.mxu0 0.0
        %687 = vmatprep.subr.mxu0 0.0
        %688 = vmatpush1.msra.mxu0 0.0
        %689 = vmatprep.subr.mxu0 0.0
        %690 = vmatpush1.msra.mxu0 0.0
        %691 = vmatprep.subr.mxu0 0.0
        %v692 = vand.u32 %v174, 4294901760
        %693 = vmatpush1.msra.mxu0 %v692
        %694 = vmatprep.subr.mxu0 0.0
        %695 = vmatpush2.msra.mxu0 0.0
        %696 = vmatprep.subr.mxu0 0.0
        %697 = vmatpush2.msra.mxu0 0.0
        %698 = vmatprep.subr.mxu0 0.0
        %699 = vmatpush2.msra.mxu0 0.0
        %700 = vmatprep.subr.mxu0 0.0
        %701 = vmatpush2.msra.mxu0 0.0
        %702 = vmatprep.subr.mxu0 0.0
        %703 = vmatpush2.msra.mxu0 0.0
        %704 = vmatprep.subr.mxu0 0.0
        %705 = vmatpush2.msra.mxu0 0.0
        %706 = vmatprep.subr.mxu0 0.0
        %707 = vmatpush2.msra.mxu0 0.0
        %708 = vmatprep.subr.mxu0 0.0
        %709 = vmatpush2.msra.mxu0 0.0
        %710 = vmatprep.subr.mxu0 0.0
        %711 = vmatpush2.msra.mxu0 0.0
        %712 = vmatprep.subr.mxu0 0.0
        %713 = vmatpush2.msra.mxu0 0.0
        %714 = vmatprep.subr.mxu0 0.0
        %715 = vmatpush2.msra.mxu0 0.0
        %716 = vmatprep.subr.mxu0 0.0
        %717 = vmatpush2.msra.mxu0 0.0
        %718 = vmatprep.subr.mxu0 0.0
        %719 = vmatpush2.msra.mxu0 0.0
        %720 = vmatprep.subr.mxu0 0.0
        %721 = vmatpush2.msra.mxu0 0.0
        %722 = vmatprep.subr.mxu0 0.0
        %723 = vmatpush2.msra.mxu0 0.0
        %724 = vmatprep.subr.mxu0 0.0
        %725 = vmatpush2.msra.mxu0 0.0
        %726 = vmatprep.mubr.f32.mxu0 0.0
        %v727 = vand.u32 %v164, 4294901760
        %728 = vmatmul.mubr.f32.gmra.mxu0 %v727
        %v729 = vpop.f32.mrf.mxu0
        %v730 = vadd.f32 %v640, %v729
        %v731 = vpop.f32.mrf.mxu0
        %732 = vmatprep.mubr.f32.mxu0 0.0
        %v733 = vand.u32 %v166, 4294901760
        %734 = vmatmul.mubr.f32.gmra.mxu0 %v733
        %v735 = vpop.f32.mrf.mxu0
        %v736 = vadd.f32 %v646, %v735
        %v737 = vpop.f32.mrf.mxu0
        %738 = vmatprep.mubr.f32.mxu0 0.0
        %v739 = vand.u32 %v168, 4294901760
        %740 = vmatmul.mubr.f32.gmra.mxu0 %v739
        %v741 = vpop.f32.mrf.mxu0
        %v742 = vadd.f32 %v652, %v741
        %v743 = vpop.f32.mrf.mxu0
        %744 = vmatprep.mubr.f32.mxu0 0.0
        %v745 = vand.u32 %v170, 4294901760
        %746 = vmatmul.mubr.f32.gmra.mxu0 %v745
        %v747 = vpop.f32.mrf.mxu0
        %v748 = vadd.f32 %v658, %v747
        %v749 = vpop.f32.mrf.mxu0
        %750 = vdwg.mxu0
        %v751 = vmul.f32 %v730, 0.01
        %v752 = vmul.f32 %v736, 0.01
        %v753 = vmul.f32 %v742, 0.01
        %v754 = vmul.f32 %v748, 0.01
        %v755 = vmax.f32 %v730, %v751
        %v756 = vmax.f32 %v736, %v752
        %v757 = vmax.f32 %v742, %v753
        %v758 = vmax.f32 %v748, %v754
        %v759 = vld [vmem:[%s1 + $0x20] sm:$0xff]
        %v760 = vld [vmem:[%s1 + $0x28] sm:$0xff]
        %v761 = vld [vmem:[%s1 + $0x30] sm:$0xff]
        %v762 = vld [vmem:[%s1 + $0x38] sm:$0x1f]
        %764 = vset.pattern.permute.xlu0 32
        %765 = vperm.xlu0 %764, %v759
        %v766 = vpop.permute.xlu0 %765
        %769 = vset.pattern.permute.xlu0 32
        %770 = vperm.xlu0 %769, %v760
        %v771 = vpop.permute.xlu0 %770
        %774 = vset.pattern.permute.xlu0 32
        %775 = vperm.xlu0 %774, %v761
        %v776 = vpop.permute.xlu0 %775
        %779 = vset.pattern.permute.xlu0 32
        %780 = vperm.xlu0 %779, %v762
        %v781 = vpop.permute.xlu0 %780
        %vm783 = vcmask 261120
        %v784 = vsel %vm783, %v759, 0
        %v786 = vsel %vm783, %v760, 0
        %v788 = vsel %vm783, %v761, 0
        %v790 = vsel %vm783, %v762, 0
        %792 = vmatprep.subr.mxu0 0.0
        %793 = vmatpush1.msra.mxu0 0.0
        %794 = vmatprep.subr.mxu0 0.0
        %795 = vmatpush1.msra.mxu0 0.0
        %796 = vmatprep.subr.mxu0 0.0
        %797 = vmatpush1.msra.mxu0 0.0
        %798 = vmatprep.subr.mxu0 0.0
        %799 = vmatpush1.msra.mxu0 0.0
        %800 = vmatprep.subr.mxu0 0.0
        %801 = vmatpush1.msra.mxu0 0.0
        %802 = vmatprep.subr.mxu0 0.0
        %803 = vmatpush1.msra.mxu0 0.0
        %804 = vmatprep.subr.mxu0 0.0
        %805 = vmatpush1.msra.mxu0 0.0
        %806 = vmatprep.subr.mxu0 0.0
        %807 = vmatpush1.msra.mxu0 0.0
        %808 = vmatprep.subr.mxu0 0.0
        %809 = vmatpush1.msra.mxu0 0.0
        %810 = vmatprep.subr.mxu0 0.0
        %811 = vmatpush1.msra.mxu0 0.0
        %812 = vmatprep.subr.mxu0 0.0
        %813 = vmatpush1.msra.mxu0 0.0
        %814 = vmatprep.subr.mxu0 0.0
        %815 = vmatpush1.msra.mxu0 0.0
        %816 = vmatprep.subr.mxu0 0.0
        %v817 = vand.u32 %v758, 4294901760
        %818 = vmatpush1.msra.mxu0 %v817
        %819 = vmatprep.subr.mxu0 0.0
        %v820 = vand.u32 %v757, 4294901760
        %821 = vmatpush1.msra.mxu0 %v820
        %822 = vmatprep.subr.mxu0 0.0
        %v823 = vand.u32 %v756, 4294901760
        %824 = vmatpush1.msra.mxu0 %v823
        %825 = vmatprep.subr.mxu0 0.0
        %v826 = vand.u32 %v755, 4294901760
        %827 = vmatpush1.msra.mxu0 %v826
        %828 = vmatprep.subr.mxu0 0.0
        %829 = vmatpush2.msra.mxu0 0.0
        %830 = vmatprep.subr.mxu0 0.0
        %831 = vmatpush2.msra.mxu0 0.0
        %832 = vmatprep.subr.mxu0 0.0
        %833 = vmatpush2.msra.mxu0 0.0
        %834 = vmatprep.subr.mxu0 0.0
        %835 = vmatpush2.msra.mxu0 0.0
        %836 = vmatprep.subr.mxu0 0.0
        %837 = vmatpush2.msra.mxu0 0.0
        %838 = vmatprep.subr.mxu0 0.0
        %839 = vmatpush2.msra.mxu0 0.0
        %840 = vmatprep.subr.mxu0 0.0
        %841 = vmatpush2.msra.mxu0 0.0
        %842 = vmatprep.subr.mxu0 0.0
        %843 = vmatpush2.msra.mxu0 0.0
        %844 = vmatprep.subr.mxu0 0.0
        %845 = vmatpush2.msra.mxu0 0.0
        %846 = vmatprep.subr.mxu0 0.0
        %847 = vmatpush2.msra.mxu0 0.0
        %848 = vmatprep.subr.mxu0 0.0
        %849 = vmatpush2.msra.mxu0 0.0
        %850 = vmatprep.subr.mxu0 0.0
        %851 = vmatpush2.msra.mxu0 0.0
        %852 = vmatprep.subr.mxu0 0.0
        %853 = vmatpush2.msra.mxu0 0.0
        %854 = vmatprep.subr.mxu0 0.0
        %855 = vmatpush2.msra.mxu0 0.0
        %856 = vmatprep.subr.mxu0 0.0
        %857 = vmatpush2.msra.mxu0 0.0
        %858 = vmatprep.subr.mxu0 0.0
        %859 = vmatpush2.msra.mxu0 0.0
        %860 = vmatprep.mubr.f32.mxu0 0.0
        %v861 = vand.u32 %v784, 4294901760
        %v862 = vsub.f32 %v784, %v861
        %v863 = vand.u32 %v862, 4294901760
        %v864 = vsub.f32 %v862, %v863
        %v865 = vand.u32 %v864, 4294901760
        %866 = vmatmul.mubr.f32.gmra.mxu0 %v865
        %v867 = vpop.f32.mrf.mxu0
        %v868 = vadd.f32 %v766, %v867
        %v869 = vpop.f32.mrf.mxu0
        %870 = vmatprep.mubr.f32.mxu0 0.0
        %v871 = vand.u32 %v786, 4294901760
        %v872 = vsub.f32 %v786, %v871
        %v873 = vand.u32 %v872, 4294901760
        %v874 = vsub.f32 %v872, %v873
        %v875 = vand.u32 %v874, 4294901760
        %876 = vmatmul.mubr.f32.gmra.mxu0 %v875
        %v877 = vpop.f32.mrf.mxu0
        %v878 = vadd.f32 %v771, %v877
        %v879 = vpop.f32.mrf.mxu0
        %880 = vmatprep.mubr.f32.mxu0 0.0
        %v881 = vand.u32 %v788, 4294901760
        %v882 = vsub.f32 %v788, %v881
        %v883 = vand.u32 %v882, 4294901760
        %v884 = vsub.f32 %v882, %v883
        %v885 = vand.u32 %v884, 4294901760
        %886 = vmatmul.mubr.f32.gmra.mxu0 %v885
        %v887 = vpop.f32.mrf.mxu0
        %v888 = vadd.f32 %v776, %v887
        %v889 = vpop.f32.mrf.mxu0
        %890 = vmatprep.mubr.f32.mxu0 0.0
        %v891 = vand.u32 %v790, 4294901760
        %v892 = vsub.f32 %v790, %v891
        %v893 = vand.u32 %v892, 4294901760
        %v894 = vsub.f32 %v892, %v893
        %v895 = vand.u32 %v894, 4294901760
        %896 = vmatmul.mubr.f32.gmra.mxu0 %v895
        %v897 = vpop.f32.mrf.mxu0
        %v898 = vadd.f32 %v781, %v897
        %v899 = vpop.f32.mrf.mxu0
        %900 = vdwg.mxu0
        %901 = vmatprep.subr.mxu0 0.0
        %902 = vmatpush1.msra.mxu0 0.0
        %903 = vmatprep.subr.mxu0 0.0
        %904 = vmatpush1.msra.mxu0 0.0
        %905 = vmatprep.subr.mxu0 0.0
        %906 = vmatpush1.msra.mxu0 0.0
        %907 = vmatprep.subr.mxu0 0.0
        %908 = vmatpush1.msra.mxu0 0.0
        %909 = vmatprep.subr.mxu0 0.0
        %910 = vmatpush1.msra.mxu0 0.0
        %911 = vmatprep.subr.mxu0 0.0
        %912 = vmatpush1.msra.mxu0 0.0
        %913 = vmatprep.subr.mxu0 0.0
        %914 = vmatpush1.msra.mxu0 0.0
        %915 = vmatprep.subr.mxu0 0.0
        %916 = vmatpush1.msra.mxu0 0.0
        %917 = vmatprep.subr.mxu0 0.0
        %918 = vmatpush1.msra.mxu0 0.0
        %919 = vmatprep.subr.mxu0 0.0
        %920 = vmatpush1.msra.mxu0 0.0
        %921 = vmatprep.subr.mxu0 0.0
        %922 = vmatpush1.msra.mxu0 0.0
        %923 = vmatprep.subr.mxu0 0.0
        %924 = vmatpush1.msra.mxu0 0.0
        %925 = vmatprep.subr.mxu0 0.0
        %v926 = vand.u32 %v758, 4294901760
        %v927 = vsub.f32 %v758, %v926
        %v928 = vand.u32 %v927, 4294901760
        %v929 = vsub.f32 %v927, %v928
        %v930 = vand.u32 %v929, 4294901760
        %931 = vmatpush1.msra.mxu0 %v930
        %932 = vmatprep.subr.mxu0 0.0
        %v933 = vand.u32 %v757, 4294901760
        %v934 = vsub.f32 %v757, %v933
        %v935 = vand.u32 %v934, 4294901760
        %v936 = vsub.f32 %v934, %v935
        %v937 = vand.u32 %v936, 4294901760
        %938 = vmatpush1.msra.mxu0 %v937
        %939 = vmatprep.subr.mxu0 0.0
        %v940 = vand.u32 %v756, 4294901760
        %v941 = vsub.f32 %v756, %v940
        %v942 = vand.u32 %v941, 4294901760
        %v943 = vsub.f32 %v941, %v942
        %v944 = vand.u32 %v943, 4294901760
        %945 = vmatpush1.msra.mxu0 %v944
        %946 = vmatprep.subr.mxu0 0.0
        %v947 = vand.u32 %v755, 4294901760
        %v948 = vsub.f32 %v755, %v947
        %v949 = vand.u32 %v948, 4294901760
        %v950 = vsub.f32 %v948, %v949
        %v951 = vand.u32 %v950, 4294901760
        %952 = vmatpush1.msra.mxu0 %v951
        %953 = vmatprep.subr.mxu0 0.0
        %954 = vmatpush2.msra.mxu0 0.0
        %955 = vmatprep.subr.mxu0 0.0
        %956 = vmatpush2.msra.mxu0 0.0
        %957 = vmatprep.subr.mxu0 0.0
        %958 = vmatpush2.msra.mxu0 0.0
        %959 = vmatprep.subr.mxu0 0.0
        %960 = vmatpush2.msra.mxu0 0.0
        %961 = vmatprep.subr.mxu0 0.0
        %962 = vmatpush2.msra.mxu0 0.0
        %963 = vmatprep.subr.mxu0 0.0
        %964 = vmatpush2.msra.mxu0 0.0
        %965 = vmatprep.subr.mxu0 0.0
        %966 = vmatpush2.msra.mxu0 0.0
        %967 = vmatprep.subr.mxu0 0.0
        %968 = vmatpush2.msra.mxu0 0.0
        %969 = vmatprep.subr.mxu0 0.0
        %970 = vmatpush2.msra.mxu0 0.0
        %971 = vmatprep.subr.mxu0 0.0
        %972 = vmatpush2.msra.mxu0 0.0
        %973 = vmatprep.subr.mxu0 0.0
        %974 = vmatpush2.msra.mxu0 0.0
        %975 = vmatprep.subr.mxu0 0.0
        %976 = vmatpush2.msra.mxu0 0.0
        %977 = vmatprep.subr.mxu0 0.0
        %978 = vmatpush2.msra.mxu0 0.0
        %979 = vmatprep.subr.mxu0 0.0
        %980 = vmatpush2.msra.mxu0 0.0
        %981 = vmatprep.subr.mxu0 0.0
        %982 = vmatpush2.msra.mxu0 0.0
        %983 = vmatprep.subr.mxu0 0.0
        %984 = vmatpush2.msra.mxu0 0.0
        %985 = vmatprep.mubr.f32.mxu0 0.0
        %v986 = vand.u32 %v784, 4294901760
        %987 = vmatmul.mubr.f32.gmra.mxu0 %v986
        %v988 = vpop.f32.mrf.mxu0
        %v989 = vadd.f32 %v868, %v988
        %v990 = vpop.f32.mrf.mxu0
        %991 = vmatprep.mubr.f32.mxu0 0.0
        %v992 = vand.u32 %v786, 4294901760
        %993 = vmatmul.mubr.f32.gmra.mxu0 %v992
        %v994 = vpop.f32.mrf.mxu0
        %v995 = vadd.f32 %v878, %v994
        %v996 = vpop.f32.mrf.mxu0
        %997 = vmatprep.mubr.f32.mxu0 0.0
        %v998 = vand.u32 %v788, 4294901760
        %999 = vmatmul.mubr.f32.gmra.mxu0 %v998
        %v1000 = vpop.f32.mrf.mxu0
        %v1001 = vadd.f32 %v888, %v1000
        %v1002 = vpop.f32.mrf.mxu0
        %1003 = vmatprep.mubr.f32.mxu0 0.0
        %v1004 = vand.u32 %v790, 4294901760
        %1005 = vmatmul.mubr.f32.gmra.mxu0 %v1004
        %v1006 = vpop.f32.mrf.mxu0
        %v1007 = vadd.f32 %v898, %v1006
        %v1008 = vpop.f32.mrf.mxu0
        %1009 = vdwg.mxu0
        %1010 = vmatprep.subr.mxu0 0.0
        %1011 = vmatpush1.msra.mxu0 0.0
        %1012 = vmatprep.subr.mxu0 0.0
        %1013 = vmatpush1.msra.mxu0 0.0
        %1014 = vmatprep.subr.mxu0 0.0
        %1015 = vmatpush1.msra.mxu0 0.0
        %1016 = vmatprep.subr.mxu0 0.0
        %1017 = vmatpush1.msra.mxu0 0.0
        %1018 = vmatprep.subr.mxu0 0.0
        %1019 = vmatpush1.msra.mxu0 0.0
        %1020 = vmatprep.subr.mxu0 0.0
        %1021 = vmatpush1.msra.mxu0 0.0
        %1022 = vmatprep.subr.mxu0 0.0
        %1023 = vmatpush1.msra.mxu0 0.0
        %1024 = vmatprep.subr.mxu0 0.0
        %1025 = vmatpush1.msra.mxu0 0.0
        %1026 = vmatprep.subr.mxu0 0.0
        %1027 = vmatpush1.msra.mxu0 0.0
        %1028 = vmatprep.subr.mxu0 0.0
        %1029 = vmatpush1.msra.mxu0 0.0
        %1030 = vmatprep.subr.mxu0 0.0
        %1031 = vmatpush1.msra.mxu0 0.0
        %1032 = vmatprep.subr.mxu0 0.0
        %1033 = vmatpush1.msra.mxu0 0.0
        %1034 = vmatprep.subr.mxu0 0.0
        %v1035 = vand.u32 %v758, 4294901760
        %v1036 = vsub.f32 %v758, %v1035
        %1037 = vmatpush1.msra.mxu0 %v1036
        %1038 = vmatprep.subr.mxu0 0.0
        %v1039 = vand.u32 %v757, 4294901760
        %v1040 = vsub.f32 %v757, %v1039
        %1041 = vmatpush1.msra.mxu0 %v1040
        %1042 = vmatprep.subr.mxu0 0.0
        %v1043 = vand.u32 %v756, 4294901760
        %v1044 = vsub.f32 %v756, %v1043
        %1045 = vmatpush1.msra.mxu0 %v1044
        %1046 = vmatprep.subr.mxu0 0.0
        %v1047 = vand.u32 %v755, 4294901760
        %v1048 = vsub.f32 %v755, %v1047
        %1049 = vmatpush1.msra.mxu0 %v1048
        %1050 = vmatprep.subr.mxu0 0.0
        %1051 = vmatpush2.msra.mxu0 0.0
        %1052 = vmatprep.subr.mxu0 0.0
        %1053 = vmatpush2.msra.mxu0 0.0
        %1054 = vmatprep.subr.mxu0 0.0
        %1055 = vmatpush2.msra.mxu0 0.0
        %1056 = vmatprep.subr.mxu0 0.0
        %1057 = vmatpush2.msra.mxu0 0.0
        %1058 = vmatprep.subr.mxu0 0.0
        %1059 = vmatpush2.msra.mxu0 0.0
        %1060 = vmatprep.subr.mxu0 0.0
        %1061 = vmatpush2.msra.mxu0 0.0
        %1062 = vmatprep.subr.mxu0 0.0
        %1063 = vmatpush2.msra.mxu0 0.0
        %1064 = vmatprep.subr.mxu0 0.0
        %1065 = vmatpush2.msra.mxu0 0.0
        %1066 = vmatprep.subr.mxu0 0.0
        %1067 = vmatpush2.msra.mxu0 0.0
        %1068 = vmatprep.subr.mxu0 0.0
        %1069 = vmatpush2.msra.mxu0 0.0
        %1070 = vmatprep.subr.mxu0 0.0
        %1071 = vmatpush2.msra.mxu0 0.0
        %1072 = vmatprep.subr.mxu0 0.0
        %1073 = vmatpush2.msra.mxu0 0.0
        %1074 = vmatprep.subr.mxu0 0.0
        %1075 = vmatpush2.msra.mxu0 0.0
        %1076 = vmatprep.subr.mxu0 0.0
        %1077 = vmatpush2.msra.mxu0 0.0
        %1078 = vmatprep.subr.mxu0 0.0
        %1079 = vmatpush2.msra.mxu0 0.0
        %1080 = vmatprep.subr.mxu0 0.0
        %1081 = vmatpush2.msra.mxu0 0.0
        %1082 = vmatprep.mubr.f32.mxu0 0.0
        %v1083 = vand.u32 %v784, 4294901760
        %v1084 = vsub.f32 %v784, %v1083
        %1085 = vmatmul.mubr.f32.gmra.mxu0 %v1084
        %v1086 = vpop.f32.mrf.mxu0
        %v1087 = vadd.f32 %v989, %v1086
        %v1088 = vpop.f32.mrf.mxu0
        %1089 = vmatprep.mubr.f32.mxu0 0.0
        %v1090 = vand.u32 %v786, 4294901760
        %v1091 = vsub.f32 %v786, %v1090
        %1092 = vmatmul.mubr.f32.gmra.mxu0 %v1091
        %v1093 = vpop.f32.mrf.mxu0
        %v1094 = vadd.f32 %v995, %v1093
        %v1095 = vpop.f32.mrf.mxu0
        %1096 = vmatprep.mubr.f32.mxu0 0.0
        %v1097 = vand.u32 %v788, 4294901760
        %v1098 = vsub.f32 %v788, %v1097
        %1099 = vmatmul.mubr.f32.gmra.mxu0 %v1098
        %v1100 = vpop.f32.mrf.mxu0
        %v1101 = vadd.f32 %v1001, %v1100
        %v1102 = vpop.f32.mrf.mxu0
        %1103 = vmatprep.mubr.f32.mxu0 0.0
        %v1104 = vand.u32 %v790, 4294901760
        %v1105 = vsub.f32 %v790, %v1104
        %1106 = vmatmul.mubr.f32.gmra.mxu0 %v1105
        %v1107 = vpop.f32.mrf.mxu0
        %v1108 = vadd.f32 %v1007, %v1107
        %v1109 = vpop.f32.mrf.mxu0
        %1110 = vdwg.mxu0
        %1111 = vmatprep.subr.mxu0 0.0
        %1112 = vmatpush1.msra.mxu0 0.0
        %1113 = vmatprep.subr.mxu0 0.0
        %1114 = vmatpush1.msra.mxu0 0.0
        %1115 = vmatprep.subr.mxu0 0.0
        %1116 = vmatpush1.msra.mxu0 0.0
        %1117 = vmatprep.subr.mxu0 0.0
        %1118 = vmatpush1.msra.mxu0 0.0
        %1119 = vmatprep.subr.mxu0 0.0
        %1120 = vmatpush1.msra.mxu0 0.0
        %1121 = vmatprep.subr.mxu0 0.0
        %1122 = vmatpush1.msra.mxu0 0.0
        %1123 = vmatprep.subr.mxu0 0.0
        %1124 = vmatpush1.msra.mxu0 0.0
        %1125 = vmatprep.subr.mxu0 0.0
        %1126 = vmatpush1.msra.mxu0 0.0
        %1127 = vmatprep.subr.mxu0 0.0
        %1128 = vmatpush1.msra.mxu0 0.0
        %1129 = vmatprep.subr.mxu0 0.0
        %1130 = vmatpush1.msra.mxu0 0.0
        %1131 = vmatprep.subr.mxu0 0.0
        %1132 = vmatpush1.msra.mxu0 0.0
        %1133 = vmatprep.subr.mxu0 0.0
        %1134 = vmatpush1.msra.mxu0 0.0
        %1135 = vmatprep.subr.mxu0 0.0
        %v1136 = vand.u32 %v758, 4294901760
        %1137 = vmatpush1.msra.mxu0 %v1136
        %1138 = vmatprep.subr.mxu0 0.0
        %v1139 = vand.u32 %v757, 4294901760
        %1140 = vmatpush1.msra.mxu0 %v1139
        %1141 = vmatprep.subr.mxu0 0.0
        %v1142 = vand.u32 %v756, 4294901760
        %1143 = vmatpush1.msra.mxu0 %v1142
        %1144 = vmatprep.subr.mxu0 0.0
        %v1145 = vand.u32 %v755, 4294901760
        %1146 = vmatpush1.msra.mxu0 %v1145
        %1147 = vmatprep.subr.mxu0 0.0
        %1148 = vmatpush2.msra.mxu0 0.0
        %1149 = vmatprep.subr.mxu0 0.0
        %1150 = vmatpush2.msra.mxu0 0.0
        %1151 = vmatprep.subr.mxu0 0.0
        %1152 = vmatpush2.msra.mxu0 0.0
        %1153 = vmatprep.subr.mxu0 0.0
        %1154 = vmatpush2.msra.mxu0 0.0
        %1155 = vmatprep.subr.mxu0 0.0
        %1156 = vmatpush2.msra.mxu0 0.0
        %1157 = vmatprep.subr.mxu0 0.0
        %1158 = vmatpush2.msra.mxu0 0.0
        %1159 = vmatprep.subr.mxu0 0.0
        %1160 = vmatpush2.msra.mxu0 0.0
        %1161 = vmatprep.subr.mxu0 0.0
        %1162 = vmatpush2.msra.mxu0 0.0
        %1163 = vmatprep.subr.mxu0 0.0
        %1164 = vmatpush2.msra.mxu0 0.0
        %1165 = vmatprep.subr.mxu0 0.0
        %1166 = vmatpush2.msra.mxu0 0.0
        %1167 = vmatprep.subr.mxu0 0.0
        %1168 = vmatpush2.msra.mxu0 0.0
        %1169 = vmatprep.subr.mxu0 0.0
        %1170 = vmatpush2.msra.mxu0 0.0
        %1171 = vmatprep.subr.mxu0 0.0
        %1172 = vmatpush2.msra.mxu0 0.0
        %1173 = vmatprep.subr.mxu0 0.0
        %1174 = vmatpush2.msra.mxu0 0.0
        %1175 = vmatprep.subr.mxu0 0.0
        %1176 = vmatpush2.msra.mxu0 0.0
        %1177 = vmatprep.subr.mxu0 0.0
        %1178 = vmatpush2.msra.mxu0 0.0
        %1179 = vmatprep.mubr.f32.mxu0 0.0
        %v1180 = vand.u32 %v784, 4294901760
        %v1181 = vsub.f32 %v784, %v1180
        %v1182 = vand.u32 %v1181, 4294901760
        %1183 = vmatmul.mubr.f32.gmra.mxu0 %v1182
        %v1184 = vpop.f32.mrf.mxu0
        %v1185 = vadd.f32 %v1087, %v1184
        %v1186 = vpop.f32.mrf.mxu0
        %1187 = vmatprep.mubr.f32.mxu0 0.0
        %v1188 = vand.u32 %v786, 4294901760
        %v1189 = vsub.f32 %v786, %v1188
        %v1190 = vand.u32 %v1189, 4294901760
        %1191 = vmatmul.mubr.f32.gmra.mxu0 %v1190
        %v1192 = vpop.f32.mrf.mxu0
        %v1193 = vadd.f32 %v1094, %v1192
        %v1194 = vpop.f32.mrf.mxu0
        %1195 = vmatprep.mubr.f32.mxu0 0.0
        %v1196 = vand.u32 %v788, 4294901760
        %v1197 = vsub.f32 %v788, %v1196
        %v1198 = vand.u32 %v1197, 4294901760
        %1199 = vmatmul.mubr.f32.gmra.mxu0 %v1198
        %v1200 = vpop.f32.mrf.mxu0
        %v1201 = vadd.f32 %v1101, %v1200
        %v1202 = vpop.f32.mrf.mxu0
        %1203 = vmatprep.mubr.f32.mxu0 0.0
        %v1204 = vand.u32 %v790, 4294901760
        %v1205 = vsub.f32 %v790, %v1204
        %v1206 = vand.u32 %v1205, 4294901760
        %1207 = vmatmul.mubr.f32.gmra.mxu0 %v1206
        %v1208 = vpop.f32.mrf.mxu0
        %v1209 = vadd.f32 %v1108, %v1208
        %v1210 = vpop.f32.mrf.mxu0
        %1211 = vdwg.mxu0
        %1212 = vmatprep.subr.mxu0 0.0
        %1213 = vmatpush1.msra.mxu0 0.0
        %1214 = vmatprep.subr.mxu0 0.0
        %1215 = vmatpush1.msra.mxu0 0.0
        %1216 = vmatprep.subr.mxu0 0.0
        %1217 = vmatpush1.msra.mxu0 0.0
        %1218 = vmatprep.subr.mxu0 0.0
        %1219 = vmatpush1.msra.mxu0 0.0
        %1220 = vmatprep.subr.mxu0 0.0
        %1221 = vmatpush1.msra.mxu0 0.0
        %1222 = vmatprep.subr.mxu0 0.0
        %1223 = vmatpush1.msra.mxu0 0.0
        %1224 = vmatprep.subr.mxu0 0.0
        %1225 = vmatpush1.msra.mxu0 0.0
        %1226 = vmatprep.subr.mxu0 0.0
        %1227 = vmatpush1.msra.mxu0 0.0
        %1228 = vmatprep.subr.mxu0 0.0
        %1229 = vmatpush1.msra.mxu0 0.0
        %1230 = vmatprep.subr.mxu0 0.0
        %1231 = vmatpush1.msra.mxu0 0.0
        %1232 = vmatprep.subr.mxu0 0.0
        %1233 = vmatpush1.msra.mxu0 0.0
        %1234 = vmatprep.subr.mxu0 0.0
        %1235 = vmatpush1.msra.mxu0 0.0
        %1236 = vmatprep.subr.mxu0 0.0
        %v1237 = vand.u32 %v758, 4294901760
        %v1238 = vsub.f32 %v758, %v1237
        %v1239 = vand.u32 %v1238, 4294901760
        %1240 = vmatpush1.msra.mxu0 %v1239
        %1241 = vmatprep.subr.mxu0 0.0
        %v1242 = vand.u32 %v757, 4294901760
        %v1243 = vsub.f32 %v757, %v1242
        %v1244 = vand.u32 %v1243, 4294901760
        %1245 = vmatpush1.msra.mxu0 %v1244
        %1246 = vmatprep.subr.mxu0 0.0
        %v1247 = vand.u32 %v756, 4294901760
        %v1248 = vsub.f32 %v756, %v1247
        %v1249 = vand.u32 %v1248, 4294901760
        %1250 = vmatpush1.msra.mxu0 %v1249
        %1251 = vmatprep.subr.mxu0 0.0
        %v1252 = vand.u32 %v755, 4294901760
        %v1253 = vsub.f32 %v755, %v1252
        %v1254 = vand.u32 %v1253, 4294901760
        %1255 = vmatpush1.msra.mxu0 %v1254
        %1256 = vmatprep.subr.mxu0 0.0
        %1257 = vmatpush2.msra.mxu0 0.0
        %1258 = vmatprep.subr.mxu0 0.0
        %1259 = vmatpush2.msra.mxu0 0.0
        %1260 = vmatprep.subr.mxu0 0.0
        %1261 = vmatpush2.msra.mxu0 0.0
        %1262 = vmatprep.subr.mxu0 0.0
        %1263 = vmatpush2.msra.mxu0 0.0
        %1264 = vmatprep.subr.mxu0 0.0
        %1265 = vmatpush2.msra.mxu0 0.0
        %1266 = vmatprep.subr.mxu0 0.0
        %1267 = vmatpush2.msra.mxu0 0.0
        %1268 = vmatprep.subr.mxu0 0.0
        %1269 = vmatpush2.msra.mxu0 0.0
        %1270 = vmatprep.subr.mxu0 0.0
        %1271 = vmatpush2.msra.mxu0 0.0
        %1272 = vmatprep.subr.mxu0 0.0
        %1273 = vmatpush2.msra.mxu0 0.0
        %1274 = vmatprep.subr.mxu0 0.0
        %1275 = vmatpush2.msra.mxu0 0.0
        %1276 = vmatprep.subr.mxu0 0.0
        %1277 = vmatpush2.msra.mxu0 0.0
        %1278 = vmatprep.subr.mxu0 0.0
        %1279 = vmatpush2.msra.mxu0 0.0
        %1280 = vmatprep.subr.mxu0 0.0
        %1281 = vmatpush2.msra.mxu0 0.0
        %1282 = vmatprep.subr.mxu0 0.0
        %1283 = vmatpush2.msra.mxu0 0.0
        %1284 = vmatprep.subr.mxu0 0.0
        %1285 = vmatpush2.msra.mxu0 0.0
        %1286 = vmatprep.subr.mxu0 0.0
        %1287 = vmatpush2.msra.mxu0 0.0
        %1288 = vmatprep.mubr.f32.mxu0 0.0
        %v1289 = vand.u32 %v784, 4294901760
        %1290 = vmatmul.mubr.f32.gmra.mxu0 %v1289
        %v1291 = vpop.f32.mrf.mxu0
        %v1292 = vadd.f32 %v1185, %v1291
        %v1293 = vpop.f32.mrf.mxu0
        %1294 = vmatprep.mubr.f32.mxu0 0.0
        %v1295 = vand.u32 %v786, 4294901760
        %1296 = vmatmul.mubr.f32.gmra.mxu0 %v1295
        %v1297 = vpop.f32.mrf.mxu0
        %v1298 = vadd.f32 %v1193, %v1297
        %v1299 = vpop.f32.mrf.mxu0
        %1300 = vmatprep.mubr.f32.mxu0 0.0
        %v1301 = vand.u32 %v788, 4294901760
        %1302 = vmatmul.mubr.f32.gmra.mxu0 %v1301
        %v1303 = vpop.f32.mrf.mxu0
        %v1304 = vadd.f32 %v1201, %v1303
        %v1305 = vpop.f32.mrf.mxu0
        %1306 = vmatprep.mubr.f32.mxu0 0.0
        %v1307 = vand.u32 %v790, 4294901760
        %1308 = vmatmul.mubr.f32.gmra.mxu0 %v1307
        %v1309 = vpop.f32.mrf.mxu0
        %v1310 = vadd.f32 %v1209, %v1309
        %v1311 = vpop.f32.mrf.mxu0
        %1312 = vdwg.mxu0
        %1313 = vmatprep.subr.mxu0 0.0
        %1314 = vmatpush1.msra.mxu0 0.0
        %1315 = vmatprep.subr.mxu0 0.0
        %1316 = vmatpush1.msra.mxu0 0.0
        %1317 = vmatprep.subr.mxu0 0.0
        %1318 = vmatpush1.msra.mxu0 0.0
        %1319 = vmatprep.subr.mxu0 0.0
        %1320 = vmatpush1.msra.mxu0 0.0
        %1321 = vmatprep.subr.mxu0 0.0
        %1322 = vmatpush1.msra.mxu0 0.0
        %1323 = vmatprep.subr.mxu0 0.0
        %1324 = vmatpush1.msra.mxu0 0.0
        %1325 = vmatprep.subr.mxu0 0.0
        %1326 = vmatpush1.msra.mxu0 0.0
        %1327 = vmatprep.subr.mxu0 0.0
        %1328 = vmatpush1.msra.mxu0 0.0
        %1329 = vmatprep.subr.mxu0 0.0
        %1330 = vmatpush1.msra.mxu0 0.0
        %1331 = vmatprep.subr.mxu0 0.0
        %1332 = vmatpush1.msra.mxu0 0.0
        %1333 = vmatprep.subr.mxu0 0.0
        %1334 = vmatpush1.msra.mxu0 0.0
        %1335 = vmatprep.subr.mxu0 0.0
        %1336 = vmatpush1.msra.mxu0 0.0
        %1337 = vmatprep.subr.mxu0 0.0
        %v1338 = vand.u32 %v758, 4294901760
        %1339 = vmatpush1.msra.mxu0 %v1338
        %1340 = vmatprep.subr.mxu0 0.0
        %v1341 = vand.u32 %v757, 4294901760
        %1342 = vmatpush1.msra.mxu0 %v1341
        %1343 = vmatprep.subr.mxu0 0.0
        %v1344 = vand.u32 %v756, 4294901760
        %1345 = vmatpush1.msra.mxu0 %v1344
        %1346 = vmatprep.subr.mxu0 0.0
        %v1347 = vand.u32 %v755, 4294901760
        %1348 = vmatpush1.msra.mxu0 %v1347
        %1349 = vmatprep.subr.mxu0 0.0
        %1350 = vmatpush2.msra.mxu0 0.0
        %1351 = vmatprep.subr.mxu0 0.0
        %1352 = vmatpush2.msra.mxu0 0.0
        %1353 = vmatprep.subr.mxu0 0.0
        %1354 = vmatpush2.msra.mxu0 0.0
        %1355 = vmatprep.subr.mxu0 0.0
        %1356 = vmatpush2.msra.mxu0 0.0
        %1357 = vmatprep.subr.mxu0 0.0
        %1358 = vmatpush2.msra.mxu0 0.0
        %1359 = vmatprep.subr.mxu0 0.0
        %1360 = vmatpush2.msra.mxu0 0.0
        %1361 = vmatprep.subr.mxu0 0.0
        %1362 = vmatpush2.msra.mxu0 0.0
        %1363 = vmatprep.subr.mxu0 0.0
        %1364 = vmatpush2.msra.mxu0 0.0
        %1365 = vmatprep.subr.mxu0 0.0
        %1366 = vmatpush2.msra.mxu0 0.0
        %1367 = vmatprep.subr.mxu0 0.0
        %1368 = vmatpush2.msra.mxu0 0.0
        %1369 = vmatprep.subr.mxu0 0.0
        %1370 = vmatpush2.msra.mxu0 0.0
        %1371 = vmatprep.subr.mxu0 0.0
        %1372 = vmatpush2.msra.mxu0 0.0
        %1373 = vmatprep.subr.mxu0 0.0
        %1374 = vmatpush2.msra.mxu0 0.0
        %1375 = vmatprep.subr.mxu0 0.0
        %1376 = vmatpush2.msra.mxu0 0.0
        %1377 = vmatprep.subr.mxu0 0.0
        %1378 = vmatpush2.msra.mxu0 0.0
        %1379 = vmatprep.subr.mxu0 0.0
        %1380 = vmatpush2.msra.mxu0 0.0
        %1381 = vmatprep.mubr.f32.mxu0 0.0
        %v1382 = vand.u32 %v784, 4294901760
        %1383 = vmatmul.mubr.f32.gmra.mxu0 %v1382
        %v1384 = vpop.f32.mrf.mxu0
        %v1385 = vadd.f32 %v1292, %v1384
        %v1386 = vpop.f32.mrf.mxu0
        %1387 = vmatprep.mubr.f32.mxu0 0.0
        %v1388 = vand.u32 %v786, 4294901760
        %1389 = vmatmul.mubr.f32.gmra.mxu0 %v1388
        %v1390 = vpop.f32.mrf.mxu0
        %v1391 = vadd.f32 %v1298, %v1390
        %v1392 = vpop.f32.mrf.mxu0
        %1393 = vmatprep.mubr.f32.mxu0 0.0
        %v1394 = vand.u32 %v788, 4294901760
        %1395 = vmatmul.mubr.f32.gmra.mxu0 %v1394
        %v1396 = vpop.f32.mrf.mxu0
        %v1397 = vadd.f32 %v1304, %v1396
        %v1398 = vpop.f32.mrf.mxu0
        %1399 = vmatprep.mubr.f32.mxu0 0.0
        %v1400 = vand.u32 %v790, 4294901760
        %1401 = vmatmul.mubr.f32.gmra.mxu0 %v1400
        %v1402 = vpop.f32.mrf.mxu0
        %v1403 = vadd.f32 %v1310, %v1402
        %v1404 = vpop.f32.mrf.mxu0
        %1405 = vdwg.mxu0
        %v1406 = vmul.f32 %v1385, 0.01
        %v1407 = vmul.f32 %v1391, 0.01
        %v1408 = vmul.f32 %v1397, 0.01
        %v1409 = vmul.f32 %v1403, 0.01
        %v1410 = vmax.f32 %v1385, %v1406
        %v1411 = vmax.f32 %v1391, %v1407
        %v1412 = vmax.f32 %v1397, %v1408
        %v1413 = vmax.f32 %v1403, %v1409
        %v1414 = vld [vmem:[%s1 + $0x40] sm:$0xff]
        %v1415 = vld [vmem:[%s1 + $0x48] sm:$0xff]
        %v1416 = vld [vmem:[%s1 + $0x50] sm:$0xff]
        %v1417 = vld [vmem:[%s1 + $0x58] sm:$0xff]
        %v1418 = vld [vmem:[%s1 + $0x60] sm:$0xff]
        %v1419 = vld [vmem:[%s1 + $0x68] sm:$0xff]
        %v1420 = vld [vmem:[%s1 + $0x70] sm:$0xff]
        %v1421 = vld [vmem:[%s1 + $0x78] sm:$0xff]
        %v1423 = vsel %vm163, %v1418, 0
        %v1426 = vsel %vm163, %v1419, 0
        %v1429 = vsel %vm163, %v1420, 0
        %v1432 = vsel %vm163, %v1421, 0
        %1434 = vmatprep.subr.mxu0 0.0
        %1435 = vmatpush1.msra.mxu0 0.0
        %1436 = vmatprep.subr.mxu0 0.0
        %1437 = vmatpush1.msra.mxu0 0.0
        %1438 = vmatprep.subr.mxu0 0.0
        %1439 = vmatpush1.msra.mxu0 0.0
        %1440 = vmatprep.subr.mxu0 0.0
        %1441 = vmatpush1.msra.mxu0 0.0
        %1442 = vmatprep.subr.mxu0 0.0
        %1443 = vmatpush1.msra.mxu0 0.0
        %1444 = vmatprep.subr.mxu0 0.0
        %1445 = vmatpush1.msra.mxu0 0.0
        %1446 = vmatprep.subr.mxu0 0.0
        %1447 = vmatpush1.msra.mxu0 0.0
        %1448 = vmatprep.subr.mxu0 0.0
        %1449 = vmatpush1.msra.mxu0 0.0
        %1450 = vmatprep.subr.mxu0 0.0
        %1451 = vmatpush1.msra.mxu0 0.0
        %1452 = vmatprep.subr.mxu0 0.0
        %1453 = vmatpush1.msra.mxu0 0.0
        %1454 = vmatprep.subr.mxu0 0.0
        %1455 = vmatpush1.msra.mxu0 0.0
        %1456 = vmatprep.subr.mxu0 0.0
        %1457 = vmatpush1.msra.mxu0 0.0
        %1458 = vmatprep.subr.mxu0 0.0
        %1459 = vmatpush1.msra.mxu0 0.0
        %1460 = vmatprep.subr.mxu0 0.0
        %1461 = vmatpush1.msra.mxu0 0.0
        %1462 = vmatprep.subr.mxu0 0.0
        %1463 = vmatpush1.msra.mxu0 0.0
        %1464 = vmatprep.subr.mxu0 0.0
        %v1465 = vand.u32 %v174, 4294901760
        %1466 = vmatpush1.msra.mxu0 %v1465
        %1467 = vmatprep.subr.mxu0 0.0
        %1468 = vmatpush2.msra.mxu0 0.0
        %1469 = vmatprep.subr.mxu0 0.0
        %1470 = vmatpush2.msra.mxu0 0.0
        %1471 = vmatprep.subr.mxu0 0.0
        %1472 = vmatpush2.msra.mxu0 0.0
        %1473 = vmatprep.subr.mxu0 0.0
        %1474 = vmatpush2.msra.mxu0 0.0
        %1475 = vmatprep.subr.mxu0 0.0
        %1476 = vmatpush2.msra.mxu0 0.0
        %1477 = vmatprep.subr.mxu0 0.0
        %1478 = vmatpush2.msra.mxu0 0.0
        %1479 = vmatprep.subr.mxu0 0.0
        %1480 = vmatpush2.msra.mxu0 0.0
        %1481 = vmatprep.subr.mxu0 0.0
        %1482 = vmatpush2.msra.mxu0 0.0
        %1483 = vmatprep.subr.mxu0 0.0
        %1484 = vmatpush2.msra.mxu0 0.0
        %1485 = vmatprep.subr.mxu0 0.0
        %1486 = vmatpush2.msra.mxu0 0.0
        %1487 = vmatprep.subr.mxu0 0.0
        %1488 = vmatpush2.msra.mxu0 0.0
        %1489 = vmatprep.subr.mxu0 0.0
        %1490 = vmatpush2.msra.mxu0 0.0
        %1491 = vmatprep.subr.mxu0 0.0
        %1492 = vmatpush2.msra.mxu0 0.0
        %1493 = vmatprep.subr.mxu0 0.0
        %1494 = vmatpush2.msra.mxu0 0.0
        %1495 = vmatprep.subr.mxu0 0.0
        %1496 = vmatpush2.msra.mxu0 0.0
        %1497 = vmatprep.subr.mxu0 0.0
        %1498 = vmatpush2.msra.mxu0 0.0
        %1499 = vmatprep.mubr.f32.mxu0 0.0
        %v1500 = vand.u32 %v1423, 4294901760
        %v1501 = vsub.f32 %v1423, %v1500
        %v1502 = vand.u32 %v1501, 4294901760
        %v1503 = vsub.f32 %v1501, %v1502
        %v1504 = vand.u32 %v1503, 4294901760
        %1505 = vmatmul.mubr.f32.gmra.mxu0 %v1504
        %v1506 = vpop.f32.mrf.mxu0
        %v1507 = vadd.f32 0.0, %v1506
        %v1508 = vpop.f32.mrf.mxu0
        %1509 = vmatprep.mubr.f32.mxu0 0.0
        %v1510 = vand.u32 %v1426, 4294901760
        %v1511 = vsub.f32 %v1426, %v1510
        %v1512 = vand.u32 %v1511, 4294901760
        %v1513 = vsub.f32 %v1511, %v1512
        %v1514 = vand.u32 %v1513, 4294901760
        %1515 = vmatmul.mubr.f32.gmra.mxu0 %v1514
        %v1516 = vpop.f32.mrf.mxu0
        %v1517 = vadd.f32 0.0, %v1516
        %v1518 = vpop.f32.mrf.mxu0
        %1519 = vmatprep.mubr.f32.mxu0 0.0
        %v1520 = vand.u32 %v1429, 4294901760
        %v1521 = vsub.f32 %v1429, %v1520
        %v1522 = vand.u32 %v1521, 4294901760
        %v1523 = vsub.f32 %v1521, %v1522
        %v1524 = vand.u32 %v1523, 4294901760
        %1525 = vmatmul.mubr.f32.gmra.mxu0 %v1524
        %v1526 = vpop.f32.mrf.mxu0
        %v1527 = vadd.f32 0.0, %v1526
        %v1528 = vpop.f32.mrf.mxu0
        %1529 = vmatprep.mubr.f32.mxu0 0.0
        %v1530 = vand.u32 %v1432, 4294901760
        %v1531 = vsub.f32 %v1432, %v1530
        %v1532 = vand.u32 %v1531, 4294901760
        %v1533 = vsub.f32 %v1531, %v1532
        %v1534 = vand.u32 %v1533, 4294901760
        %1535 = vmatmul.mubr.f32.gmra.mxu0 %v1534
        %v1536 = vpop.f32.mrf.mxu0
        %v1537 = vadd.f32 0.0, %v1536
        %v1538 = vpop.f32.mrf.mxu0
        %1539 = vdwg.mxu0
        %1540 = vmatprep.subr.mxu0 0.0
        %1541 = vmatpush1.msra.mxu0 0.0
        %1542 = vmatprep.subr.mxu0 0.0
        %1543 = vmatpush1.msra.mxu0 0.0
        %1544 = vmatprep.subr.mxu0 0.0
        %1545 = vmatpush1.msra.mxu0 0.0
        %1546 = vmatprep.subr.mxu0 0.0
        %1547 = vmatpush1.msra.mxu0 0.0
        %1548 = vmatprep.subr.mxu0 0.0
        %1549 = vmatpush1.msra.mxu0 0.0
        %1550 = vmatprep.subr.mxu0 0.0
        %1551 = vmatpush1.msra.mxu0 0.0
        %1552 = vmatprep.subr.mxu0 0.0
        %1553 = vmatpush1.msra.mxu0 0.0
        %1554 = vmatprep.subr.mxu0 0.0
        %1555 = vmatpush1.msra.mxu0 0.0
        %1556 = vmatprep.subr.mxu0 0.0
        %1557 = vmatpush1.msra.mxu0 0.0
        %1558 = vmatprep.subr.mxu0 0.0
        %1559 = vmatpush1.msra.mxu0 0.0
        %1560 = vmatprep.subr.mxu0 0.0
        %1561 = vmatpush1.msra.mxu0 0.0
        %1562 = vmatprep.subr.mxu0 0.0
        %1563 = vmatpush1.msra.mxu0 0.0
        %1564 = vmatprep.subr.mxu0 0.0
        %1565 = vmatpush1.msra.mxu0 0.0
        %1566 = vmatprep.subr.mxu0 0.0
        %1567 = vmatpush1.msra.mxu0 0.0
        %1568 = vmatprep.subr.mxu0 0.0
        %1569 = vmatpush1.msra.mxu0 0.0
        %1570 = vmatprep.subr.mxu0 0.0
        %v1571 = vand.u32 %v174, 4294901760
        %v1572 = vsub.f32 %v174, %v1571
        %v1573 = vand.u32 %v1572, 4294901760
        %v1574 = vsub.f32 %v1572, %v1573
        %v1575 = vand.u32 %v1574, 4294901760
        %1576 = vmatpush1.msra.mxu0 %v1575
        %1577 = vmatprep.subr.mxu0 0.0
        %1578 = vmatpush2.msra.mxu0 0.0
        %1579 = vmatprep.subr.mxu0 0.0
        %1580 = vmatpush2.msra.mxu0 0.0
        %1581 = vmatprep.subr.mxu0 0.0
        %1582 = vmatpush2.msra.mxu0 0.0
        %1583 = vmatprep.subr.mxu0 0.0
        %1584 = vmatpush2.msra.mxu0 0.0
        %1585 = vmatprep.subr.mxu0 0.0
        %1586 = vmatpush2.msra.mxu0 0.0
        %1587 = vmatprep.subr.mxu0 0.0
        %1588 = vmatpush2.msra.mxu0 0.0
        %1589 = vmatprep.subr.mxu0 0.0
        %1590 = vmatpush2.msra.mxu0 0.0
        %1591 = vmatprep.subr.mxu0 0.0
        %1592 = vmatpush2.msra.mxu0 0.0
        %1593 = vmatprep.subr.mxu0 0.0
        %1594 = vmatpush2.msra.mxu0 0.0
        %1595 = vmatprep.subr.mxu0 0.0
        %1596 = vmatpush2.msra.mxu0 0.0
        %1597 = vmatprep.subr.mxu0 0.0
        %1598 = vmatpush2.msra.mxu0 0.0
        %1599 = vmatprep.subr.mxu0 0.0
        %1600 = vmatpush2.msra.mxu0 0.0
        %1601 = vmatprep.subr.mxu0 0.0
        %1602 = vmatpush2.msra.mxu0 0.0
        %1603 = vmatprep.subr.mxu0 0.0
        %1604 = vmatpush2.msra.mxu0 0.0
        %1605 = vmatprep.subr.mxu0 0.0
        %1606 = vmatpush2.msra.mxu0 0.0
        %1607 = vmatprep.subr.mxu0 0.0
        %1608 = vmatpush2.msra.mxu0 0.0
        %1609 = vmatprep.mubr.f32.mxu0 0.0
        %v1610 = vand.u32 %v1423, 4294901760
        %1611 = vmatmul.mubr.f32.gmra.mxu0 %v1610
        %v1612 = vpop.f32.mrf.mxu0
        %v1613 = vadd.f32 %v1507, %v1612
        %v1614 = vpop.f32.mrf.mxu0
        %1615 = vmatprep.mubr.f32.mxu0 0.0
        %v1616 = vand.u32 %v1426, 4294901760
        %1617 = vmatmul.mubr.f32.gmra.mxu0 %v1616
        %v1618 = vpop.f32.mrf.mxu0
        %v1619 = vadd.f32 %v1517, %v1618
        %v1620 = vpop.f32.mrf.mxu0
        %1621 = vmatprep.mubr.f32.mxu0 0.0
        %v1622 = vand.u32 %v1429, 4294901760
        %1623 = vmatmul.mubr.f32.gmra.mxu0 %v1622
        %v1624 = vpop.f32.mrf.mxu0
        %v1625 = vadd.f32 %v1527, %v1624
        %v1626 = vpop.f32.mrf.mxu0
        %1627 = vmatprep.mubr.f32.mxu0 0.0
        %v1628 = vand.u32 %v1432, 4294901760
        %1629 = vmatmul.mubr.f32.gmra.mxu0 %v1628
        %v1630 = vpop.f32.mrf.mxu0
        %v1631 = vadd.f32 %v1537, %v1630
        %v1632 = vpop.f32.mrf.mxu0
        %1633 = vdwg.mxu0
        %1634 = vmatprep.subr.mxu0 0.0
        %1635 = vmatpush1.msra.mxu0 0.0
        %1636 = vmatprep.subr.mxu0 0.0
        %1637 = vmatpush1.msra.mxu0 0.0
        %1638 = vmatprep.subr.mxu0 0.0
        %1639 = vmatpush1.msra.mxu0 0.0
        %1640 = vmatprep.subr.mxu0 0.0
        %1641 = vmatpush1.msra.mxu0 0.0
        %1642 = vmatprep.subr.mxu0 0.0
        %1643 = vmatpush1.msra.mxu0 0.0
        %1644 = vmatprep.subr.mxu0 0.0
        %1645 = vmatpush1.msra.mxu0 0.0
        %1646 = vmatprep.subr.mxu0 0.0
        %1647 = vmatpush1.msra.mxu0 0.0
        %1648 = vmatprep.subr.mxu0 0.0
        %1649 = vmatpush1.msra.mxu0 0.0
        %1650 = vmatprep.subr.mxu0 0.0
        %1651 = vmatpush1.msra.mxu0 0.0
        %1652 = vmatprep.subr.mxu0 0.0
        %1653 = vmatpush1.msra.mxu0 0.0
        %1654 = vmatprep.subr.mxu0 0.0
        %1655 = vmatpush1.msra.mxu0 0.0
        %1656 = vmatprep.subr.mxu0 0.0
        %1657 = vmatpush1.msra.mxu0 0.0
        %1658 = vmatprep.subr.mxu0 0.0
        %1659 = vmatpush1.msra.mxu0 0.0
        %1660 = vmatprep.subr.mxu0 0.0
        %1661 = vmatpush1.msra.mxu0 0.0
        %1662 = vmatprep.subr.mxu0 0.0
        %1663 = vmatpush1.msra.mxu0 0.0
        %1664 = vmatprep.subr.mxu0 0.0
        %v1665 = vand.u32 %v174, 4294901760
        %v1666 = vsub.f32 %v174, %v1665
        %1667 = vmatpush1.msra.mxu0 %v1666
        %1668 = vmatprep.subr.mxu0 0.0
        %1669 = vmatpush2.msra.mxu0 0.0
        %1670 = vmatprep.subr.mxu0 0.0
        %1671 = vmatpush2.msra.mxu0 0.0
        %1672 = vmatprep.subr.mxu0 0.0
        %1673 = vmatpush2.msra.mxu0 0.0
        %1674 = vmatprep.subr.mxu0 0.0
        %1675 = vmatpush2.msra.mxu0 0.0
        %1676 = vmatprep.subr.mxu0 0.0
        %1677 = vmatpush2.msra.mxu0 0.0
        %1678 = vmatprep.subr.mxu0 0.0
        %1679 = vmatpush2.msra.mxu0 0.0
        %1680 = vmatprep.subr.mxu0 0.0
        %1681 = vmatpush2.msra.mxu0 0.0
        %1682 = vmatprep.subr.mxu0 0.0
        %1683 = vmatpush2.msra.mxu0 0.0
        %1684 = vmatprep.subr.mxu0 0.0
        %1685 = vmatpush2.msra.mxu0 0.0
        %1686 = vmatprep.subr.mxu0 0.0
        %1687 = vmatpush2.msra.mxu0 0.0
        %1688 = vmatprep.subr.mxu0 0.0
        %1689 = vmatpush2.msra.mxu0 0.0
        %1690 = vmatprep.subr.mxu0 0.0
        %1691 = vmatpush2.msra.mxu0 0.0
        %1692 = vmatprep.subr.mxu0 0.0
        %1693 = vmatpush2.msra.mxu0 0.0
        %1694 = vmatprep.subr.mxu0 0.0
        %1695 = vmatpush2.msra.mxu0 0.0
        %1696 = vmatprep.subr.mxu0 0.0
        %1697 = vmatpush2.msra.mxu0 0.0
        %1698 = vmatprep.subr.mxu0 0.0
        %1699 = vmatpush2.msra.mxu0 0.0
        %1700 = vmatprep.mubr.f32.mxu0 0.0
        %v1701 = vand.u32 %v1423, 4294901760
        %v1702 = vsub.f32 %v1423, %v1701
        %1703 = vmatmul.mubr.f32.gmra.mxu0 %v1702
        %v1704 = vpop.f32.mrf.mxu0
        %v1705 = vadd.f32 %v1613, %v1704
        %v1706 = vpop.f32.mrf.mxu0
        %1707 = vmatprep.mubr.f32.mxu0 0.0
        %v1708 = vand.u32 %v1426, 4294901760
        %v1709 = vsub.f32 %v1426, %v1708
        %1710 = vmatmul.mubr.f32.gmra.mxu0 %v1709
        %v1711 = vpop.f32.mrf.mxu0
        %v1712 = vadd.f32 %v1619, %v1711
        %v1713 = vpop.f32.mrf.mxu0
        %1714 = vmatprep.mubr.f32.mxu0 0.0
        %v1715 = vand.u32 %v1429, 4294901760
        %v1716 = vsub.f32 %v1429, %v1715
        %1717 = vmatmul.mubr.f32.gmra.mxu0 %v1716
        %v1718 = vpop.f32.mrf.mxu0
        %v1719 = vadd.f32 %v1625, %v1718
        %v1720 = vpop.f32.mrf.mxu0
        %1721 = vmatprep.mubr.f32.mxu0 0.0
        %v1722 = vand.u32 %v1432, 4294901760
        %v1723 = vsub.f32 %v1432, %v1722
        %1724 = vmatmul.mubr.f32.gmra.mxu0 %v1723
        %v1725 = vpop.f32.mrf.mxu0
        %v1726 = vadd.f32 %v1631, %v1725
        %v1727 = vpop.f32.mrf.mxu0
        %1728 = vdwg.mxu0
        %1729 = vmatprep.subr.mxu0 0.0
        %1730 = vmatpush1.msra.mxu0 0.0
        %1731 = vmatprep.subr.mxu0 0.0
        %1732 = vmatpush1.msra.mxu0 0.0
        %1733 = vmatprep.subr.mxu0 0.0
        %1734 = vmatpush1.msra.mxu0 0.0
        %1735 = vmatprep.subr.mxu0 0.0
        %1736 = vmatpush1.msra.mxu0 0.0
        %1737 = vmatprep.subr.mxu0 0.0
        %1738 = vmatpush1.msra.mxu0 0.0
        %1739 = vmatprep.subr.mxu0 0.0
        %1740 = vmatpush1.msra.mxu0 0.0
        %1741 = vmatprep.subr.mxu0 0.0
        %1742 = vmatpush1.msra.mxu0 0.0
        %1743 = vmatprep.subr.mxu0 0.0
        %1744 = vmatpush1.msra.mxu0 0.0
        %1745 = vmatprep.subr.mxu0 0.0
        %1746 = vmatpush1.msra.mxu0 0.0
        %1747 = vmatprep.subr.mxu0 0.0
        %1748 = vmatpush1.msra.mxu0 0.0
        %1749 = vmatprep.subr.mxu0 0.0
        %1750 = vmatpush1.msra.mxu0 0.0
        %1751 = vmatprep.subr.mxu0 0.0
        %1752 = vmatpush1.msra.mxu0 0.0
        %1753 = vmatprep.subr.mxu0 0.0
        %1754 = vmatpush1.msra.mxu0 0.0
        %1755 = vmatprep.subr.mxu0 0.0
        %1756 = vmatpush1.msra.mxu0 0.0
        %1757 = vmatprep.subr.mxu0 0.0
        %1758 = vmatpush1.msra.mxu0 0.0
        %1759 = vmatprep.subr.mxu0 0.0
        %v1760 = vand.u32 %v174, 4294901760
        %1761 = vmatpush1.msra.mxu0 %v1760
        %1762 = vmatprep.subr.mxu0 0.0
        %1763 = vmatpush2.msra.mxu0 0.0
        %1764 = vmatprep.subr.mxu0 0.0
        %1765 = vmatpush2.msra.mxu0 0.0
        %1766 = vmatprep.subr.mxu0 0.0
        %1767 = vmatpush2.msra.mxu0 0.0
        %1768 = vmatprep.subr.mxu0 0.0
        %1769 = vmatpush2.msra.mxu0 0.0
        %1770 = vmatprep.subr.mxu0 0.0
        %1771 = vmatpush2.msra.mxu0 0.0
        %1772 = vmatprep.subr.mxu0 0.0
        %1773 = vmatpush2.msra.mxu0 0.0
        %1774 = vmatprep.subr.mxu0 0.0
        %1775 = vmatpush2.msra.mxu0 0.0
        %1776 = vmatprep.subr.mxu0 0.0
        %1777 = vmatpush2.msra.mxu0 0.0
        %1778 = vmatprep.subr.mxu0 0.0
        %1779 = vmatpush2.msra.mxu0 0.0
        %1780 = vmatprep.subr.mxu0 0.0
        %1781 = vmatpush2.msra.mxu0 0.0
        %1782 = vmatprep.subr.mxu0 0.0
        %1783 = vmatpush2.msra.mxu0 0.0
        %1784 = vmatprep.subr.mxu0 0.0
        %1785 = vmatpush2.msra.mxu0 0.0
        %1786 = vmatprep.subr.mxu0 0.0
        %1787 = vmatpush2.msra.mxu0 0.0
        %1788 = vmatprep.subr.mxu0 0.0
        %1789 = vmatpush2.msra.mxu0 0.0
        %1790 = vmatprep.subr.mxu0 0.0
        %1791 = vmatpush2.msra.mxu0 0.0
        %1792 = vmatprep.subr.mxu0 0.0
        %1793 = vmatpush2.msra.mxu0 0.0
        %1794 = vmatprep.mubr.f32.mxu0 0.0
        %v1795 = vand.u32 %v1423, 4294901760
        %v1796 = vsub.f32 %v1423, %v1795
        %v1797 = vand.u32 %v1796, 4294901760
        %1798 = vmatmul.mubr.f32.gmra.mxu0 %v1797
        %v1799 = vpop.f32.mrf.mxu0
        %v1800 = vadd.f32 %v1705, %v1799
        %v1801 = vpop.f32.mrf.mxu0
        %1802 = vmatprep.mubr.f32.mxu0 0.0
        %v1803 = vand.u32 %v1426, 4294901760
        %v1804 = vsub.f32 %v1426, %v1803
        %v1805 = vand.u32 %v1804, 4294901760
        %1806 = vmatmul.mubr.f32.gmra.mxu0 %v1805
        %v1807 = vpop.f32.mrf.mxu0
        %v1808 = vadd.f32 %v1712, %v1807
        %v1809 = vpop.f32.mrf.mxu0
        %1810 = vmatprep.mubr.f32.mxu0 0.0
        %v1811 = vand.u32 %v1429, 4294901760
        %v1812 = vsub.f32 %v1429, %v1811
        %v1813 = vand.u32 %v1812, 4294901760
        %1814 = vmatmul.mubr.f32.gmra.mxu0 %v1813
        %v1815 = vpop.f32.mrf.mxu0
        %v1816 = vadd.f32 %v1719, %v1815
        %v1817 = vpop.f32.mrf.mxu0
        %1818 = vmatprep.mubr.f32.mxu0 0.0
        %v1819 = vand.u32 %v1432, 4294901760
        %v1820 = vsub.f32 %v1432, %v1819
        %v1821 = vand.u32 %v1820, 4294901760
        %1822 = vmatmul.mubr.f32.gmra.mxu0 %v1821
        %v1823 = vpop.f32.mrf.mxu0
        %v1824 = vadd.f32 %v1726, %v1823
        %v1825 = vpop.f32.mrf.mxu0
        %1826 = vdwg.mxu0
        %1827 = vmatprep.subr.mxu0 0.0
        %1828 = vmatpush1.msra.mxu0 0.0
        %1829 = vmatprep.subr.mxu0 0.0
        %1830 = vmatpush1.msra.mxu0 0.0
        %1831 = vmatprep.subr.mxu0 0.0
        %1832 = vmatpush1.msra.mxu0 0.0
        %1833 = vmatprep.subr.mxu0 0.0
        %1834 = vmatpush1.msra.mxu0 0.0
        %1835 = vmatprep.subr.mxu0 0.0
        %1836 = vmatpush1.msra.mxu0 0.0
        %1837 = vmatprep.subr.mxu0 0.0
        %1838 = vmatpush1.msra.mxu0 0.0
        %1839 = vmatprep.subr.mxu0 0.0
        %1840 = vmatpush1.msra.mxu0 0.0
        %1841 = vmatprep.subr.mxu0 0.0
        %1842 = vmatpush1.msra.mxu0 0.0
        %1843 = vmatprep.subr.mxu0 0.0
        %1844 = vmatpush1.msra.mxu0 0.0
        %1845 = vmatprep.subr.mxu0 0.0
        %1846 = vmatpush1.msra.mxu0 0.0
        %1847 = vmatprep.subr.mxu0 0.0
        %1848 = vmatpush1.msra.mxu0 0.0
        %1849 = vmatprep.subr.mxu0 0.0
        %1850 = vmatpush1.msra.mxu0 0.0
        %1851 = vmatprep.subr.mxu0 0.0
        %1852 = vmatpush1.msra.mxu0 0.0
        %1853 = vmatprep.subr.mxu0 0.0
        %1854 = vmatpush1.msra.mxu0 0.0
        %1855 = vmatprep.subr.mxu0 0.0
        %1856 = vmatpush1.msra.mxu0 0.0
        %1857 = vmatprep.subr.mxu0 0.0
        %v1858 = vand.u32 %v174, 4294901760
        %v1859 = vsub.f32 %v174, %v1858
        %v1860 = vand.u32 %v1859, 4294901760
        %1861 = vmatpush1.msra.mxu0 %v1860
        %1862 = vmatprep.subr.mxu0 0.0
        %1863 = vmatpush2.msra.mxu0 0.0
        %1864 = vmatprep.subr.mxu0 0.0
        %1865 = vmatpush2.msra.mxu0 0.0
        %1866 = vmatprep.subr.mxu0 0.0
        %1867 = vmatpush2.msra.mxu0 0.0
        %1868 = vmatprep.subr.mxu0 0.0
        %1869 = vmatpush2.msra.mxu0 0.0
        %1870 = vmatprep.subr.mxu0 0.0
        %1871 = vmatpush2.msra.mxu0 0.0
        %1872 = vmatprep.subr.mxu0 0.0
        %1873 = vmatpush2.msra.mxu0 0.0
        %1874 = vmatprep.subr.mxu0 0.0
        %1875 = vmatpush2.msra.mxu0 0.0
        %1876 = vmatprep.subr.mxu0 0.0
        %1877 = vmatpush2.msra.mxu0 0.0
        %1878 = vmatprep.subr.mxu0 0.0
        %1879 = vmatpush2.msra.mxu0 0.0
        %1880 = vmatprep.subr.mxu0 0.0
        %1881 = vmatpush2.msra.mxu0 0.0
        %1882 = vmatprep.subr.mxu0 0.0
        %1883 = vmatpush2.msra.mxu0 0.0
        %1884 = vmatprep.subr.mxu0 0.0
        %1885 = vmatpush2.msra.mxu0 0.0
        %1886 = vmatprep.subr.mxu0 0.0
        %1887 = vmatpush2.msra.mxu0 0.0
        %1888 = vmatprep.subr.mxu0 0.0
        %1889 = vmatpush2.msra.mxu0 0.0
        %1890 = vmatprep.subr.mxu0 0.0
        %1891 = vmatpush2.msra.mxu0 0.0
        %1892 = vmatprep.subr.mxu0 0.0
        %1893 = vmatpush2.msra.mxu0 0.0
        %1894 = vmatprep.mubr.f32.mxu0 0.0
        %v1895 = vand.u32 %v1423, 4294901760
        %1896 = vmatmul.mubr.f32.gmra.mxu0 %v1895
        %v1897 = vpop.f32.mrf.mxu0
        %v1898 = vadd.f32 %v1800, %v1897
        %v1899 = vpop.f32.mrf.mxu0
        %1900 = vmatprep.mubr.f32.mxu0 0.0
        %v1901 = vand.u32 %v1426, 4294901760
        %1902 = vmatmul.mubr.f32.gmra.mxu0 %v1901
        %v1903 = vpop.f32.mrf.mxu0
        %v1904 = vadd.f32 %v1808, %v1903
        %v1905 = vpop.f32.mrf.mxu0
        %1906 = vmatprep.mubr.f32.mxu0 0.0
        %v1907 = vand.u32 %v1429, 4294901760
        %1908 = vmatmul.mubr.f32.gmra.mxu0 %v1907
        %v1909 = vpop.f32.mrf.mxu0
        %v1910 = vadd.f32 %v1816, %v1909
        %v1911 = vpop.f32.mrf.mxu0
        %1912 = vmatprep.mubr.f32.mxu0 0.0
        %v1913 = vand.u32 %v1432, 4294901760
        %1914 = vmatmul.mubr.f32.gmra.mxu0 %v1913
        %v1915 = vpop.f32.mrf.mxu0
        %v1916 = vadd.f32 %v1824, %v1915
        %v1917 = vpop.f32.mrf.mxu0
        %1918 = vdwg.mxu0
        %1919 = vmatprep.subr.mxu0 0.0
        %1920 = vmatpush1.msra.mxu0 0.0
        %1921 = vmatprep.subr.mxu0 0.0
        %1922 = vmatpush1.msra.mxu0 0.0
        %1923 = vmatprep.subr.mxu0 0.0
        %1924 = vmatpush1.msra.mxu0 0.0
        %1925 = vmatprep.subr.mxu0 0.0
        %1926 = vmatpush1.msra.mxu0 0.0
        %1927 = vmatprep.subr.mxu0 0.0
        %1928 = vmatpush1.msra.mxu0 0.0
        %1929 = vmatprep.subr.mxu0 0.0
        %1930 = vmatpush1.msra.mxu0 0.0
        %1931 = vmatprep.subr.mxu0 0.0
        %1932 = vmatpush1.msra.mxu0 0.0
        %1933 = vmatprep.subr.mxu0 0.0
        %1934 = vmatpush1.msra.mxu0 0.0
        %1935 = vmatprep.subr.mxu0 0.0
        %1936 = vmatpush1.msra.mxu0 0.0
        %1937 = vmatprep.subr.mxu0 0.0
        %1938 = vmatpush1.msra.mxu0 0.0
        %1939 = vmatprep.subr.mxu0 0.0
        %1940 = vmatpush1.msra.mxu0 0.0
        %1941 = vmatprep.subr.mxu0 0.0
        %1942 = vmatpush1.msra.mxu0 0.0
        %1943 = vmatprep.subr.mxu0 0.0
        %1944 = vmatpush1.msra.mxu0 0.0
        %1945 = vmatprep.subr.mxu0 0.0
        %1946 = vmatpush1.msra.mxu0 0.0
        %1947 = vmatprep.subr.mxu0 0.0
        %1948 = vmatpush1.msra.mxu0 0.0
        %1949 = vmatprep.subr.mxu0 0.0
        %v1950 = vand.u32 %v174, 4294901760
        %1951 = vmatpush1.msra.mxu0 %v1950
        %1952 = vmatprep.subr.mxu0 0.0
        %1953 = vmatpush2.msra.mxu0 0.0
        %1954 = vmatprep.subr.mxu0 0.0
        %1955 = vmatpush2.msra.mxu0 0.0
        %1956 = vmatprep.subr.mxu0 0.0
        %1957 = vmatpush2.msra.mxu0 0.0
        %1958 = vmatprep.subr.mxu0 0.0
        %1959 = vmatpush2.msra.mxu0 0.0
        %1960 = vmatprep.subr.mxu0 0.0
        %1961 = vmatpush2.msra.mxu0 0.0
        %1962 = vmatprep.subr.mxu0 0.0
        %1963 = vmatpush2.msra.mxu0 0.0
        %1964 = vmatprep.subr.mxu0 0.0
        %1965 = vmatpush2.msra.mxu0 0.0
        %1966 = vmatprep.subr.mxu0 0.0
        %1967 = vmatpush2.msra.mxu0 0.0
        %1968 = vmatprep.subr.mxu0 0.0
        %1969 = vmatpush2.msra.mxu0 0.0
        %1970 = vmatprep.subr.mxu0 0.0
        %1971 = vmatpush2.msra.mxu0 0.0
        %1972 = vmatprep.subr.mxu0 0.0
        %1973 = vmatpush2.msra.mxu0 0.0
        %1974 = vmatprep.subr.mxu0 0.0
        %1975 = vmatpush2.msra.mxu0 0.0
        %1976 = vmatprep.subr.mxu0 0.0
        %1977 = vmatpush2.msra.mxu0 0.0
        %1978 = vmatprep.subr.mxu0 0.0
        %1979 = vmatpush2.msra.mxu0 0.0
        %1980 = vmatprep.subr.mxu0 0.0
        %1981 = vmatpush2.msra.mxu0 0.0
        %1982 = vmatprep.subr.mxu0 0.0
        %1983 = vmatpush2.msra.mxu0 0.0
        %1984 = vmatprep.mubr.f32.mxu0 0.0
        %v1985 = vand.u32 %v1423, 4294901760
        %1986 = vmatmul.mubr.f32.gmra.mxu0 %v1985
        %v1987 = vpop.f32.mrf.mxu0
        %v1988 = vadd.f32 %v1898, %v1987
        %v1989 = vpop.f32.mrf.mxu0
        %1990 = vmatprep.mubr.f32.mxu0 0.0
        %v1991 = vand.u32 %v1426, 4294901760
        %1992 = vmatmul.mubr.f32.gmra.mxu0 %v1991
        %v1993 = vpop.f32.mrf.mxu0
        %v1994 = vadd.f32 %v1904, %v1993
        %v1995 = vpop.f32.mrf.mxu0
        %1996 = vmatprep.mubr.f32.mxu0 0.0
        %v1997 = vand.u32 %v1429, 4294901760
        %1998 = vmatmul.mubr.f32.gmra.mxu0 %v1997
        %v1999 = vpop.f32.mrf.mxu0
        %v2000 = vadd.f32 %v1910, %v1999
        %v2001 = vpop.f32.mrf.mxu0
        %2002 = vmatprep.mubr.f32.mxu0 0.0
        %v2003 = vand.u32 %v1432, 4294901760
        %2004 = vmatmul.mubr.f32.gmra.mxu0 %v2003
        %v2005 = vpop.f32.mrf.mxu0
        %v2006 = vadd.f32 %v1916, %v2005
        %v2007 = vpop.f32.mrf.mxu0
        %2008 = vdwg.mxu0
        %vm2009 = vcmask 236544
        %v2011 = vsel %vm2009, %v1414, 0
        %v2014 = vsel %vm2009, %v1415, 0
        %v2017 = vsel %vm2009, %v1416, 0
        %v2020 = vsel %vm2009, %v1417, 0
        %vm2022 = vcmask 1044480
        %v2024 = vsel %vm2022, %v1413, 0
        %2026 = vmatprep.subr.mxu0 0.0
        %2027 = vmatpush1.msra.mxu0 0.0
        %2028 = vmatprep.subr.mxu0 0.0
        %2029 = vmatpush1.msra.mxu0 0.0
        %2030 = vmatprep.subr.mxu0 0.0
        %2031 = vmatpush1.msra.mxu0 0.0
        %2032 = vmatprep.subr.mxu0 0.0
        %2033 = vmatpush1.msra.mxu0 0.0
        %2034 = vmatprep.subr.mxu0 0.0
        %2035 = vmatpush1.msra.mxu0 0.0
        %2036 = vmatprep.subr.mxu0 0.0
        %2037 = vmatpush1.msra.mxu0 0.0
        %2038 = vmatprep.subr.mxu0 0.0
        %2039 = vmatpush1.msra.mxu0 0.0
        %2040 = vmatprep.subr.mxu0 0.0
        %2041 = vmatpush1.msra.mxu0 0.0
        %2042 = vmatprep.subr.mxu0 0.0
        %2043 = vmatpush1.msra.mxu0 0.0
        %2044 = vmatprep.subr.mxu0 0.0
        %2045 = vmatpush1.msra.mxu0 0.0
        %2046 = vmatprep.subr.mxu0 0.0
        %2047 = vmatpush1.msra.mxu0 0.0
        %2048 = vmatprep.subr.mxu0 0.0
        %2049 = vmatpush1.msra.mxu0 0.0
        %2050 = vmatprep.subr.mxu0 0.0
        %v2051 = vand.u32 %v2024, 4294901760
        %2052 = vmatpush1.msra.mxu0 %v2051
        %2053 = vmatprep.subr.mxu0 0.0
        %v2054 = vand.u32 %v1412, 4294901760
        %2055 = vmatpush1.msra.mxu0 %v2054
        %2056 = vmatprep.subr.mxu0 0.0
        %v2057 = vand.u32 %v1411, 4294901760
        %2058 = vmatpush1.msra.mxu0 %v2057
        %2059 = vmatprep.subr.mxu0 0.0
        %v2060 = vand.u32 %v1410, 4294901760
        %2061 = vmatpush1.msra.mxu0 %v2060
        %2062 = vmatprep.subr.mxu0 0.0
        %2063 = vmatpush2.msra.mxu0 0.0
        %2064 = vmatprep.subr.mxu0 0.0
        %2065 = vmatpush2.msra.mxu0 0.0
        %2066 = vmatprep.subr.mxu0 0.0
        %2067 = vmatpush2.msra.mxu0 0.0
        %2068 = vmatprep.subr.mxu0 0.0
        %2069 = vmatpush2.msra.mxu0 0.0
        %2070 = vmatprep.subr.mxu0 0.0
        %2071 = vmatpush2.msra.mxu0 0.0
        %2072 = vmatprep.subr.mxu0 0.0
        %2073 = vmatpush2.msra.mxu0 0.0
        %2074 = vmatprep.subr.mxu0 0.0
        %2075 = vmatpush2.msra.mxu0 0.0
        %2076 = vmatprep.subr.mxu0 0.0
        %2077 = vmatpush2.msra.mxu0 0.0
        %2078 = vmatprep.subr.mxu0 0.0
        %2079 = vmatpush2.msra.mxu0 0.0
        %2080 = vmatprep.subr.mxu0 0.0
        %2081 = vmatpush2.msra.mxu0 0.0
        %2082 = vmatprep.subr.mxu0 0.0
        %2083 = vmatpush2.msra.mxu0 0.0
        %2084 = vmatprep.subr.mxu0 0.0
        %2085 = vmatpush2.msra.mxu0 0.0
        %2086 = vmatprep.subr.mxu0 0.0
        %2087 = vmatpush2.msra.mxu0 0.0
        %2088 = vmatprep.subr.mxu0 0.0
        %2089 = vmatpush2.msra.mxu0 0.0
        %2090 = vmatprep.subr.mxu0 0.0
        %2091 = vmatpush2.msra.mxu0 0.0
        %2092 = vmatprep.subr.mxu0 0.0
        %2093 = vmatpush2.msra.mxu0 0.0
        %2094 = vmatprep.mubr.f32.mxu0 0.0
        %v2095 = vand.u32 %v2011, 4294901760
        %v2096 = vsub.f32 %v2011, %v2095
        %v2097 = vand.u32 %v2096, 4294901760
        %v2098 = vsub.f32 %v2096, %v2097
        %v2099 = vand.u32 %v2098, 4294901760
        %2100 = vmatmul.mubr.f32.gmra.mxu0 %v2099
        %v2101 = vpop.f32.mrf.mxu0
        %v2102 = vadd.f32 %v1988, %v2101
        %v2103 = vpop.f32.mrf.mxu0
        %2104 = vmatprep.mubr.f32.mxu0 0.0
        %v2105 = vand.u32 %v2014, 4294901760
        %v2106 = vsub.f32 %v2014, %v2105
        %v2107 = vand.u32 %v2106, 4294901760
        %v2108 = vsub.f32 %v2106, %v2107
        %v2109 = vand.u32 %v2108, 4294901760
        %2110 = vmatmul.mubr.f32.gmra.mxu0 %v2109
        %v2111 = vpop.f32.mrf.mxu0
        %v2112 = vadd.f32 %v1994, %v2111
        %v2113 = vpop.f32.mrf.mxu0
        %2114 = vmatprep.mubr.f32.mxu0 0.0
        %v2115 = vand.u32 %v2017, 4294901760
        %v2116 = vsub.f32 %v2017, %v2115
        %v2117 = vand.u32 %v2116, 4294901760
        %v2118 = vsub.f32 %v2116, %v2117
        %v2119 = vand.u32 %v2118, 4294901760
        %2120 = vmatmul.mubr.f32.gmra.mxu0 %v2119
        %v2121 = vpop.f32.mrf.mxu0
        %v2122 = vadd.f32 %v2000, %v2121
        %v2123 = vpop.f32.mrf.mxu0
        %2124 = vmatprep.mubr.f32.mxu0 0.0
        %v2125 = vand.u32 %v2020, 4294901760
        %v2126 = vsub.f32 %v2020, %v2125
        %v2127 = vand.u32 %v2126, 4294901760
        %v2128 = vsub.f32 %v2126, %v2127
        %v2129 = vand.u32 %v2128, 4294901760
        %2130 = vmatmul.mubr.f32.gmra.mxu0 %v2129
        %v2131 = vpop.f32.mrf.mxu0
        %v2132 = vadd.f32 %v2006, %v2131
        %v2133 = vpop.f32.mrf.mxu0
        %2134 = vdwg.mxu0
        %2135 = vmatprep.subr.mxu0 0.0
        %2136 = vmatpush1.msra.mxu0 0.0
        %2137 = vmatprep.subr.mxu0 0.0
        %2138 = vmatpush1.msra.mxu0 0.0
        %2139 = vmatprep.subr.mxu0 0.0
        %2140 = vmatpush1.msra.mxu0 0.0
        %2141 = vmatprep.subr.mxu0 0.0
        %2142 = vmatpush1.msra.mxu0 0.0
        %2143 = vmatprep.subr.mxu0 0.0
        %2144 = vmatpush1.msra.mxu0 0.0
        %2145 = vmatprep.subr.mxu0 0.0
        %2146 = vmatpush1.msra.mxu0 0.0
        %2147 = vmatprep.subr.mxu0 0.0
        %2148 = vmatpush1.msra.mxu0 0.0
        %2149 = vmatprep.subr.mxu0 0.0
        %2150 = vmatpush1.msra.mxu0 0.0
        %2151 = vmatprep.subr.mxu0 0.0
        %2152 = vmatpush1.msra.mxu0 0.0
        %2153 = vmatprep.subr.mxu0 0.0
        %2154 = vmatpush1.msra.mxu0 0.0
        %2155 = vmatprep.subr.mxu0 0.0
        %2156 = vmatpush1.msra.mxu0 0.0
        %2157 = vmatprep.subr.mxu0 0.0
        %2158 = vmatpush1.msra.mxu0 0.0
        %2159 = vmatprep.subr.mxu0 0.0
        %v2160 = vand.u32 %v2024, 4294901760
        %v2161 = vsub.f32 %v2024, %v2160
        %v2162 = vand.u32 %v2161, 4294901760
        %v2163 = vsub.f32 %v2161, %v2162
        %v2164 = vand.u32 %v2163, 4294901760
        %2165 = vmatpush1.msra.mxu0 %v2164
        %2166 = vmatprep.subr.mxu0 0.0
        %v2167 = vand.u32 %v1412, 4294901760
        %v2168 = vsub.f32 %v1412, %v2167
        %v2169 = vand.u32 %v2168, 4294901760
        %v2170 = vsub.f32 %v2168, %v2169
        %v2171 = vand.u32 %v2170, 4294901760
        %2172 = vmatpush1.msra.mxu0 %v2171
        %2173 = vmatprep.subr.mxu0 0.0
        %v2174 = vand.u32 %v1411, 4294901760
        %v2175 = vsub.f32 %v1411, %v2174
        %v2176 = vand.u32 %v2175, 4294901760
        %v2177 = vsub.f32 %v2175, %v2176
        %v2178 = vand.u32 %v2177, 4294901760
        %2179 = vmatpush1.msra.mxu0 %v2178
        %2180 = vmatprep.subr.mxu0 0.0
        %v2181 = vand.u32 %v1410, 4294901760
        %v2182 = vsub.f32 %v1410, %v2181
        %v2183 = vand.u32 %v2182, 4294901760
        %v2184 = vsub.f32 %v2182, %v2183
        %v2185 = vand.u32 %v2184, 4294901760
        %2186 = vmatpush1.msra.mxu0 %v2185
        %2187 = vmatprep.subr.mxu0 0.0
        %2188 = vmatpush2.msra.mxu0 0.0
        %2189 = vmatprep.subr.mxu0 0.0
        %2190 = vmatpush2.msra.mxu0 0.0
        %2191 = vmatprep.subr.mxu0 0.0
        %2192 = vmatpush2.msra.mxu0 0.0
        %2193 = vmatprep.subr.mxu0 0.0
        %2194 = vmatpush2.msra.mxu0 0.0
        %2195 = vmatprep.subr.mxu0 0.0
        %2196 = vmatpush2.msra.mxu0 0.0
        %2197 = vmatprep.subr.mxu0 0.0
        %2198 = vmatpush2.msra.mxu0 0.0
        %2199 = vmatprep.subr.mxu0 0.0
        %2200 = vmatpush2.msra.mxu0 0.0
        %2201 = vmatprep.subr.mxu0 0.0
        %2202 = vmatpush2.msra.mxu0 0.0
        %2203 = vmatprep.subr.mxu0 0.0
        %2204 = vmatpush2.msra.mxu0 0.0
        %2205 = vmatprep.subr.mxu0 0.0
        %2206 = vmatpush2.msra.mxu0 0.0
        %2207 = vmatprep.subr.mxu0 0.0
        %2208 = vmatpush2.msra.mxu0 0.0
        %2209 = vmatprep.subr.mxu0 0.0
        %2210 = vmatpush2.msra.mxu0 0.0
        %2211 = vmatprep.subr.mxu0 0.0
        %2212 = vmatpush2.msra.mxu0 0.0
        %2213 = vmatprep.subr.mxu0 0.0
        %2214 = vmatpush2.msra.mxu0 0.0
        %2215 = vmatprep.subr.mxu0 0.0
        %2216 = vmatpush2.msra.mxu0 0.0
        %2217 = vmatprep.subr.mxu0 0.0
        %2218 = vmatpush2.msra.mxu0 0.0
        %2219 = vmatprep.mubr.f32.mxu0 0.0
        %v2220 = vand.u32 %v2011, 4294901760
        %2221 = vmatmul.mubr.f32.gmra.mxu0 %v2220
        %v2222 = vpop.f32.mrf.mxu0
        %v2223 = vadd.f32 %v2102, %v2222
        %v2224 = vpop.f32.mrf.mxu0
        %2225 = vmatprep.mubr.f32.mxu0 0.0
        %v2226 = vand.u32 %v2014, 4294901760
        %2227 = vmatmul.mubr.f32.gmra.mxu0 %v2226
        %v2228 = vpop.f32.mrf.mxu0
        %v2229 = vadd.f32 %v2112, %v2228
        %v2230 = vpop.f32.mrf.mxu0
        %2231 = vmatprep.mubr.f32.mxu0 0.0
        %v2232 = vand.u32 %v2017, 4294901760
        %2233 = vmatmul.mubr.f32.gmra.mxu0 %v2232
        %v2234 = vpop.f32.mrf.mxu0
        %v2235 = vadd.f32 %v2122, %v2234
        %v2236 = vpop.f32.mrf.mxu0
        %2237 = vmatprep.mubr.f32.mxu0 0.0
        %v2238 = vand.u32 %v2020, 4294901760
        %2239 = vmatmul.mubr.f32.gmra.mxu0 %v2238
        %v2240 = vpop.f32.mrf.mxu0
        %v2241 = vadd.f32 %v2132, %v2240
        %v2242 = vpop.f32.mrf.mxu0
        %2243 = vdwg.mxu0
        %2244 = vmatprep.subr.mxu0 0.0
        %2245 = vmatpush1.msra.mxu0 0.0
        %2246 = vmatprep.subr.mxu0 0.0
        %2247 = vmatpush1.msra.mxu0 0.0
        %2248 = vmatprep.subr.mxu0 0.0
        %2249 = vmatpush1.msra.mxu0 0.0
        %2250 = vmatprep.subr.mxu0 0.0
        %2251 = vmatpush1.msra.mxu0 0.0
        %2252 = vmatprep.subr.mxu0 0.0
        %2253 = vmatpush1.msra.mxu0 0.0
        %2254 = vmatprep.subr.mxu0 0.0
        %2255 = vmatpush1.msra.mxu0 0.0
        %2256 = vmatprep.subr.mxu0 0.0
        %2257 = vmatpush1.msra.mxu0 0.0
        %2258 = vmatprep.subr.mxu0 0.0
        %2259 = vmatpush1.msra.mxu0 0.0
        %2260 = vmatprep.subr.mxu0 0.0
        %2261 = vmatpush1.msra.mxu0 0.0
        %2262 = vmatprep.subr.mxu0 0.0
        %2263 = vmatpush1.msra.mxu0 0.0
        %2264 = vmatprep.subr.mxu0 0.0
        %2265 = vmatpush1.msra.mxu0 0.0
        %2266 = vmatprep.subr.mxu0 0.0
        %2267 = vmatpush1.msra.mxu0 0.0
        %2268 = vmatprep.subr.mxu0 0.0
        %v2269 = vand.u32 %v2024, 4294901760
        %v2270 = vsub.f32 %v2024, %v2269
        %2271 = vmatpush1.msra.mxu0 %v2270
        %2272 = vmatprep.subr.mxu0 0.0
        %v2273 = vand.u32 %v1412, 4294901760
        %v2274 = vsub.f32 %v1412, %v2273
        %2275 = vmatpush1.msra.mxu0 %v2274
        %2276 = vmatprep.subr.mxu0 0.0
        %v2277 = vand.u32 %v1411, 4294901760
        %v2278 = vsub.f32 %v1411, %v2277
        %2279 = vmatpush1.msra.mxu0 %v2278
        %2280 = vmatprep.subr.mxu0 0.0
        %v2281 = vand.u32 %v1410, 4294901760
        %v2282 = vsub.f32 %v1410, %v2281
        %2283 = vmatpush1.msra.mxu0 %v2282
        %2284 = vmatprep.subr.mxu0 0.0
        %2285 = vmatpush2.msra.mxu0 0.0
        %2286 = vmatprep.subr.mxu0 0.0
        %2287 = vmatpush2.msra.mxu0 0.0
        %2288 = vmatprep.subr.mxu0 0.0
        %2289 = vmatpush2.msra.mxu0 0.0
        %2290 = vmatprep.subr.mxu0 0.0
        %2291 = vmatpush2.msra.mxu0 0.0
        %2292 = vmatprep.subr.mxu0 0.0
        %2293 = vmatpush2.msra.mxu0 0.0
        %2294 = vmatprep.subr.mxu0 0.0
        %2295 = vmatpush2.msra.mxu0 0.0
        %2296 = vmatprep.subr.mxu0 0.0
        %2297 = vmatpush2.msra.mxu0 0.0
        %2298 = vmatprep.subr.mxu0 0.0
        %2299 = vmatpush2.msra.mxu0 0.0
        %2300 = vmatprep.subr.mxu0 0.0
        %2301 = vmatpush2.msra.mxu0 0.0
        %2302 = vmatprep.subr.mxu0 0.0
        %2303 = vmatpush2.msra.mxu0 0.0
        %2304 = vmatprep.subr.mxu0 0.0
        %2305 = vmatpush2.msra.mxu0 0.0
        %2306 = vmatprep.subr.mxu0 0.0
        %2307 = vmatpush2.msra.mxu0 0.0
        %2308 = vmatprep.subr.mxu0 0.0
        %2309 = vmatpush2.msra.mxu0 0.0
        %2310 = vmatprep.subr.mxu0 0.0
        %2311 = vmatpush2.msra.mxu0 0.0
        %2312 = vmatprep.subr.mxu0 0.0
        %2313 = vmatpush2.msra.mxu0 0.0
        %2314 = vmatprep.subr.mxu0 0.0
        %2315 = vmatpush2.msra.mxu0 0.0
        %2316 = vmatprep.mubr.f32.mxu0 0.0
        %v2317 = vand.u32 %v2011, 4294901760
        %v2318 = vsub.f32 %v2011, %v2317
        %2319 = vmatmul.mubr.f32.gmra.mxu0 %v2318
        %v2320 = vpop.f32.mrf.mxu0
        %v2321 = vadd.f32 %v2223, %v2320
        %v2322 = vpop.f32.mrf.mxu0
        %2323 = vmatprep.mubr.f32.mxu0 0.0
        %v2324 = vand.u32 %v2014, 4294901760
        %v2325 = vsub.f32 %v2014, %v2324
        %2326 = vmatmul.mubr.f32.gmra.mxu0 %v2325
        %v2327 = vpop.f32.mrf.mxu0
        %v2328 = vadd.f32 %v2229, %v2327
        %v2329 = vpop.f32.mrf.mxu0
        %2330 = vmatprep.mubr.f32.mxu0 0.0
        %v2331 = vand.u32 %v2017, 4294901760
        %v2332 = vsub.f32 %v2017, %v2331
        %2333 = vmatmul.mubr.f32.gmra.mxu0 %v2332
        %v2334 = vpop.f32.mrf.mxu0
        %v2335 = vadd.f32 %v2235, %v2334
        %v2336 = vpop.f32.mrf.mxu0
        %2337 = vmatprep.mubr.f32.mxu0 0.0
        %v2338 = vand.u32 %v2020, 4294901760
        %v2339 = vsub.f32 %v2020, %v2338
        %2340 = vmatmul.mubr.f32.gmra.mxu0 %v2339
        %v2341 = vpop.f32.mrf.mxu0
        %v2342 = vadd.f32 %v2241, %v2341
        %v2343 = vpop.f32.mrf.mxu0
        %2344 = vdwg.mxu0
        %2345 = vmatprep.subr.mxu0 0.0
        %2346 = vmatpush1.msra.mxu0 0.0
        %2347 = vmatprep.subr.mxu0 0.0
        %2348 = vmatpush1.msra.mxu0 0.0
        %2349 = vmatprep.subr.mxu0 0.0
        %2350 = vmatpush1.msra.mxu0 0.0
        %2351 = vmatprep.subr.mxu0 0.0
        %2352 = vmatpush1.msra.mxu0 0.0
        %2353 = vmatprep.subr.mxu0 0.0
        %2354 = vmatpush1.msra.mxu0 0.0
        %2355 = vmatprep.subr.mxu0 0.0
        %2356 = vmatpush1.msra.mxu0 0.0
        %2357 = vmatprep.subr.mxu0 0.0
        %2358 = vmatpush1.msra.mxu0 0.0
        %2359 = vmatprep.subr.mxu0 0.0
        %2360 = vmatpush1.msra.mxu0 0.0
        %2361 = vmatprep.subr.mxu0 0.0
        %2362 = vmatpush1.msra.mxu0 0.0
        %2363 = vmatprep.subr.mxu0 0.0
        %2364 = vmatpush1.msra.mxu0 0.0
        %2365 = vmatprep.subr.mxu0 0.0
        %2366 = vmatpush1.msra.mxu0 0.0
        %2367 = vmatprep.subr.mxu0 0.0
        %2368 = vmatpush1.msra.mxu0 0.0
        %2369 = vmatprep.subr.mxu0 0.0
        %v2370 = vand.u32 %v2024, 4294901760
        %2371 = vmatpush1.msra.mxu0 %v2370
        %2372 = vmatprep.subr.mxu0 0.0
        %v2373 = vand.u32 %v1412, 4294901760
        %2374 = vmatpush1.msra.mxu0 %v2373
        %2375 = vmatprep.subr.mxu0 0.0
        %v2376 = vand.u32 %v1411, 4294901760
        %2377 = vmatpush1.msra.mxu0 %v2376
        %2378 = vmatprep.subr.mxu0 0.0
        %v2379 = vand.u32 %v1410, 4294901760
        %2380 = vmatpush1.msra.mxu0 %v2379
        %2381 = vmatprep.subr.mxu0 0.0
        %2382 = vmatpush2.msra.mxu0 0.0
        %2383 = vmatprep.subr.mxu0 0.0
        %2384 = vmatpush2.msra.mxu0 0.0
        %2385 = vmatprep.subr.mxu0 0.0
        %2386 = vmatpush2.msra.mxu0 0.0
        %2387 = vmatprep.subr.mxu0 0.0
        %2388 = vmatpush2.msra.mxu0 0.0
        %2389 = vmatprep.subr.mxu0 0.0
        %2390 = vmatpush2.msra.mxu0 0.0
        %2391 = vmatprep.subr.mxu0 0.0
        %2392 = vmatpush2.msra.mxu0 0.0
        %2393 = vmatprep.subr.mxu0 0.0
        %2394 = vmatpush2.msra.mxu0 0.0
        %2395 = vmatprep.subr.mxu0 0.0
        %2396 = vmatpush2.msra.mxu0 0.0
        %2397 = vmatprep.subr.mxu0 0.0
        %2398 = vmatpush2.msra.mxu0 0.0
        %2399 = vmatprep.subr.mxu0 0.0
        %2400 = vmatpush2.msra.mxu0 0.0
        %2401 = vmatprep.subr.mxu0 0.0
        %2402 = vmatpush2.msra.mxu0 0.0
        %2403 = vmatprep.subr.mxu0 0.0
        %2404 = vmatpush2.msra.mxu0 0.0
        %2405 = vmatprep.subr.mxu0 0.0
        %2406 = vmatpush2.msra.mxu0 0.0
        %2407 = vmatprep.subr.mxu0 0.0
        %2408 = vmatpush2.msra.mxu0 0.0
        %2409 = vmatprep.subr.mxu0 0.0
        %2410 = vmatpush2.msra.mxu0 0.0
        %2411 = vmatprep.subr.mxu0 0.0
        %2412 = vmatpush2.msra.mxu0 0.0
        %2413 = vmatprep.mubr.f32.mxu0 0.0
        %v2414 = vand.u32 %v2011, 4294901760
        %v2415 = vsub.f32 %v2011, %v2414
        %v2416 = vand.u32 %v2415, 4294901760
        %2417 = vmatmul.mubr.f32.gmra.mxu0 %v2416
        %v2418 = vpop.f32.mrf.mxu0
        %v2419 = vadd.f32 %v2321, %v2418
        %v2420 = vpop.f32.mrf.mxu0
        %2421 = vmatprep.mubr.f32.mxu0 0.0
        %v2422 = vand.u32 %v2014, 4294901760
        %v2423 = vsub.f32 %v2014, %v2422
        %v2424 = vand.u32 %v2423, 4294901760
        %2425 = vmatmul.mubr.f32.gmra.mxu0 %v2424
        %v2426 = vpop.f32.mrf.mxu0
        %v2427 = vadd.f32 %v2328, %v2426
        %v2428 = vpop.f32.mrf.mxu0
        %2429 = vmatprep.mubr.f32.mxu0 0.0
        %v2430 = vand.u32 %v2017, 4294901760
        %v2431 = vsub.f32 %v2017, %v2430
        %v2432 = vand.u32 %v2431, 4294901760
        %2433 = vmatmul.mubr.f32.gmra.mxu0 %v2432
        %v2434 = vpop.f32.mrf.mxu0
        %v2435 = vadd.f32 %v2335, %v2434
        %v2436 = vpop.f32.mrf.mxu0
        %2437 = vmatprep.mubr.f32.mxu0 0.0
        %v2438 = vand.u32 %v2020, 4294901760
        %v2439 = vsub.f32 %v2020, %v2438
        %v2440 = vand.u32 %v2439, 4294901760
        %2441 = vmatmul.mubr.f32.gmra.mxu0 %v2440
        %v2442 = vpop.f32.mrf.mxu0
        %v2443 = vadd.f32 %v2342, %v2442
        %v2444 = vpop.f32.mrf.mxu0
        %2445 = vdwg.mxu0
        %2446 = vmatprep.subr.mxu0 0.0
        %2447 = vmatpush1.msra.mxu0 0.0
        %2448 = vmatprep.subr.mxu0 0.0
        %2449 = vmatpush1.msra.mxu0 0.0
        %2450 = vmatprep.subr.mxu0 0.0
        %2451 = vmatpush1.msra.mxu0 0.0
        %2452 = vmatprep.subr.mxu0 0.0
        %2453 = vmatpush1.msra.mxu0 0.0
        %2454 = vmatprep.subr.mxu0 0.0
        %2455 = vmatpush1.msra.mxu0 0.0
        %2456 = vmatprep.subr.mxu0 0.0
        %2457 = vmatpush1.msra.mxu0 0.0
        %2458 = vmatprep.subr.mxu0 0.0
        %2459 = vmatpush1.msra.mxu0 0.0
        %2460 = vmatprep.subr.mxu0 0.0
        %2461 = vmatpush1.msra.mxu0 0.0
        %2462 = vmatprep.subr.mxu0 0.0
        %2463 = vmatpush1.msra.mxu0 0.0
        %2464 = vmatprep.subr.mxu0 0.0
        %2465 = vmatpush1.msra.mxu0 0.0
        %2466 = vmatprep.subr.mxu0 0.0
        %2467 = vmatpush1.msra.mxu0 0.0
        %2468 = vmatprep.subr.mxu0 0.0
        %2469 = vmatpush1.msra.mxu0 0.0
        %2470 = vmatprep.subr.mxu0 0.0
        %v2471 = vand.u32 %v2024, 4294901760
        %v2472 = vsub.f32 %v2024, %v2471
        %v2473 = vand.u32 %v2472, 4294901760
        %2474 = vmatpush1.msra.mxu0 %v2473
        %2475 = vmatprep.subr.mxu0 0.0
        %v2476 = vand.u32 %v1412, 4294901760
        %v2477 = vsub.f32 %v1412, %v2476
        %v2478 = vand.u32 %v2477, 4294901760
        %2479 = vmatpush1.msra.mxu0 %v2478
        %2480 = vmatprep.subr.mxu0 0.0
        %v2481 = vand.u32 %v1411, 4294901760
        %v2482 = vsub.f32 %v1411, %v2481
        %v2483 = vand.u32 %v2482, 4294901760
        %2484 = vmatpush1.msra.mxu0 %v2483
        %2485 = vmatprep.subr.mxu0 0.0
        %v2486 = vand.u32 %v1410, 4294901760
        %v2487 = vsub.f32 %v1410, %v2486
        %v2488 = vand.u32 %v2487, 4294901760
        %2489 = vmatpush1.msra.mxu0 %v2488
        %2490 = vmatprep.subr.mxu0 0.0
        %2491 = vmatpush2.msra.mxu0 0.0
        %2492 = vmatprep.subr.mxu0 0.0
        %2493 = vmatpush2.msra.mxu0 0.0
        %2494 = vmatprep.subr.mxu0 0.0
        %2495 = vmatpush2.msra.mxu0 0.0
        %2496 = vmatprep.subr.mxu0 0.0
        %2497 = vmatpush2.msra.mxu0 0.0
        %2498 = vmatprep.subr.mxu0 0.0
        %2499 = vmatpush2.msra.mxu0 0.0
        %2500 = vmatprep.subr.mxu0 0.0
        %2501 = vmatpush2.msra.mxu0 0.0
        %2502 = vmatprep.subr.mxu0 0.0
        %2503 = vmatpush2.msra.mxu0 0.0
        %2504 = vmatprep.subr.mxu0 0.0
        %2505 = vmatpush2.msra.mxu0 0.0
        %2506 = vmatprep.subr.mxu0 0.0
        %2507 = vmatpush2.msra.mxu0 0.0
        %2508 = vmatprep.subr.mxu0 0.0
        %2509 = vmatpush2.msra.mxu0 0.0
        %2510 = vmatprep.subr.mxu0 0.0
        %2511 = vmatpush2.msra.mxu0 0.0
        %2512 = vmatprep.subr.mxu0 0.0
        %2513 = vmatpush2.msra.mxu0 0.0
        %2514 = vmatprep.subr.mxu0 0.0
        %2515 = vmatpush2.msra.mxu0 0.0
        %2516 = vmatprep.subr.mxu0 0.0
        %2517 = vmatpush2.msra.mxu0 0.0
        %2518 = vmatprep.subr.mxu0 0.0
        %2519 = vmatpush2.msra.mxu0 0.0
        %2520 = vmatprep.subr.mxu0 0.0
        %2521 = vmatpush2.msra.mxu0 0.0
        %2522 = vmatprep.mubr.f32.mxu0 0.0
        %v2523 = vand.u32 %v2011, 4294901760
        %2524 = vmatmul.mubr.f32.gmra.mxu0 %v2523
        %v2525 = vpop.f32.mrf.mxu0
        %v2526 = vadd.f32 %v2419, %v2525
        %v2527 = vpop.f32.mrf.mxu0
        %2528 = vmatprep.mubr.f32.mxu0 0.0
        %v2529 = vand.u32 %v2014, 4294901760
        %2530 = vmatmul.mubr.f32.gmra.mxu0 %v2529
        %v2531 = vpop.f32.mrf.mxu0
        %v2532 = vadd.f32 %v2427, %v2531
        %v2533 = vpop.f32.mrf.mxu0
        %2534 = vmatprep.mubr.f32.mxu0 0.0
        %v2535 = vand.u32 %v2017, 4294901760
        %2536 = vmatmul.mubr.f32.gmra.mxu0 %v2535
        %v2537 = vpop.f32.mrf.mxu0
        %v2538 = vadd.f32 %v2435, %v2537
        %v2539 = vpop.f32.mrf.mxu0
        %2540 = vmatprep.mubr.f32.mxu0 0.0
        %v2541 = vand.u32 %v2020, 4294901760
        %2542 = vmatmul.mubr.f32.gmra.mxu0 %v2541
        %v2543 = vpop.f32.mrf.mxu0
        %v2544 = vadd.f32 %v2443, %v2543
        %v2545 = vpop.f32.mrf.mxu0
        %2546 = vdwg.mxu0
        %2547 = vmatprep.subr.mxu0 0.0
        %2548 = vmatpush1.msra.mxu0 0.0
        %2549 = vmatprep.subr.mxu0 0.0
        %2550 = vmatpush1.msra.mxu0 0.0
        %2551 = vmatprep.subr.mxu0 0.0
        %2552 = vmatpush1.msra.mxu0 0.0
        %2553 = vmatprep.subr.mxu0 0.0
        %2554 = vmatpush1.msra.mxu0 0.0
        %2555 = vmatprep.subr.mxu0 0.0
        %2556 = vmatpush1.msra.mxu0 0.0
        %2557 = vmatprep.subr.mxu0 0.0
        %2558 = vmatpush1.msra.mxu0 0.0
        %2559 = vmatprep.subr.mxu0 0.0
        %2560 = vmatpush1.msra.mxu0 0.0
        %2561 = vmatprep.subr.mxu0 0.0
        %2562 = vmatpush1.msra.mxu0 0.0
        %2563 = vmatprep.subr.mxu0 0.0
        %2564 = vmatpush1.msra.mxu0 0.0
        %2565 = vmatprep.subr.mxu0 0.0
        %2566 = vmatpush1.msra.mxu0 0.0
        %2567 = vmatprep.subr.mxu0 0.0
        %2568 = vmatpush1.msra.mxu0 0.0
        %2569 = vmatprep.subr.mxu0 0.0
        %2570 = vmatpush1.msra.mxu0 0.0
        %2571 = vmatprep.subr.mxu0 0.0
        %v2572 = vand.u32 %v2024, 4294901760
        %2573 = vmatpush1.msra.mxu0 %v2572
        %2574 = vmatprep.subr.mxu0 0.0
        %v2575 = vand.u32 %v1412, 4294901760
        %2576 = vmatpush1.msra.mxu0 %v2575
        %2577 = vmatprep.subr.mxu0 0.0
        %v2578 = vand.u32 %v1411, 4294901760
        %2579 = vmatpush1.msra.mxu0 %v2578
        %2580 = vmatprep.subr.mxu0 0.0
        %v2581 = vand.u32 %v1410, 4294901760
        %2582 = vmatpush1.msra.mxu0 %v2581
        %2583 = vmatprep.subr.mxu0 0.0
        %2584 = vmatpush2.msra.mxu0 0.0
        %2585 = vmatprep.subr.mxu0 0.0
        %2586 = vmatpush2.msra.mxu0 0.0
        %2587 = vmatprep.subr.mxu0 0.0
        %2588 = vmatpush2.msra.mxu0 0.0
        %2589 = vmatprep.subr.mxu0 0.0
        %2590 = vmatpush2.msra.mxu0 0.0
        %2591 = vmatprep.subr.mxu0 0.0
        %2592 = vmatpush2.msra.mxu0 0.0
        %2593 = vmatprep.subr.mxu0 0.0
        %2594 = vmatpush2.msra.mxu0 0.0
        %2595 = vmatprep.subr.mxu0 0.0
        %2596 = vmatpush2.msra.mxu0 0.0
        %2597 = vmatprep.subr.mxu0 0.0
        %2598 = vmatpush2.msra.mxu0 0.0
        %2599 = vmatprep.subr.mxu0 0.0
        %2600 = vmatpush2.msra.mxu0 0.0
        %2601 = vmatprep.subr.mxu0 0.0
        %2602 = vmatpush2.msra.mxu0 0.0
        %2603 = vmatprep.subr.mxu0 0.0
        %2604 = vmatpush2.msra.mxu0 0.0
        %2605 = vmatprep.subr.mxu0 0.0
        %2606 = vmatpush2.msra.mxu0 0.0
        %2607 = vmatprep.subr.mxu0 0.0
        %2608 = vmatpush2.msra.mxu0 0.0
        %2609 = vmatprep.subr.mxu0 0.0
        %2610 = vmatpush2.msra.mxu0 0.0
        %2611 = vmatprep.subr.mxu0 0.0
        %2612 = vmatpush2.msra.mxu0 0.0
        %2613 = vmatprep.subr.mxu0 0.0
        %2614 = vmatpush2.msra.mxu0 0.0
        %2615 = vmatprep.mubr.f32.mxu0 0.0
        %v2616 = vand.u32 %v2011, 4294901760
        %2617 = vmatmul.mubr.f32.gmra.mxu0 %v2616
        %v2618 = vpop.f32.mrf.mxu0
        %v2619 = vadd.f32 %v2526, %v2618
        %v2620 = vpop.f32.mrf.mxu0
        %2621 = vmatprep.mubr.f32.mxu0 0.0
        %v2622 = vand.u32 %v2014, 4294901760
        %2623 = vmatmul.mubr.f32.gmra.mxu0 %v2622
        %v2624 = vpop.f32.mrf.mxu0
        %v2625 = vadd.f32 %v2532, %v2624
        %v2626 = vpop.f32.mrf.mxu0
        %2627 = vmatprep.mubr.f32.mxu0 0.0
        %v2628 = vand.u32 %v2017, 4294901760
        %2629 = vmatmul.mubr.f32.gmra.mxu0 %v2628
        %v2630 = vpop.f32.mrf.mxu0
        %v2631 = vadd.f32 %v2538, %v2630
        %v2632 = vpop.f32.mrf.mxu0
        %2633 = vmatprep.mubr.f32.mxu0 0.0
        %v2634 = vand.u32 %v2020, 4294901760
        %2635 = vmatmul.mubr.f32.gmra.mxu0 %v2634
        %v2636 = vpop.f32.mrf.mxu0
        %v2637 = vadd.f32 %v2544, %v2636
        %v2638 = vpop.f32.mrf.mxu0
        %2639 = vdwg.mxu0
        %2640 = vset.pattern.permute.xlu0 32
        %2641 = vperm.xlu0 %2640, %v1414
        %v2642 = vpop.permute.xlu0 %2641
        %2644 = vset.pattern.permute.xlu0 32
        %2645 = vperm.xlu0 %2644, %v1415
        %v2646 = vpop.permute.xlu0 %2645
        %2648 = vset.pattern.permute.xlu0 32
        %2649 = vperm.xlu0 %2648, %v1416
        %v2650 = vpop.permute.xlu0 %2649
        %2652 = vset.pattern.permute.xlu0 32
        %2653 = vperm.xlu0 %2652, %v1417
        %v2654 = vpop.permute.xlu0 %2653
        %v2656 = vadd.f32 %v2619, %v2642
        %v2657 = vadd.f32 %v2625, %v2646
        %v2658 = vadd.f32 %v2631, %v2650
        %v2659 = vadd.f32 %v2637, %v2654
        %v2660 = vmul.f32 %v2656, 0.01
        %v2661 = vmul.f32 %v2657, 0.01
        %v2662 = vmul.f32 %v2658, 0.01
        %v2663 = vmul.f32 %v2659, 0.01
        %v2664 = vmax.f32 %v2656, %v2660
        %v2665 = vmax.f32 %v2657, %v2661
        %v2666 = vmax.f32 %v2658, %v2662
        %v2667 = vmax.f32 %v2659, %v2663
        %v2668 = vld [vmem:[%s1 + $0x80] sm:$0x1]
        %2670 = vset.pattern.permute.xlu0 32
        %2671 = vperm.xlu0 %2670, %v2668
        %v2672 = vpop.permute.xlu0 %2671
        %v2674 = vsel %vm783, %v2668, 0
        %2676 = vmatprep.subr.mxu0 0.0
        %2677 = vmatpush1.msra.mxu0 0.0
        %2678 = vmatprep.subr.mxu0 0.0
        %2679 = vmatpush1.msra.mxu0 0.0
        %2680 = vmatprep.subr.mxu0 0.0
        %2681 = vmatpush1.msra.mxu0 0.0
        %2682 = vmatprep.subr.mxu0 0.0
        %2683 = vmatpush1.msra.mxu0 0.0
        %2684 = vmatprep.subr.mxu0 0.0
        %2685 = vmatpush1.msra.mxu0 0.0
        %2686 = vmatprep.subr.mxu0 0.0
        %2687 = vmatpush1.msra.mxu0 0.0
        %2688 = vmatprep.subr.mxu0 0.0
        %2689 = vmatpush1.msra.mxu0 0.0
        %2690 = vmatprep.subr.mxu0 0.0
        %2691 = vmatpush1.msra.mxu0 0.0
        %2692 = vmatprep.subr.mxu0 0.0
        %2693 = vmatpush1.msra.mxu0 0.0
        %2694 = vmatprep.subr.mxu0 0.0
        %2695 = vmatpush1.msra.mxu0 0.0
        %2696 = vmatprep.subr.mxu0 0.0
        %2697 = vmatpush1.msra.mxu0 0.0
        %2698 = vmatprep.subr.mxu0 0.0
        %2699 = vmatpush1.msra.mxu0 0.0
        %2700 = vmatprep.subr.mxu0 0.0
        %v2701 = vand.u32 %v2667, 4294901760
        %2702 = vmatpush1.msra.mxu0 %v2701
        %2703 = vmatprep.subr.mxu0 0.0
        %v2704 = vand.u32 %v2666, 4294901760
        %2705 = vmatpush1.msra.mxu0 %v2704
        %2706 = vmatprep.subr.mxu0 0.0
        %v2707 = vand.u32 %v2665, 4294901760
        %2708 = vmatpush1.msra.mxu0 %v2707
        %2709 = vmatprep.subr.mxu0 0.0
        %v2710 = vand.u32 %v2664, 4294901760
        %2711 = vmatpush1.msra.mxu0 %v2710
        %2712 = vmatprep.subr.mxu0 0.0
        %2713 = vmatpush2.msra.mxu0 0.0
        %2714 = vmatprep.subr.mxu0 0.0
        %2715 = vmatpush2.msra.mxu0 0.0
        %2716 = vmatprep.subr.mxu0 0.0
        %2717 = vmatpush2.msra.mxu0 0.0
        %2718 = vmatprep.subr.mxu0 0.0
        %2719 = vmatpush2.msra.mxu0 0.0
        %2720 = vmatprep.subr.mxu0 0.0
        %2721 = vmatpush2.msra.mxu0 0.0
        %2722 = vmatprep.subr.mxu0 0.0
        %2723 = vmatpush2.msra.mxu0 0.0
        %2724 = vmatprep.subr.mxu0 0.0
        %2725 = vmatpush2.msra.mxu0 0.0
        %2726 = vmatprep.subr.mxu0 0.0
        %2727 = vmatpush2.msra.mxu0 0.0
        %2728 = vmatprep.subr.mxu0 0.0
        %2729 = vmatpush2.msra.mxu0 0.0
        %2730 = vmatprep.subr.mxu0 0.0
        %2731 = vmatpush2.msra.mxu0 0.0
        %2732 = vmatprep.subr.mxu0 0.0
        %2733 = vmatpush2.msra.mxu0 0.0
        %2734 = vmatprep.subr.mxu0 0.0
        %2735 = vmatpush2.msra.mxu0 0.0
        %2736 = vmatprep.subr.mxu0 0.0
        %2737 = vmatpush2.msra.mxu0 0.0
        %2738 = vmatprep.subr.mxu0 0.0
        %2739 = vmatpush2.msra.mxu0 0.0
        %2740 = vmatprep.subr.mxu0 0.0
        %2741 = vmatpush2.msra.mxu0 0.0
        %2742 = vmatprep.subr.mxu0 0.0
        %2743 = vmatpush2.msra.mxu0 0.0
        %2744 = vmatprep.mubr.f32.mxu0 0.0
        %v2745 = vand.u32 %v2674, 4294901760
        %v2746 = vsub.f32 %v2674, %v2745
        %v2747 = vand.u32 %v2746, 4294901760
        %v2748 = vsub.f32 %v2746, %v2747
        %v2749 = vand.u32 %v2748, 4294901760
        %2750 = vmatmul.mubr.f32.gmra.mxu0 %v2749
        %v2751 = vpop.f32.mrf.mxu0
        %v2752 = vadd.f32 %v2672, %v2751
        %v2753 = vpop.f32.mrf.mxu0
        %2754 = vdwg.mxu0
        %2755 = vmatprep.subr.mxu0 0.0
        %2756 = vmatpush1.msra.mxu0 0.0
        %2757 = vmatprep.subr.mxu0 0.0
        %2758 = vmatpush1.msra.mxu0 0.0
        %2759 = vmatprep.subr.mxu0 0.0
        %2760 = vmatpush1.msra.mxu0 0.0
        %2761 = vmatprep.subr.mxu0 0.0
        %2762 = vmatpush1.msra.mxu0 0.0
        %2763 = vmatprep.subr.mxu0 0.0
        %2764 = vmatpush1.msra.mxu0 0.0
        %2765 = vmatprep.subr.mxu0 0.0
        %2766 = vmatpush1.msra.mxu0 0.0
        %2767 = vmatprep.subr.mxu0 0.0
        %2768 = vmatpush1.msra.mxu0 0.0
        %2769 = vmatprep.subr.mxu0 0.0
        %2770 = vmatpush1.msra.mxu0 0.0
        %2771 = vmatprep.subr.mxu0 0.0
        %2772 = vmatpush1.msra.mxu0 0.0
        %2773 = vmatprep.subr.mxu0 0.0
        %2774 = vmatpush1.msra.mxu0 0.0
        %2775 = vmatprep.subr.mxu0 0.0
        %2776 = vmatpush1.msra.mxu0 0.0
        %2777 = vmatprep.subr.mxu0 0.0
        %2778 = vmatpush1.msra.mxu0 0.0
        %2779 = vmatprep.subr.mxu0 0.0
        %v2780 = vand.u32 %v2667, 4294901760
        %v2781 = vsub.f32 %v2667, %v2780
        %v2782 = vand.u32 %v2781, 4294901760
        %v2783 = vsub.f32 %v2781, %v2782
        %v2784 = vand.u32 %v2783, 4294901760
        %2785 = vmatpush1.msra.mxu0 %v2784
        %2786 = vmatprep.subr.mxu0 0.0
        %v2787 = vand.u32 %v2666, 4294901760
        %v2788 = vsub.f32 %v2666, %v2787
        %v2789 = vand.u32 %v2788, 4294901760
        %v2790 = vsub.f32 %v2788, %v2789
        %v2791 = vand.u32 %v2790, 4294901760
        %2792 = vmatpush1.msra.mxu0 %v2791
        %2793 = vmatprep.subr.mxu0 0.0
        %v2794 = vand.u32 %v2665, 4294901760
        %v2795 = vsub.f32 %v2665, %v2794
        %v2796 = vand.u32 %v2795, 4294901760
        %v2797 = vsub.f32 %v2795, %v2796
        %v2798 = vand.u32 %v2797, 4294901760
        %2799 = vmatpush1.msra.mxu0 %v2798
        %2800 = vmatprep.subr.mxu0 0.0
        %v2801 = vand.u32 %v2664, 4294901760
        %v2802 = vsub.f32 %v2664, %v2801
        %v2803 = vand.u32 %v2802, 4294901760
        %v2804 = vsub.f32 %v2802, %v2803
        %v2805 = vand.u32 %v2804, 4294901760
        %2806 = vmatpush1.msra.mxu0 %v2805
        %2807 = vmatprep.subr.mxu0 0.0
        %2808 = vmatpush2.msra.mxu0 0.0
        %2809 = vmatprep.subr.mxu0 0.0
        %2810 = vmatpush2.msra.mxu0 0.0
        %2811 = vmatprep.subr.mxu0 0.0
        %2812 = vmatpush2.msra.mxu0 0.0
        %2813 = vmatprep.subr.mxu0 0.0
        %2814 = vmatpush2.msra.mxu0 0.0
        %2815 = vmatprep.subr.mxu0 0.0
        %2816 = vmatpush2.msra.mxu0 0.0
        %2817 = vmatprep.subr.mxu0 0.0
        %2818 = vmatpush2.msra.mxu0 0.0
        %2819 = vmatprep.subr.mxu0 0.0
        %2820 = vmatpush2.msra.mxu0 0.0
        %2821 = vmatprep.subr.mxu0 0.0
        %2822 = vmatpush2.msra.mxu0 0.0
        %2823 = vmatprep.subr.mxu0 0.0
        %2824 = vmatpush2.msra.mxu0 0.0
        %2825 = vmatprep.subr.mxu0 0.0
        %2826 = vmatpush2.msra.mxu0 0.0
        %2827 = vmatprep.subr.mxu0 0.0
        %2828 = vmatpush2.msra.mxu0 0.0
        %2829 = vmatprep.subr.mxu0 0.0
        %2830 = vmatpush2.msra.mxu0 0.0
        %2831 = vmatprep.subr.mxu0 0.0
        %2832 = vmatpush2.msra.mxu0 0.0
        %2833 = vmatprep.subr.mxu0 0.0
        %2834 = vmatpush2.msra.mxu0 0.0
        %2835 = vmatprep.subr.mxu0 0.0
        %2836 = vmatpush2.msra.mxu0 0.0
        %2837 = vmatprep.subr.mxu0 0.0
        %2838 = vmatpush2.msra.mxu0 0.0
        %2839 = vmatprep.mubr.f32.mxu0 0.0
        %v2840 = vand.u32 %v2674, 4294901760
        %2841 = vmatmul.mubr.f32.gmra.mxu0 %v2840
        %v2842 = vpop.f32.mrf.mxu0
        %v2843 = vadd.f32 %v2752, %v2842
        %v2844 = vpop.f32.mrf.mxu0
        %2845 = vdwg.mxu0
        %2846 = vmatprep.subr.mxu0 0.0
        %2847 = vmatpush1.msra.mxu0 0.0
        %2848 = vmatprep.subr.mxu0 0.0
        %2849 = vmatpush1.msra.mxu0 0.0
        %2850 = vmatprep.subr.mxu0 0.0
        %2851 = vmatpush1.msra.mxu0 0.0
        %2852 = vmatprep.subr.mxu0 0.0
        %2853 = vmatpush1.msra.mxu0 0.0
        %2854 = vmatprep.subr.mxu0 0.0
        %2855 = vmatpush1.msra.mxu0 0.0
        %2856 = vmatprep.subr.mxu0 0.0
        %2857 = vmatpush1.msra.mxu0 0.0
        %2858 = vmatprep.subr.mxu0 0.0
        %2859 = vmatpush1.msra.mxu0 0.0
        %2860 = vmatprep.subr.mxu0 0.0
        %2861 = vmatpush1.msra.mxu0 0.0
        %2862 = vmatprep.subr.mxu0 0.0
        %2863 = vmatpush1.msra.mxu0 0.0
        %2864 = vmatprep.subr.mxu0 0.0
        %2865 = vmatpush1.msra.mxu0 0.0
        %2866 = vmatprep.subr.mxu0 0.0
        %2867 = vmatpush1.msra.mxu0 0.0
        %2868 = vmatprep.subr.mxu0 0.0
        %2869 = vmatpush1.msra.mxu0 0.0
        %2870 = vmatprep.subr.mxu0 0.0
        %v2871 = vand.u32 %v2667, 4294901760
        %v2872 = vsub.f32 %v2667, %v2871
        %2873 = vmatpush1.msra.mxu0 %v2872
        %2874 = vmatprep.subr.mxu0 0.0
        %v2875 = vand.u32 %v2666, 4294901760
        %v2876 = vsub.f32 %v2666, %v2875
        %2877 = vmatpush1.msra.mxu0 %v2876
        %2878 = vmatprep.subr.mxu0 0.0
        %v2879 = vand.u32 %v2665, 4294901760
        %v2880 = vsub.f32 %v2665, %v2879
        %2881 = vmatpush1.msra.mxu0 %v2880
        %2882 = vmatprep.subr.mxu0 0.0
        %v2883 = vand.u32 %v2664, 4294901760
        %v2884 = vsub.f32 %v2664, %v2883
        %2885 = vmatpush1.msra.mxu0 %v2884
        %2886 = vmatprep.subr.mxu0 0.0
        %2887 = vmatpush2.msra.mxu0 0.0
        %2888 = vmatprep.subr.mxu0 0.0
        %2889 = vmatpush2.msra.mxu0 0.0
        %2890 = vmatprep.subr.mxu0 0.0
        %2891 = vmatpush2.msra.mxu0 0.0
        %2892 = vmatprep.subr.mxu0 0.0
        %2893 = vmatpush2.msra.mxu0 0.0
        %2894 = vmatprep.subr.mxu0 0.0
        %2895 = vmatpush2.msra.mxu0 0.0
        %2896 = vmatprep.subr.mxu0 0.0
        %2897 = vmatpush2.msra.mxu0 0.0
        %2898 = vmatprep.subr.mxu0 0.0
        %2899 = vmatpush2.msra.mxu0 0.0
        %2900 = vmatprep.subr.mxu0 0.0
        %2901 = vmatpush2.msra.mxu0 0.0
        %2902 = vmatprep.subr.mxu0 0.0
        %2903 = vmatpush2.msra.mxu0 0.0
        %2904 = vmatprep.subr.mxu0 0.0
        %2905 = vmatpush2.msra.mxu0 0.0
        %2906 = vmatprep.subr.mxu0 0.0
        %2907 = vmatpush2.msra.mxu0 0.0
        %2908 = vmatprep.subr.mxu0 0.0
        %2909 = vmatpush2.msra.mxu0 0.0
        %2910 = vmatprep.subr.mxu0 0.0
        %2911 = vmatpush2.msra.mxu0 0.0
        %2912 = vmatprep.subr.mxu0 0.0
        %2913 = vmatpush2.msra.mxu0 0.0
        %2914 = vmatprep.subr.mxu0 0.0
        %2915 = vmatpush2.msra.mxu0 0.0
        %2916 = vmatprep.subr.mxu0 0.0
        %2917 = vmatpush2.msra.mxu0 0.0
        %2918 = vmatprep.mubr.f32.mxu0 0.0
        %v2919 = vand.u32 %v2674, 4294901760
        %v2920 = vsub.f32 %v2674, %v2919
        %2921 = vmatmul.mubr.f32.gmra.mxu0 %v2920
        %v2922 = vpop.f32.mrf.mxu0
        %v2923 = vadd.f32 %v2843, %v2922
        %v2924 = vpop.f32.mrf.mxu0
        %2925 = vdwg.mxu0
        %2926 = vmatprep.subr.mxu0 0.0
        %2927 = vmatpush1.msra.mxu0 0.0
        %2928 = vmatprep.subr.mxu0 0.0
        %2929 = vmatpush1.msra.mxu0 0.0
        %2930 = vmatprep.subr.mxu0 0.0
        %2931 = vmatpush1.msra.mxu0 0.0
        %2932 = vmatprep.subr.mxu0 0.0
        %2933 = vmatpush1.msra.mxu0 0.0
        %2934 = vmatprep.subr.mxu0 0.0
        %2935 = vmatpush1.msra.mxu0 0.0
        %2936 = vmatprep.subr.mxu0 0.0
        %2937 = vmatpush1.msra.mxu0 0.0
        %2938 = vmatprep.subr.mxu0 0.0
        %2939 = vmatpush1.msra.mxu0 0.0
        %2940 = vmatprep.subr.mxu0 0.0
        %2941 = vmatpush1.msra.mxu0 0.0
        %2942 = vmatprep.subr.mxu0 0.0
        %2943 = vmatpush1.msra.mxu0 0.0
        %2944 = vmatprep.subr.mxu0 0.0
        %2945 = vmatpush1.msra.mxu0 0.0
        %2946 = vmatprep.subr.mxu0 0.0
        %2947 = vmatpush1.msra.mxu0 0.0
        %2948 = vmatprep.subr.mxu0 0.0
        %2949 = vmatpush1.msra.mxu0 0.0
        %2950 = vmatprep.subr.mxu0 0.0
        %v2951 = vand.u32 %v2667, 4294901760
        %2952 = vmatpush1.msra.mxu0 %v2951
        %2953 = vmatprep.subr.mxu0 0.0
        %v2954 = vand.u32 %v2666, 4294901760
        %2955 = vmatpush1.msra.mxu0 %v2954
        %2956 = vmatprep.subr.mxu0 0.0
        %v2957 = vand.u32 %v2665, 4294901760
        %2958 = vmatpush1.msra.mxu0 %v2957
        %2959 = vmatprep.subr.mxu0 0.0
        %v2960 = vand.u32 %v2664, 4294901760
        %2961 = vmatpush1.msra.mxu0 %v2960
        %2962 = vmatprep.subr.mxu0 0.0
        %2963 = vmatpush2.msra.mxu0 0.0
        %2964 = vmatprep.subr.mxu0 0.0
        %2965 = vmatpush2.msra.mxu0 0.0
        %2966 = vmatprep.subr.mxu0 0.0
        %2967 = vmatpush2.msra.mxu0 0.0
        %2968 = vmatprep.subr.mxu0 0.0
        %2969 = vmatpush2.msra.mxu0 0.0
        %2970 = vmatprep.subr.mxu0 0.0
        %2971 = vmatpush2.msra.mxu0 0.0
        %2972 = vmatprep.subr.mxu0 0.0
        %2973 = vmatpush2.msra.mxu0 0.0
        %2974 = vmatprep.subr.mxu0 0.0
        %2975 = vmatpush2.msra.mxu0 0.0
        %2976 = vmatprep.subr.mxu0 0.0
        %2977 = vmatpush2.msra.mxu0 0.0
        %2978 = vmatprep.subr.mxu0 0.0
        %2979 = vmatpush2.msra.mxu0 0.0
        %2980 = vmatprep.subr.mxu0 0.0
        %2981 = vmatpush2.msra.mxu0 0.0
        %2982 = vmatprep.subr.mxu0 0.0
        %2983 = vmatpush2.msra.mxu0 0.0
        %2984 = vmatprep.subr.mxu0 0.0
        %2985 = vmatpush2.msra.mxu0 0.0
        %2986 = vmatprep.subr.mxu0 0.0
        %2987 = vmatpush2.msra.mxu0 0.0
        %2988 = vmatprep.subr.mxu0 0.0
        %2989 = vmatpush2.msra.mxu0 0.0
        %2990 = vmatprep.subr.mxu0 0.0
        %2991 = vmatpush2.msra.mxu0 0.0
        %2992 = vmatprep.subr.mxu0 0.0
        %2993 = vmatpush2.msra.mxu0 0.0
        %2994 = vmatprep.mubr.f32.mxu0 0.0
        %v2995 = vand.u32 %v2674, 4294901760
        %v2996 = vsub.f32 %v2674, %v2995
        %v2997 = vand.u32 %v2996, 4294901760
        %2998 = vmatmul.mubr.f32.gmra.mxu0 %v2997
        %v2999 = vpop.f32.mrf.mxu0
        %v3000 = vadd.f32 %v2923, %v2999
        %v3001 = vpop.f32.mrf.mxu0
        %3002 = vdwg.mxu0
        %3003 = vmatprep.subr.mxu0 0.0
        %3004 = vmatpush1.msra.mxu0 0.0
        %3005 = vmatprep.subr.mxu0 0.0
        %3006 = vmatpush1.msra.mxu0 0.0
        %3007 = vmatprep.subr.mxu0 0.0
        %3008 = vmatpush1.msra.mxu0 0.0
        %3009 = vmatprep.subr.mxu0 0.0
        %3010 = vmatpush1.msra.mxu0 0.0
        %3011 = vmatprep.subr.mxu0 0.0
        %3012 = vmatpush1.msra.mxu0 0.0
        %3013 = vmatprep.subr.mxu0 0.0
        %3014 = vmatpush1.msra.mxu0 0.0
        %3015 = vmatprep.subr.mxu0 0.0
        %3016 = vmatpush1.msra.mxu0 0.0
        %3017 = vmatprep.subr.mxu0 0.0
        %3018 = vmatpush1.msra.mxu0 0.0
        %3019 = vmatprep.subr.mxu0 0.0
        %3020 = vmatpush1.msra.mxu0 0.0
        %3021 = vmatprep.subr.mxu0 0.0
        %3022 = vmatpush1.msra.mxu0 0.0
        %3023 = vmatprep.subr.mxu0 0.0
        %3024 = vmatpush1.msra.mxu0 0.0
        %3025 = vmatprep.subr.mxu0 0.0
        %3026 = vmatpush1.msra.mxu0 0.0
        %3027 = vmatprep.subr.mxu0 0.0
        %v3028 = vand.u32 %v2667, 4294901760
        %v3029 = vsub.f32 %v2667, %v3028
        %v3030 = vand.u32 %v3029, 4294901760
        %3031 = vmatpush1.msra.mxu0 %v3030
        %3032 = vmatprep.subr.mxu0 0.0
        %v3033 = vand.u32 %v2666, 4294901760
        %v3034 = vsub.f32 %v2666, %v3033
        %v3035 = vand.u32 %v3034, 4294901760
        %3036 = vmatpush1.msra.mxu0 %v3035
        %3037 = vmatprep.subr.mxu0 0.0
        %v3038 = vand.u32 %v2665, 4294901760
        %v3039 = vsub.f32 %v2665, %v3038
        %v3040 = vand.u32 %v3039, 4294901760
        %3041 = vmatpush1.msra.mxu0 %v3040
        %3042 = vmatprep.subr.mxu0 0.0
        %v3043 = vand.u32 %v2664, 4294901760
        %v3044 = vsub.f32 %v2664, %v3043
        %v3045 = vand.u32 %v3044, 4294901760
        %3046 = vmatpush1.msra.mxu0 %v3045
        %3047 = vmatprep.subr.mxu0 0.0
        %3048 = vmatpush2.msra.mxu0 0.0
        %3049 = vmatprep.subr.mxu0 0.0
        %3050 = vmatpush2.msra.mxu0 0.0
        %3051 = vmatprep.subr.mxu0 0.0
        %3052 = vmatpush2.msra.mxu0 0.0
        %3053 = vmatprep.subr.mxu0 0.0
        %3054 = vmatpush2.msra.mxu0 0.0
        %3055 = vmatprep.subr.mxu0 0.0
        %3056 = vmatpush2.msra.mxu0 0.0
        %3057 = vmatprep.subr.mxu0 0.0
        %3058 = vmatpush2.msra.mxu0 0.0
        %3059 = vmatprep.subr.mxu0 0.0
        %3060 = vmatpush2.msra.mxu0 0.0
        %3061 = vmatprep.subr.mxu0 0.0
        %3062 = vmatpush2.msra.mxu0 0.0
        %3063 = vmatprep.subr.mxu0 0.0
        %3064 = vmatpush2.msra.mxu0 0.0
        %3065 = vmatprep.subr.mxu0 0.0
        %3066 = vmatpush2.msra.mxu0 0.0
        %3067 = vmatprep.subr.mxu0 0.0
        %3068 = vmatpush2.msra.mxu0 0.0
        %3069 = vmatprep.subr.mxu0 0.0
        %3070 = vmatpush2.msra.mxu0 0.0
        %3071 = vmatprep.subr.mxu0 0.0
        %3072 = vmatpush2.msra.mxu0 0.0
        %3073 = vmatprep.subr.mxu0 0.0
        %3074 = vmatpush2.msra.mxu0 0.0
        %3075 = vmatprep.subr.mxu0 0.0
        %3076 = vmatpush2.msra.mxu0 0.0
        %3077 = vmatprep.subr.mxu0 0.0
        %3078 = vmatpush2.msra.mxu0 0.0
        %3079 = vmatprep.mubr.f32.mxu0 0.0
        %v3080 = vand.u32 %v2674, 4294901760
        %3081 = vmatmul.mubr.f32.gmra.mxu0 %v3080
        %v3082 = vpop.f32.mrf.mxu0
        %v3083 = vadd.f32 %v3000, %v3082
        %v3084 = vpop.f32.mrf.mxu0
        %3085 = vdwg.mxu0
        %3086 = vmatprep.subr.mxu0 0.0
        %3087 = vmatpush1.msra.mxu0 0.0
        %3088 = vmatprep.subr.mxu0 0.0
        %3089 = vmatpush1.msra.mxu0 0.0
        %3090 = vmatprep.subr.mxu0 0.0
        %3091 = vmatpush1.msra.mxu0 0.0
        %3092 = vmatprep.subr.mxu0 0.0
        %3093 = vmatpush1.msra.mxu0 0.0
        %3094 = vmatprep.subr.mxu0 0.0
        %3095 = vmatpush1.msra.mxu0 0.0
        %3096 = vmatprep.subr.mxu0 0.0
        %3097 = vmatpush1.msra.mxu0 0.0
        %3098 = vmatprep.subr.mxu0 0.0
        %3099 = vmatpush1.msra.mxu0 0.0
        %3100 = vmatprep.subr.mxu0 0.0
        %3101 = vmatpush1.msra.mxu0 0.0
        %3102 = vmatprep.subr.mxu0 0.0
        %3103 = vmatpush1.msra.mxu0 0.0
        %3104 = vmatprep.subr.mxu0 0.0
        %3105 = vmatpush1.msra.mxu0 0.0
        %3106 = vmatprep.subr.mxu0 0.0
        %3107 = vmatpush1.msra.mxu0 0.0
        %3108 = vmatprep.subr.mxu0 0.0
        %3109 = vmatpush1.msra.mxu0 0.0
        %3110 = vmatprep.subr.mxu0 0.0
        %v3111 = vand.u32 %v2667, 4294901760
        %3112 = vmatpush1.msra.mxu0 %v3111
        %3113 = vmatprep.subr.mxu0 0.0
        %v3114 = vand.u32 %v2666, 4294901760
        %3115 = vmatpush1.msra.mxu0 %v3114
        %3116 = vmatprep.subr.mxu0 0.0
        %v3117 = vand.u32 %v2665, 4294901760
        %3118 = vmatpush1.msra.mxu0 %v3117
        %3119 = vmatprep.subr.mxu0 0.0
        %v3120 = vand.u32 %v2664, 4294901760
        %3121 = vmatpush1.msra.mxu0 %v3120
        %3122 = vmatprep.subr.mxu0 0.0
        %3123 = vmatpush2.msra.mxu0 0.0
        %3124 = vmatprep.subr.mxu0 0.0
        %3125 = vmatpush2.msra.mxu0 0.0
        %3126 = vmatprep.subr.mxu0 0.0
        %3127 = vmatpush2.msra.mxu0 0.0
        %3128 = vmatprep.subr.mxu0 0.0
        %3129 = vmatpush2.msra.mxu0 0.0
        %3130 = vmatprep.subr.mxu0 0.0
        %3131 = vmatpush2.msra.mxu0 0.0
        %3132 = vmatprep.subr.mxu0 0.0
        %3133 = vmatpush2.msra.mxu0 0.0
        %3134 = vmatprep.subr.mxu0 0.0
        %3135 = vmatpush2.msra.mxu0 0.0
        %3136 = vmatprep.subr.mxu0 0.0
        %3137 = vmatpush2.msra.mxu0 0.0
        %3138 = vmatprep.subr.mxu0 0.0
        %3139 = vmatpush2.msra.mxu0 0.0
        %3140 = vmatprep.subr.mxu0 0.0
        %3141 = vmatpush2.msra.mxu0 0.0
        %3142 = vmatprep.subr.mxu0 0.0
        %3143 = vmatpush2.msra.mxu0 0.0
        %3144 = vmatprep.subr.mxu0 0.0
        %3145 = vmatpush2.msra.mxu0 0.0
        %3146 = vmatprep.subr.mxu0 0.0
        %3147 = vmatpush2.msra.mxu0 0.0
        %3148 = vmatprep.subr.mxu0 0.0
        %3149 = vmatpush2.msra.mxu0 0.0
        %3150 = vmatprep.subr.mxu0 0.0
        %3151 = vmatpush2.msra.mxu0 0.0
        %3152 = vmatprep.subr.mxu0 0.0
        %3153 = vmatpush2.msra.mxu0 0.0
        %3154 = vmatprep.mubr.f32.mxu0 0.0
        %v3155 = vand.u32 %v2674, 4294901760
        %3156 = vmatmul.mubr.f32.gmra.mxu0 %v3155
        %v3157 = vpop.f32.mrf.mxu0
        %v3158 = vadd.f32 %v3083, %v3157
        %v3159 = vpop.f32.mrf.mxu0
        %3160 = vdwg.mxu0
        %v3161 = vtanh.pop %v3158
        %3162 = vst [vmem:[%s133] sm:$0x1] %v3161
        %s3163 = sand.u32 %s71, 1
        %s3164 = scalar_lea.sflag [#allocation3], %s3163
        %s3165 = sand.u32 %s71, 1
        %s3166 = scalar_lea.vmem [#allocation2], %s3165
        // Predicated region
        $region29: #{tpu_custom_call.1} parent=27 // pred_check
          %p3167 = pneg %p81
        $region30: #{tpu_custom_call.1} parent=27 // pred_check_branch
          %3169 = sbr.rel (%p3167) target = $region32
        $region31: #{tpu_custom_call.1} parent=27 // pred_region
          %s3171 = ssub.s32 16, 16
          %3172 = vsyncadd %s3164, %s3171
          %s3173 = smul.addr %s16, 16
          %s3174 = scalar_lea.hbm %s2, %s3173
          %s3176 = sshll.u32 %s3166, 4
          %s3177 = int_to_ptr.vmem [resolvable:$true] %s3176
          %3179 = dma.vmem_to_hbm [thread:$0]  %s3177, 16, %s3174, %s3164
        $region32: #{tpu_custom_call.1} parent=27 // pred_fallthru
          _
      $region28: #{tpu_custom_call.1} parent=5 // pred_fallthru
        _
      %p3180 = scmp.le.s32.totalorder 2, %s11
      // Predicated region
      $region33: #{tpu_custom_call.1} parent=5 // pred_check
        %p3181 = pneg %p3180
      $region34: #{tpu_custom_call.1} parent=5 // pred_check_branch
        %3183 = sbr.rel (%p3181) target = $region36
      $region35: #{tpu_custom_call.1} parent=5 // pred_region
        %s3184 = ssub.s32 %s11, 2
        // Predicated region
        $region37: #{tpu_custom_call.1} parent=35 // pred_check
          %p3185 = pneg %p87
        $region38: #{tpu_custom_call.1} parent=35 // pred_check_branch
          %3187 = sbr.rel (%p3185) target = $region40
        $region39: #{tpu_custom_call.1} parent=35 // pred_region
          %s3188 = sand.u32 %s72, 1
          %s3189 = scalar_lea.sflag [#allocation3], %s3188
          %s3190 = sand.u32 %s72, 1
          %s3191 = scalar_lea.vmem [#allocation2], %s3190
          %3192 = dma.done %s3189, 16
        $region40: #{tpu_custom_call.1} parent=35 // pred_fallthru
          _
      $region36: #{tpu_custom_call.1} parent=5 // pred_fallthru
        _
    $region6: #{tpu_custom_call.1} parent=1 // loop_footer
      %s15 = sadd.s32 1, %s11
    $region7: #{tpu_custom_call.1} parent=1 // loop_footer_branch
      %10 = sbr.rel target = $region3
    $region8: #{tpu_custom_call.1} parent=1 // loop_exit
      _
    %3193 = vsyncpa [#allocation3], 1
    %s3194 = scalar_lea.sflag [#allocation3], 1
    %3195 = vsyncpa %s3194, 1

</llo_original>
